<compile_context>
chip_gen: v7x
topology: tpu7x:2x2x1
jax: 0.10.0
libtpu: 0.0.40
codegen_flags: <defaults>
</compile_context>

<pallas_src>
import functools

import jax
import jax.numpy as jnp
from jax.experimental import pallas as pl
from jax.experimental.pallas import tpu as pltpu


def _round_up(x, m):
    return ((x + m - 1) // m) * m


def _conv_bn_relu_kernel(x_ref, w_ref, b_ref, o_ref, *, ksize, stride, oh, ow):
    """One (image n, Cout-tile j) block of relu(conv(x) * scale + shift).

    x_ref: (1, Hp, Wp, Cin)  zero-padded NHWC input image (bf16)
    w_ref: (K*K, Cin, TN)    BN-scale-folded per-tap weights (bf16)
    b_ref: (1, TN)           BN shift (f32)
    o_ref: (1, OH, OW, TN)   output block
    """
    cin = x_ref.shape[-1]
    tn = o_ref.shape[-1]

    acc = None
    for ki in range(ksize):
        for kj in range(ksize):
            if stride == 1:
                x_tap = x_ref[0, ki:ki + oh, kj:kj + ow, :]
            else:
                x_tap = x_ref[0,
                              pl.ds(ki, oh, stride=stride),
                              pl.ds(kj, ow, stride=stride), :]
            x_tap = x_tap.reshape(oh * ow, cin)
            part = jnp.dot(x_tap, w_ref[ki * ksize + kj],
                           preferred_element_type=jnp.float32)
            acc = part if acc is None else acc + part

    out = jnp.maximum(acc + b_ref[...], 0.0)
    o_ref[...] = out.reshape(1, oh, ow, tn).astype(o_ref.dtype)


@functools.partial(jax.jit, static_argnames=("kernel_size", "stride", "out_dtype"))
def conv_block_forward_nhwc(x_nhwc, weight, gamma, beta, running_mean, running_var,
                            *, kernel_size, stride, eps=1e-5, out_dtype=jnp.float32):
    """ConvBlock forward (inference-mode BN folded), NHWC end-to-end.

    Args:
      x_nhwc: (N, H, W, Cin) float input.
      weight: (Cout, Cin, K, K) conv weight (bias=False, groups=1, PyTorch OIHW).
      gamma/beta/running_mean/running_var: (Cout,) BatchNorm2d parameters.
    Returns:
      (N, OH, OW, Cout) in `out_dtype` (use bf16 when feeding the next bf16 layer).
    """
    n, h, w, cin = x_nhwc.shape
    cout = weight.shape[0]
    k = kernel_size
    pad = k // 2                      # mirrors PyTorch ConvBlock: padding = kernel_size // 2
    oh = (h + 2 * pad - k) // stride + 1
    ow = (w + 2 * pad - k) // stride + 1
    hp, wp = h + 2 * pad, w + 2 * pad

    xp = jnp.pad(x_nhwc, ((0, 0), (pad, pad), (pad, pad), (0, 0)))

    # Fold BN (eval mode) into the conv: per-channel scale into weights, shift as bias.
    # NOTE: if running_var is tiny the folded scale can stress bf16 weight precision;
    # keep weights f32 for such layers if it ever matters.
    scale = gamma / jnp.sqrt(running_var + eps)                       # (Cout,)
    shift = beta - running_mean * scale                               # (Cout,)
    w_taps = jnp.transpose(weight * scale[:, None, None, None], (2, 3, 1, 0))
    w_taps = w_taps.reshape(k * k, cin, cout)                         # (K*K, Cin, Cout)

    # Output-channel tiling: lane-dense stores only when free (Cout % 128 == 0);
    # small / ragged Cout uses a full-width block (masked stores, no pad, no slice).
    if cout % 128 == 0:
        tn = 256 if cout % 256 == 0 else 128
        cout_pad = cout
    elif cout <= 256:
        tn = cout
        cout_pad = cout
    else:
        tn = 128
        cout_pad = _round_up(cout, 128)
        w_taps = jnp.pad(w_taps, ((0, 0), (0, 0), (0, cout_pad - cout)))
        shift = jnp.pad(shift, (0, cout_pad - cout))
    shift2 = shift.reshape(1, cout_pad).astype(jnp.float32)

    # bf16 operands; f32 accumulation inside the kernel.
    xp_bf = xp.astype(jnp.bfloat16)
    w_bf = w_taps.astype(jnp.bfloat16)

    grid = (n, cout_pad // tn)        # >= 2 parallel tiles (batch x cout) for megacore
    kernel = functools.partial(_conv_bn_relu_kernel,
                               ksize=k, stride=stride, oh=oh, ow=ow)

    out_bytes = jnp.dtype(out_dtype).itemsize
    cost = pl.CostEstimate(
        flops=2 * n * oh * ow * k * k * cin * cout_pad,
        transcendentals=0,
        bytes_accessed=int(xp_bf.size * 2 + w_bf.size * 2
                           + n * oh * ow * cout_pad * out_bytes))

    out = pl.pallas_call(
        kernel,
        out_shape=jax.ShapeDtypeStruct((n, oh, ow, cout_pad), out_dtype),
        grid_spec=pltpu.PrefetchScalarGridSpec(
            num_scalar_prefetch=0,
            grid=grid,
            in_specs=[
                pl.BlockSpec((1, hp, wp, cin), lambda i, j: (i, 0, 0, 0)),  # padded image
                pl.BlockSpec((k * k, cin, tn), lambda i, j: (0, 0, j)),     # folded weights
                pl.BlockSpec((1, tn), lambda i, j: (0, j)),                 # BN shift
            ],
            out_specs=pl.BlockSpec((1, oh, ow, tn), lambda i, j: (i, 0, 0, j)),
        ),
        compiler_params=pltpu.CompilerParams(
            dimension_semantics=("parallel", "parallel"),
            vmem_limit_bytes=32 * 1024 * 1024),
        cost_estimate=cost,
    )(xp_bf, w_bf, shift2)

    if cout_pad != cout:
        out = out[..., :cout]
    return out


def conv_block_forward(x_nchw, weight, gamma, beta, running_mean, running_var,
                       kernel_size, stride, eps=1e-5, out_dtype=jnp.float32):
    """PyTorch-layout (NCHW) adapter; the layout conversion happens only at this boundary."""
    x_nhwc = jnp.transpose(x_nchw, (0, 2, 3, 1))
    y = conv_block_forward_nhwc(x_nhwc, weight, gamma, beta, running_mean, running_var,
                                kernel_size=kernel_size, stride=stride, eps=eps,
                                out_dtype=out_dtype)
    return jnp.transpose(y, (0, 3, 1, 2))


def _reference_nchw(x, weight, gamma, beta, mean, var, k, stride, eps=1e-5):
    pad = k // 2
    conv = jax.lax.conv_general_dilated(
        x, weight, window_strides=(stride, stride),
        padding=((pad, pad), (pad, pad)),
        dimension_numbers=("NCHW", "OIHW", "NCHW"))
    s = (gamma / jnp.sqrt(var + eps)).reshape(1, -1, 1, 1)
    b = (beta - mean * gamma / jnp.sqrt(var + eps)).reshape(1, -1, 1, 1)
    return jnp.maximum(conv * s + b, 0.0)


if __name__ == "__main__":
    key = jax.random.PRNGKey(0)
    k_x, k_w, k_g, k_b, k_m, k_v = jax.random.split(key, 6)

    # ConvBlock(in_channels=4, out_channels=8, kernel_size=3, stride=1), x NCHW.
    N, Cin, H, W = 2, 4, 16, 16
    Cout, K, stride = 8, 3, 1

    x = jax.random.normal(k_x, (N, Cin, H, W), dtype=jnp.float32)
    weight = jax.random.normal(k_w, (Cout, Cin, K, K), dtype=jnp.float32) * 0.1
    gamma = 1.0 + 0.1 * jax.random.normal(k_g, (Cout,), dtype=jnp.float32)
    beta = 0.1 * jax.random.normal(k_b, (Cout,), dtype=jnp.float32)
    running_mean = 0.1 * jax.random.normal(k_m, (Cout,), dtype=jnp.float32)
    running_var = jnp.abs(1.0 + 0.1 * jax.random.normal(k_v, (Cout,), dtype=jnp.float32))

    y = conv_block_forward(x, weight, gamma, beta, running_mean, running_var,
                           kernel_size=K, stride=stride)
    jax.block_until_ready(y)

    ref = _reference_nchw(x, weight, gamma, beta, running_mean, running_var, K, stride)
    assert y.shape == (N, Cout, H, W)
    assert jnp.allclose(y, ref, atol=5e-2, rtol=5e-2), float(jnp.max(jnp.abs(y - ref)))

    # Pointwise (1x1) ConvBlock path, the common MobileNetV3 bottleneck case.
    Cin2, Cout2, K2 = 8, 32, 1
    x2 = jax.random.normal(k_x, (N, Cin2, 8, 8), dtype=jnp.float32)
    w2 = jax.random.normal(k_w, (Cout2, Cin2, K2, K2), dtype=jnp.float32) * 0.1
    g2 = jnp.ones((Cout2,), jnp.float32)
    b2 = jnp.zeros((Cout2,), jnp.float32)
    m2 = jnp.zeros((Cout2,), jnp.float32)
    v2 = jnp.ones((Cout2,), jnp.float32)
    y2 = conv_block_forward(x2, w2, g2, b2, m2, v2, kernel_size=K2, stride=1)
    jax.block_until_ready(y2)
    ref2 = _reference_nchw(x2, w2, g2, b2, m2, v2, K2, 1)
    assert y2.shape == ref2.shape
    assert jnp.allclose(y2, ref2, atol=5e-2, rtol=5e-2)

    print("KERNEL_OK")
</pallas_src>

<mosaic_0001>
module attributes {stable_mosaic.version = 11 : i64} {
  func.func @_conv_bn_relu_kernel(%arg0: i32, %arg1: i32, %arg2: memref<1x18x18x4xbf16, #tpu.memory_space<vmem>>, %arg3: memref<9x4x8xbf16, #tpu.memory_space<vmem>>, %arg4: memref<1x8xf32, #tpu.memory_space<vmem>>, %arg5: memref<1x16x16x8xf32, #tpu.memory_space<vmem>>) attributes {dimension_semantics = [#tpu.dimension_semantics<parallel>, #tpu.dimension_semantics<parallel>], iteration_bounds = array<i64: 2, 1>, scalar_prefetch = 0 : i64, scratch_operands = 0 : i64, tpu.core_type = #tpu.core_type<tc>, window_params = [{transform_indices = @transform_0, window_bounds = array<i64: 1, 18, 18, 4>}, {transform_indices = @transform_1, window_bounds = array<i64: 9, 4, 8>}, {transform_indices = @transform_2, window_bounds = array<i64: 1, 8>}, {transform_indices = @transform_3, window_bounds = array<i64: 1, 16, 16, 8>}]} {
    %c0 = arith.constant 0 : index
    %c0_0 = arith.constant 0 : index
    %c0_1 = arith.constant 0 : index
    %c0_2 = arith.constant 0 : index
    %0 = vector.load %arg2[%c0, %c0_0, %c0_1, %c0_2] : memref<1x18x18x4xbf16, #tpu.memory_space<vmem>>, vector<1x16x16x4xbf16>
    %1 = vector.shape_cast %0 : vector<1x16x16x4xbf16> to vector<16x16x4xbf16>
    %2 = vector.shape_cast %1 : vector<16x16x4xbf16> to vector<256x4xbf16>
    %c0_3 = arith.constant 0 : index
    %c0_4 = arith.constant 0 : index
    %c0_5 = arith.constant 0 : index
    %3 = vector.load %arg3[%c0_3, %c0_4, %c0_5] : memref<9x4x8xbf16, #tpu.memory_space<vmem>>, vector<1x4x8xbf16>
    %4 = vector.shape_cast %3 : vector<1x4x8xbf16> to vector<4x8xbf16>
    %cst = arith.constant dense<0.000000e+00> : vector<256x8xf32>
    %5 = tpu.matmul %2, %4, %cst {dimension_numbers = #tpu.dot_dimension_numbers<[1], [0], [0], [1], [0, 0, 1, 1], [], []>} : vector<256x4xbf16>, vector<4x8xbf16>, vector<256x8xf32> -> vector<256x8xf32>
    %c0_6 = arith.constant 0 : index
    %c0_7 = arith.constant 0 : index
    %c1 = arith.constant 1 : index
    %c0_8 = arith.constant 0 : index
    %6 = vector.load %arg2[%c0_6, %c0_7, %c1, %c0_8] : memref<1x18x18x4xbf16, #tpu.memory_space<vmem>>, vector<1x16x16x4xbf16>
    %7 = vector.shape_cast %6 : vector<1x16x16x4xbf16> to vector<16x16x4xbf16>
    %8 = vector.shape_cast %7 : vector<16x16x4xbf16> to vector<256x4xbf16>
    %c1_9 = arith.constant 1 : index
    %c0_10 = arith.constant 0 : index
    %c0_11 = arith.constant 0 : index
    %9 = vector.load %arg3[%c1_9, %c0_10, %c0_11] : memref<9x4x8xbf16, #tpu.memory_space<vmem>>, vector<1x4x8xbf16>
    %10 = vector.shape_cast %9 : vector<1x4x8xbf16> to vector<4x8xbf16>
    %cst_12 = arith.constant dense<0.000000e+00> : vector<256x8xf32>
    %11 = tpu.matmul %8, %10, %cst_12 {dimension_numbers = #tpu.dot_dimension_numbers<[1], [0], [0], [1], [0, 0, 1, 1], [], []>} : vector<256x4xbf16>, vector<4x8xbf16>, vector<256x8xf32> -> vector<256x8xf32>
    %12 = arith.addf %5, %11 : vector<256x8xf32>
    %c0_13 = arith.constant 0 : index
    %c0_14 = arith.constant 0 : index
    %c2 = arith.constant 2 : index
    %c0_15 = arith.constant 0 : index
    %13 = vector.load %arg2[%c0_13, %c0_14, %c2, %c0_15] : memref<1x18x18x4xbf16, #tpu.memory_space<vmem>>, vector<1x16x16x4xbf16>
    %14 = vector.shape_cast %13 : vector<1x16x16x4xbf16> to vector<16x16x4xbf16>
    %15 = vector.shape_cast %14 : vector<16x16x4xbf16> to vector<256x4xbf16>
    %c2_16 = arith.constant 2 : index
    %c0_17 = arith.constant 0 : index
    %c0_18 = arith.constant 0 : index
    %16 = vector.load %arg3[%c2_16, %c0_17, %c0_18] : memref<9x4x8xbf16, #tpu.memory_space<vmem>>, vector<1x4x8xbf16>
    %17 = vector.shape_cast %16 : vector<1x4x8xbf16> to vector<4x8xbf16>
    %cst_19 = arith.constant dense<0.000000e+00> : vector<256x8xf32>
    %18 = tpu.matmul %15, %17, %cst_19 {dimension_numbers = #tpu.dot_dimension_numbers<[1], [0], [0], [1], [0, 0, 1, 1], [], []>} : vector<256x4xbf16>, vector<4x8xbf16>, vector<256x8xf32> -> vector<256x8xf32>
    %19 = arith.addf %12, %18 : vector<256x8xf32>
    %c0_20 = arith.constant 0 : index
    %c1_21 = arith.constant 1 : index
    %c0_22 = arith.constant 0 : index
    %c0_23 = arith.constant 0 : index
    %20 = vector.load %arg2[%c0_20, %c1_21, %c0_22, %c0_23] : memref<1x18x18x4xbf16, #tpu.memory_space<vmem>>, vector<1x16x16x4xbf16>
    %21 = vector.shape_cast %20 : vector<1x16x16x4xbf16> to vector<16x16x4xbf16>
    %22 = vector.shape_cast %21 : vector<16x16x4xbf16> to vector<256x4xbf16>
    %c3 = arith.constant 3 : index
    %c0_24 = arith.constant 0 : index
    %c0_25 = arith.constant 0 : index
    %23 = vector.load %arg3[%c3, %c0_24, %c0_25] : memref<9x4x8xbf16, #tpu.memory_space<vmem>>, vector<1x4x8xbf16>
    %24 = vector.shape_cast %23 : vector<1x4x8xbf16> to vector<4x8xbf16>
    %cst_26 = arith.constant dense<0.000000e+00> : vector<256x8xf32>
    %25 = tpu.matmul %22, %24, %cst_26 {dimension_numbers = #tpu.dot_dimension_numbers<[1], [0], [0], [1], [0, 0, 1, 1], [], []>} : vector<256x4xbf16>, vector<4x8xbf16>, vector<256x8xf32> -> vector<256x8xf32>
    %26 = arith.addf %19, %25 : vector<256x8xf32>
    %c0_27 = arith.constant 0 : index
    %c1_28 = arith.constant 1 : index
    %c1_29 = arith.constant 1 : index
    %c0_30 = arith.constant 0 : index
    %27 = vector.load %arg2[%c0_27, %c1_28, %c1_29, %c0_30] : memref<1x18x18x4xbf16, #tpu.memory_space<vmem>>, vector<1x16x16x4xbf16>
    %28 = vector.shape_cast %27 : vector<1x16x16x4xbf16> to vector<16x16x4xbf16>
    %29 = vector.shape_cast %28 : vector<16x16x4xbf16> to vector<256x4xbf16>
    %c4 = arith.constant 4 : index
    %c0_31 = arith.constant 0 : index
    %c0_32 = arith.constant 0 : index
    %30 = vector.load %arg3[%c4, %c0_31, %c0_32] : memref<9x4x8xbf16, #tpu.memory_space<vmem>>, vector<1x4x8xbf16>
    %31 = vector.shape_cast %30 : vector<1x4x8xbf16> to vector<4x8xbf16>
    %cst_33 = arith.constant dense<0.000000e+00> : vector<256x8xf32>
    %32 = tpu.matmul %29, %31, %cst_33 {dimension_numbers = #tpu.dot_dimension_numbers<[1], [0], [0], [1], [0, 0, 1, 1], [], []>} : vector<256x4xbf16>, vector<4x8xbf16>, vector<256x8xf32> -> vector<256x8xf32>
    %33 = arith.addf %26, %32 : vector<256x8xf32>
    %c0_34 = arith.constant 0 : index
    %c1_35 = arith.constant 1 : index
    %c2_36 = arith.constant 2 : index
    %c0_37 = arith.constant 0 : index
    %34 = vector.load %arg2[%c0_34, %c1_35, %c2_36, %c0_37] : memref<1x18x18x4xbf16, #tpu.memory_space<vmem>>, vector<1x16x16x4xbf16>
    %35 = vector.shape_cast %34 : vector<1x16x16x4xbf16> to vector<16x16x4xbf16>
    %36 = vector.shape_cast %35 : vector<16x16x4xbf16> to vector<256x4xbf16>
    %c5 = arith.constant 5 : index
    %c0_38 = arith.constant 0 : index
    %c0_39 = arith.constant 0 : index
    %37 = vector.load %arg3[%c5, %c0_38, %c0_39] : memref<9x4x8xbf16, #tpu.memory_space<vmem>>, vector<1x4x8xbf16>
    %38 = vector.shape_cast %37 : vector<1x4x8xbf16> to vector<4x8xbf16>
    %cst_40 = arith.constant dense<0.000000e+00> : vector<256x8xf32>
    %39 = tpu.matmul %36, %38, %cst_40 {dimension_numbers = #tpu.dot_dimension_numbers<[1], [0], [0], [1], [0, 0, 1, 1], [], []>} : vector<256x4xbf16>, vector<4x8xbf16>, vector<256x8xf32> -> vector<256x8xf32>
    %40 = arith.addf %33, %39 : vector<256x8xf32>
    %c0_41 = arith.constant 0 : index
    %c2_42 = arith.constant 2 : index
    %c0_43 = arith.constant 0 : index
    %c0_44 = arith.constant 0 : index
    %41 = vector.load %arg2[%c0_41, %c2_42, %c0_43, %c0_44] : memref<1x18x18x4xbf16, #tpu.memory_space<vmem>>, vector<1x16x16x4xbf16>
    %42 = vector.shape_cast %41 : vector<1x16x16x4xbf16> to vector<16x16x4xbf16>
    %43 = vector.shape_cast %42 : vector<16x16x4xbf16> to vector<256x4xbf16>
    %c6 = arith.constant 6 : index
    %c0_45 = arith.constant 0 : index
    %c0_46 = arith.constant 0 : index
    %44 = vector.load %arg3[%c6, %c0_45, %c0_46] : memref<9x4x8xbf16, #tpu.memory_space<vmem>>, vector<1x4x8xbf16>
    %45 = vector.shape_cast %44 : vector<1x4x8xbf16> to vector<4x8xbf16>
    %cst_47 = arith.constant dense<0.000000e+00> : vector<256x8xf32>
    %46 = tpu.matmul %43, %45, %cst_47 {dimension_numbers = #tpu.dot_dimension_numbers<[1], [0], [0], [1], [0, 0, 1, 1], [], []>} : vector<256x4xbf16>, vector<4x8xbf16>, vector<256x8xf32> -> vector<256x8xf32>
    %47 = arith.addf %40, %46 : vector<256x8xf32>
    %c0_48 = arith.constant 0 : index
    %c2_49 = arith.constant 2 : index
    %c1_50 = arith.constant 1 : index
    %c0_51 = arith.constant 0 : index
    %48 = vector.load %arg2[%c0_48, %c2_49, %c1_50, %c0_51] : memref<1x18x18x4xbf16, #tpu.memory_space<vmem>>, vector<1x16x16x4xbf16>
    %49 = vector.shape_cast %48 : vector<1x16x16x4xbf16> to vector<16x16x4xbf16>
    %50 = vector.shape_cast %49 : vector<16x16x4xbf16> to vector<256x4xbf16>
    %c7 = arith.constant 7 : index
    %c0_52 = arith.constant 0 : index
    %c0_53 = arith.constant 0 : index
    %51 = vector.load %arg3[%c7, %c0_52, %c0_53] : memref<9x4x8xbf16, #tpu.memory_space<vmem>>, vector<1x4x8xbf16>
    %52 = vector.shape_cast %51 : vector<1x4x8xbf16> to vector<4x8xbf16>
    %cst_54 = arith.constant dense<0.000000e+00> : vector<256x8xf32>
    %53 = tpu.matmul %50, %52, %cst_54 {dimension_numbers = #tpu.dot_dimension_numbers<[1], [0], [0], [1], [0, 0, 1, 1], [], []>} : vector<256x4xbf16>, vector<4x8xbf16>, vector<256x8xf32> -> vector<256x8xf32>
    %54 = arith.addf %47, %53 : vector<256x8xf32>
    %c0_55 = arith.constant 0 : index
    %c2_56 = arith.constant 2 : index
    %c2_57 = arith.constant 2 : index
    %c0_58 = arith.constant 0 : index
    %55 = vector.load %arg2[%c0_55, %c2_56, %c2_57, %c0_58] : memref<1x18x18x4xbf16, #tpu.memory_space<vmem>>, vector<1x16x16x4xbf16>
    %56 = vector.shape_cast %55 : vector<1x16x16x4xbf16> to vector<16x16x4xbf16>
    %57 = vector.shape_cast %56 : vector<16x16x4xbf16> to vector<256x4xbf16>
    %c8 = arith.constant 8 : index
    %c0_59 = arith.constant 0 : index
    %c0_60 = arith.constant 0 : index
    %58 = vector.load %arg3[%c8, %c0_59, %c0_60] : memref<9x4x8xbf16, #tpu.memory_space<vmem>>, vector<1x4x8xbf16>
    %59 = vector.shape_cast %58 : vector<1x4x8xbf16> to vector<4x8xbf16>
    %cst_61 = arith.constant dense<0.000000e+00> : vector<256x8xf32>
    %60 = tpu.matmul %57, %59, %cst_61 {dimension_numbers = #tpu.dot_dimension_numbers<[1], [0], [0], [1], [0, 0, 1, 1], [], []>} : vector<256x4xbf16>, vector<4x8xbf16>, vector<256x8xf32> -> vector<256x8xf32>
    %61 = arith.addf %54, %60 : vector<256x8xf32>
    %c0_62 = arith.constant 0 : index
    %c0_63 = arith.constant 0 : index
    %62 = vector.load %arg4[%c0_62, %c0_63] : memref<1x8xf32, #tpu.memory_space<vmem>>, vector<1x8xf32>
    %63 = vector.broadcast %62 : vector<1x8xf32> to vector<256x8xf32>
    %64 = arith.addf %61, %63 : vector<256x8xf32>
    %cst_64 = arith.constant 0.000000e+00 : f32
    %65 = vector.broadcast %cst_64 : f32 to vector<256x8xf32>
    %66 = arith.maximumf %64, %65 : vector<256x8xf32>
    %67 = vector.shape_cast %66 : vector<256x8xf32> to vector<1x16x16x8xf32>
    %c0_65 = arith.constant 0 : index
    %c0_66 = arith.constant 0 : index
    %c0_67 = arith.constant 0 : index
    %c0_68 = arith.constant 0 : index
    %68 = vector.load %arg5[%c0_65, %c0_66, %c0_67, %c0_68] : memref<1x16x16x8xf32, #tpu.memory_space<vmem>>, vector<1x16x16x8xf32>
    tpu.vector_store %arg5[%c0_65, %c0_66, %c0_67, %c0_68], %67 {strides = array<i32>} : memref<1x16x16x8xf32, #tpu.memory_space<vmem>>, vector<1x16x16x8xf32>,
    return
  }
  func.func @transform_0(%arg0: i32, %arg1: i32) -> (i32, i32, i32, i32) {
    %c0_i32 = arith.constant 0 : i32
    %c0_i32_0 = arith.constant 0 : i32
    %c0_i32_1 = arith.constant 0 : i32
    %c0_i32_2 = arith.constant 0 : i32
    return %arg0, %c0_i32, %c0_i32_0, %c0_i32_1 : i32, i32, i32, i32
  }
  func.func @transform_1(%arg0: i32, %arg1: i32) -> (i32, i32, i32) {
    %c0_i32 = arith.constant 0 : i32
    %c0_i32_0 = arith.constant 0 : i32
    %c0_i32_1 = arith.constant 0 : i32
    return %c0_i32, %c0_i32_0, %arg1 : i32, i32, i32
  }
  func.func @transform_2(%arg0: i32, %arg1: i32) -> (i32, i32) {
    %c0_i32 = arith.constant 0 : i32
    %c0_i32_0 = arith.constant 0 : i32
    return %c0_i32, %arg1 : i32, i32
  }
  func.func @transform_3(%arg0: i32, %arg1: i32) -> (i32, i32, i32, i32) {
    %c0_i32 = arith.constant 0 : i32
    %c0_i32_0 = arith.constant 0 : i32
    %c0_i32_1 = arith.constant 0 : i32
    return %arg0, %c0_i32, %c0_i32_0, %arg1 : i32, i32, i32, i32
  }
}

</mosaic_0001>

<llo_original>
// kernel: conv_block_forward_nhwc.1
$region0: #{conv_block_forward_nhwc.1}
  #allocation0 [shape = 'u32[]', space=smem, size = 0x4, offset = 0x4, fixed_abs, tag = 'smem constant byte address 0x4 - core index']
  #allocation1 [shape = 'u32[144,128]{1,0:T(1,128)}', space=vmem, size = 0x12000, scoped, tag = 'internal scratch']
  %s0 = inlined_call_operand.vmem [shape: bf16[2,18,18,4], index: 0, kind: input, shape index: {}]
  %s1 = inlined_call_operand.vmem [shape: bf16[9,4,8], index: 1, kind: input, shape index: {}]
  %s2 = inlined_call_operand.vmem [shape: f32[1,8], index: 2, kind: input, shape index: {}]
  %s3 = inlined_call_operand.vmem [shape: f32[2,16,16,8], index: 3, kind: output, shape index: {}]
  %s4 = sld [smem:[#allocation0]]
  $region45: #{conv_block_forward_nhwc.1} parent=0
    _
  %s6 = ssub.s32 1, %s4
  %s7 = scalar_select 0, %s6, %s4
  loop: start=0, step=1, limit=4
  $region2: #{conv_block_forward_nhwc.1} parent=0 // loop_pre_header
    _
  $region3: #{conv_block_forward_nhwc.1} parent=0 // loop_header
    %s9 = sphi 0, %s13
    %p10 = scmp.ge.s32.totalorder %s9, 4
    %s16 = sphi 0, %s28
    %s17 = sphi 0, %s24
    %s18 = sphi 0, %s16
    %s19 = sphi 0, %s17
    %s20 = sphi 0, %s18
    %s21 = sphi 0, %s19
    %s31 = sphi 0, %s33
    %s34 = sphi 0, %s31
    %s35 = sphi 0, %s34
    %s51 = sphi 0, %s35
    %s57 = sphi 0, %s59
    %s60 = sphi 0, %s57
    %s61 = sphi 0, %s60
    %s77 = sphi 0, %s61
    %s83 = sphi 0, %s85
    %s86 = sphi 0, %s83
    %s87 = sphi 0, %s86
    %s103 = sphi 0, %s87
    %s111 = sphi 0, %s113
    %s114 = sphi 0, %s111
    %s115 = sphi 0, %s114
    %s131 = sphi 0, %s115
  $region4: #{conv_block_forward_nhwc.1} parent=0 // loop_header_branch
    %12 = sbr.rel (%p10) target = $region8
  $region5: #{conv_block_forward_nhwc.1} parent=0 // loop_body
    %s14 = ssub.s32 %s9, 1
    %s15 = ssub.s32 %s9, 2
    %s22 = sadd.s32 1, %s17
    %p23 = scmp.ge.s32.totalorder %s22, 1
    %s24 = scalar_select %p23, 0, %s22
    %s25 = sadd.s32 1, %s16
    %s26 = scalar_select %p23, %s25, %s16
    %p27 = scmp.ge.s32.totalorder %s26, 2
    %s28 = scalar_select %p27, 0, %s26
    %s29 = ssub.s32 %s16, %s28
    %p30 = scmp.eq.s32.totalorder %s29, 0
    %s32 = sadd.s32 %s31, 1
    %s33 = scalar_select %p30, %s31, %s32
    %p36 = pneg %p30
    %p37 = scmp.eq.s32.totalorder %s9, 1
    %p38 = por %p36, %p37
    %p39 = scmp.ne.s32.totalorder %s31, %s34
    %p40 = scmp.eq.s32.totalorder %s9, 0
    %p41 = por %p39, %p40
    %p42 = scmp.ne.s32.totalorder %s31, %s34
    %p43 = scmp.eq.s32.totalorder %s14, 1
    %p44 = por %p42, %p43
    %p45 = scmp.ne.s32.totalorder %s34, %s35
    %p46 = scmp.eq.s32.totalorder %s14, 0
    %p47 = por %p45, %p46
    %p48 = scmp.ne.s32.totalorder %s34, %s35
    %p49 = scmp.eq.s32.totalorder %s15, 1
    %p50 = por %p48, %p49
    %p52 = scmp.ne.s32.totalorder %s35, %s51
    %p53 = scmp.eq.s32.totalorder %s15, 0
    %p54 = por %p52, %p53
    %s55 = ssub.s32 %s17, %s24
    %p56 = scmp.eq.s32.totalorder %s55, 0
    %s58 = sadd.s32 %s57, 1
    %s59 = scalar_select %p56, %s57, %s58
    %p62 = pneg %p56
    %p63 = scmp.eq.s32.totalorder %s9, 1
    %p64 = por %p62, %p63
    %p65 = scmp.ne.s32.totalorder %s57, %s60
    %p66 = scmp.eq.s32.totalorder %s9, 0
    %p67 = por %p65, %p66
    %p68 = scmp.ne.s32.totalorder %s57, %s60
    %p69 = scmp.eq.s32.totalorder %s14, 1
    %p70 = por %p68, %p69
    %p71 = scmp.ne.s32.totalorder %s60, %s61
    %p72 = scmp.eq.s32.totalorder %s14, 0
    %p73 = por %p71, %p72
    %p74 = scmp.ne.s32.totalorder %s60, %s61
    %p75 = scmp.eq.s32.totalorder %s15, 1
    %p76 = por %p74, %p75
    %p78 = scmp.ne.s32.totalorder %s61, %s77
    %p79 = scmp.eq.s32.totalorder %s15, 0
    %p80 = por %p78, %p79
    %s81 = ssub.s32 %s17, %s24
    %p82 = scmp.eq.s32.totalorder %s81, 0
    %s84 = sadd.s32 %s83, 1
    %s85 = scalar_select %p82, %s83, %s84
    %p88 = pneg %p82
    %p89 = scmp.eq.s32.totalorder %s9, 1
    %p90 = por %p88, %p89
    %p91 = scmp.ne.s32.totalorder %s83, %s86
    %p92 = scmp.eq.s32.totalorder %s9, 0
    %p93 = por %p91, %p92
    %p94 = scmp.ne.s32.totalorder %s83, %s86
    %p95 = scmp.eq.s32.totalorder %s14, 1
    %p96 = por %p94, %p95
    %p97 = scmp.ne.s32.totalorder %s86, %s87
    %p98 = scmp.eq.s32.totalorder %s14, 0
    %p99 = por %p97, %p98
    %p100 = scmp.ne.s32.totalorder %s86, %s87
    %p101 = scmp.eq.s32.totalorder %s15, 1
    %p102 = por %p100, %p101
    %p104 = scmp.ne.s32.totalorder %s87, %s103
    %p105 = scmp.eq.s32.totalorder %s15, 0
    %p106 = por %p104, %p105
    %s107 = ssub.s32 %s16, %s28
    %s108 = ssub.s32 %s17, %s24
    %s109 = sor.u32 %s107, %s108
    %p110 = scmp.eq.s32.totalorder %s109, 0
    %s112 = sadd.s32 %s111, 1
    %s113 = scalar_select %p110, %s111, %s112
    %p116 = pneg %p110
    %p117 = scmp.eq.s32.totalorder %s9, 1
    %p118 = por %p116, %p117
    %p119 = scmp.ne.s32.totalorder %s111, %s114
    %p120 = scmp.eq.s32.totalorder %s9, 0
    %p121 = por %p119, %p120
    %p122 = scmp.ne.s32.totalorder %s111, %s114
    %p123 = scmp.eq.s32.totalorder %s14, 1
    %p124 = por %p122, %p123
    %p125 = scmp.ne.s32.totalorder %s114, %s115
    %p126 = scmp.eq.s32.totalorder %s14, 0
    %p127 = por %p125, %p126
    %p128 = scmp.ne.s32.totalorder %s114, %s115
    %p129 = scmp.eq.s32.totalorder %s15, 1
    %p130 = por %p128, %p129
    %p132 = scmp.ne.s32.totalorder %s115, %s131
    %p133 = scmp.eq.s32.totalorder %s15, 0
    %p134 = por %p132, %p133
    %p135 = scmp.le.s32.totalorder 1, %s9
    %p136 = scmp.lt.s32.totalorder %s9, 3
    %p137 = pnand %p135, %p136
    %p138 = pneg %p137
    // Predicated region
    $region9: #{conv_block_forward_nhwc.1} parent=5 // pred_check
      _
    $region10: #{conv_block_forward_nhwc.1} parent=5 // pred_check_branch
      %140 = sbr.rel (%p137) target = $region12
    $region11: #{conv_block_forward_nhwc.1} parent=5 // pred_region
      %s141 = ssub.s32 %s9, 1
      // Predicated region
      $region13: #{conv_block_forward_nhwc.1} parent=11 // pred_check
        %p142 = pneg %p73
      $region14: #{conv_block_forward_nhwc.1} parent=11 // pred_check_branch
        %144 = sbr.rel (%p142) target = $region16
      $region15: #{conv_block_forward_nhwc.1} parent=11 // pred_region
        %p145 = scmp.lt.s32.totalorder %s19, 0
        %s146 = scalar_select %p145, %s19, 0
        %s147 = smul.addr %s146, 2
        %s148 = scalar_lea.vmem %s1, %s147
      $region16: #{conv_block_forward_nhwc.1} parent=11 // pred_fallthru
        _
      // Predicated region
      $region17: #{conv_block_forward_nhwc.1} parent=11 // pred_check
        %p149 = pneg %p99
      $region18: #{conv_block_forward_nhwc.1} parent=11 // pred_check_branch
        %151 = sbr.rel (%p149) target = $region20
      $region19: #{conv_block_forward_nhwc.1} parent=11 // pred_region
        %p152 = scmp.lt.s32.totalorder %s19, 0
        %s153 = scalar_select %p152, %s19, 0
        %s154 = scalar_lea.vmem %s2, %s153
      $region20: #{conv_block_forward_nhwc.1} parent=11 // pred_fallthru
        _
    $region12: #{conv_block_forward_nhwc.1} parent=5 // pred_fallthru
      _
    %p155 = scmp.lt.s32.totalorder %s9, 2
    // Predicated region
    $region21: #{conv_block_forward_nhwc.1} parent=5 // pred_check
      %p156 = pneg %p155
    $region22: #{conv_block_forward_nhwc.1} parent=5 // pred_check_branch
      %158 = sbr.rel (%p156) target = $region24
    $region23: #{conv_block_forward_nhwc.1} parent=5 // pred_region
      // Predicated region
      $region25: #{conv_block_forward_nhwc.1} parent=23 // pred_check
        %p159 = pneg %p41
      $region26: #{conv_block_forward_nhwc.1} parent=23 // pred_check_branch
        %161 = sbr.rel (%p159) target = $region28
      $region27: #{conv_block_forward_nhwc.1} parent=23 // pred_region
        %p162 = scmp.lt.s32.totalorder %s16, 1
        %s163 = scalar_select %p162, %s16, 1
        %s164 = smul.addr %s163, 54
        %s165 = smul.addr %s164, 4
        %s166 = scalar_lea.vmem %s0, %s165
      $region28: #{conv_block_forward_nhwc.1} parent=23 // pred_fallthru
        _
    $region24: #{conv_block_forward_nhwc.1} parent=5 // pred_fallthru
      _
    %p167 = scmp.le.s32.totalorder 1, %s9
    %p168 = scmp.lt.s32.totalorder %s9, 3
    %p169 = pnand %p167, %p168
    %p170 = pneg %p169
    // Predicated region
    $region29: #{conv_block_forward_nhwc.1} parent=5 // pred_check
      _
    $region30: #{conv_block_forward_nhwc.1} parent=5 // pred_check_branch
      %172 = sbr.rel (%p169) target = $region32
    $region31: #{conv_block_forward_nhwc.1} parent=5 // pred_region
      %s173 = ssub.s32 %s9, 1
      %p174 = scmp.lt.s32.totalorder %s18, 1
      %s175 = scalar_select %p174, %s18, 1
      %s176 = smul.addr %s175, 54
      %s177 = smul.addr %s176, 4
      %s178 = scalar_lea.vmem %s0, %s177
      %p179 = pneg %p47
      %p180 = pneg %p44
      %p181 = scmp.lt.s32.totalorder %s19, 0
      %s182 = scalar_select %p181, %s19, 0
      %s183 = smul.addr %s182, 2
      %s184 = scalar_lea.vmem %s1, %s183
      %p185 = pneg %p73
      %p186 = pneg %p70
      %p187 = scmp.lt.s32.totalorder %s19, 0
      %s188 = scalar_select %p187, %s19, 0
      %s189 = scalar_lea.vmem %s2, %s188
      %p190 = pneg %p99
      %p191 = pneg %p96
      %p192 = pneg %p127
      %p193 = pneg %p124
      %p194 = scmp.lt.s32.totalorder %s18, 1
      %s195 = scalar_select %p194, %s18, 1
      %p196 = scmp.lt.s32.totalorder %s19, 0
      %s197 = scalar_select %p196, %s19, 0
      %s198 = smul.addr %s195, 32
      %s199 = sadd.s32 %s197, %s198
      %s200 = smul.addr %s199, 8
      %s201 = scalar_lea.vmem %s3, %s200
      %p202 = scmp.lt.s32.totalorder %s18, 1
      %s203 = scalar_select %p202, %s18, 1
      %s204 = smul.addr %s203, 54
      %s205 = smul.addr %s204, 4
      %s206 = scalar_lea.vmem %s0, %s205
      %p207 = scmp.lt.s32.totalorder %s19, 0
      %s208 = scalar_select %p207, %s19, 0
      %s209 = smul.addr %s208, 2
      %s210 = scalar_lea.vmem %s1, %s209
      %p211 = scmp.lt.s32.totalorder %s19, 0
      %s212 = scalar_select %p211, %s19, 0
      %s213 = scalar_lea.vmem %s2, %s212
      %p214 = scmp.lt.s32.totalorder %s18, 1
      %s215 = scalar_select %p214, %s18, 1
      %p216 = scmp.lt.s32.totalorder %s19, 0
      %s217 = scalar_select %p216, %s19, 0
      %s218 = smul.addr %s215, 32
      %s219 = sadd.s32 %s217, %s218
      %s220 = smul.addr %s219, 8
      %s221 = scalar_lea.vmem %s3, %s220
      %v223 = vld [vmem:[%s206] sm:$0xf]
      %v224 = vld [vmem:[%s206 + $0x4] sm:$0xf]
      %v225 = vld [vmem:[%s206 + $0xc] sm:$0xf]
      %v226 = vld [vmem:[%s206 + $0x10] sm:$0xf]
      %v227 = vld [vmem:[%s206 + $0x18] sm:$0xf]
      %v228 = vld [vmem:[%s206 + $0x1c] sm:$0xf]
      %v229 = vld [vmem:[%s206 + $0x24] sm:$0xf]
      %v230 = vld [vmem:[%s206 + $0x28] sm:$0xf]
      %v231 = vld [vmem:[%s206 + $0x30] sm:$0xf]
      %v232 = vld [vmem:[%s206 + $0x34] sm:$0xf]
      %v233 = vld [vmem:[%s206 + $0x3c] sm:$0xf]
      %v234 = vld [vmem:[%s206 + $0x40] sm:$0xf]
      %v235 = vld [vmem:[%s206 + $0x48] sm:$0xf]
      %v236 = vld [vmem:[%s206 + $0x4c] sm:$0xf]
      %v237 = vld [vmem:[%s206 + $0x54] sm:$0xf]
      %v238 = vld [vmem:[%s206 + $0x58] sm:$0xf]
      %v239 = vld [vmem:[%s206 + $0x60] sm:$0xf]
      %v240 = vld [vmem:[%s206 + $0x64] sm:$0xf]
      %v241 = vld [vmem:[%s206 + $0x6c] sm:$0xf]
      %v242 = vld [vmem:[%s206 + $0x70] sm:$0xf]
      %v243 = vld [vmem:[%s206 + $0x78] sm:$0xf]
      %v244 = vld [vmem:[%s206 + $0x7c] sm:$0xf]
      %v245 = vld [vmem:[%s206 + $0x84] sm:$0xf]
      %v246 = vld [vmem:[%s206 + $0x88] sm:$0xf]
      %v247 = vld [vmem:[%s206 + $0x90] sm:$0xf]
      %v248 = vld [vmem:[%s206 + $0x94] sm:$0xf]
      %v249 = vld [vmem:[%s206 + $0x9c] sm:$0xf]
      %v250 = vld [vmem:[%s206 + $0xa0] sm:$0xf]
      %v251 = vld [vmem:[%s206 + $0xa8] sm:$0xf]
      %v252 = vld [vmem:[%s206 + $0xac] sm:$0xf]
      %v253 = vld [vmem:[%s206 + $0xb4] sm:$0xf]
      %v254 = vld [vmem:[%s206 + $0xb8] sm:$0xf]
      %v255 = vld [vmem:[%s210] sm:$0x3]
      %v256 = vld [vmem:[%s206 + $0x8] sm:$0x1]
      %v257 = vld [vmem:[%s206 + $0x14] sm:$0x1]
      %v258 = vld [vmem:[%s206 + $0x20] sm:$0x1]
      %v259 = vld [vmem:[%s206 + $0x2c] sm:$0x1]
      %v260 = vld [vmem:[%s206 + $0x38] sm:$0x1]
      %v261 = vld [vmem:[%s206 + $0x44] sm:$0x1]
      %v262 = vld [vmem:[%s206 + $0x50] sm:$0x1]
      %v263 = vld [vmem:[%s206 + $0x5c] sm:$0x1]
      %v264 = vld [vmem:[%s206 + $0x68] sm:$0x1]
      %v265 = vld [vmem:[%s206 + $0x74] sm:$0x1]
      %v266 = vld [vmem:[%s206 + $0x80] sm:$0x1]
      %v267 = vld [vmem:[%s206 + $0x8c] sm:$0x1]
      %v268 = vld [vmem:[%s206 + $0x98] sm:$0x1]
      %v269 = vld [vmem:[%s206 + $0xa4] sm:$0x1]
      %v270 = vld [vmem:[%s206 + $0xb0] sm:$0x1]
      %v271 = vld [vmem:[%s206 + $0xbc] sm:$0x1]
      %vm272 = vsmask.f32 3328
      %vm273 = vsmask.f32 7440
      %vm274 = vmor %vm272, %vm273
      %v276 = vshrl.u32 %v223, 16
      %v278 = vrot.slane %v276, 4
      %v279 = vshll.u32 %v223, 16
      %v281 = vrot.slane %v279, 5
      %v282 = vor.u32 %v278, %v281
      %v283 = vrot.slane %v282, 4
      %v285 = vshll.u32 %v224, 16
      %v287 = vrot.slane %v285, 5
      %v288 = vsel %vm274, %v283, %v287
      %v289 = vshrl.u32 %v224, 16
      %v291 = vrot.slane %v289, 4
      %v292 = vor.u32 %v291, %v287
      %v293 = vrot.slane %v292, 4
      %v295 = vshll.u32 %v256, 16
      %v297 = vrot.slane %v295, 5
      %v298 = vsel %vm274, %v293, %v297
      %v300 = vshrl.u32 %v225, 16
      %v302 = vrot.slane %v300, 4
      %v303 = vshll.u32 %v225, 16
      %v305 = vrot.slane %v303, 5
      %v306 = vor.u32 %v302, %v305
      %v307 = vrot.slane %v306, 4
      %v309 = vshll.u32 %v226, 16
      %v311 = vrot.slane %v309, 5
      %v312 = vsel %vm274, %v307, %v311
      %v313 = vshrl.u32 %v226, 16
      %v315 = vrot.slane %v313, 4
      %v316 = vor.u32 %v315, %v311
      %v317 = vrot.slane %v316, 4
      %v319 = vshll.u32 %v257, 16
      %v321 = vrot.slane %v319, 5
      %v322 = vsel %vm274, %v317, %v321
      %v324 = vshrl.u32 %v227, 16
      %v326 = vrot.slane %v324, 4
      %v327 = vshll.u32 %v227, 16
      %v329 = vrot.slane %v327, 5
      %v330 = vor.u32 %v326, %v329
      %v331 = vrot.slane %v330, 4
      %v333 = vshll.u32 %v228, 16
      %v335 = vrot.slane %v333, 5
      %v336 = vsel %vm274, %v331, %v335
      %v337 = vshrl.u32 %v228, 16
      %v339 = vrot.slane %v337, 4
      %v340 = vor.u32 %v339, %v335
      %v341 = vrot.slane %v340, 4
      %v343 = vshll.u32 %v258, 16
      %v345 = vrot.slane %v343, 5
      %v346 = vsel %vm274, %v341, %v345
      %v348 = vshrl.u32 %v229, 16
      %v350 = vrot.slane %v348, 4
      %v351 = vshll.u32 %v229, 16
      %v353 = vrot.slane %v351, 5
      %v354 = vor.u32 %v350, %v353
      %v355 = vrot.slane %v354, 4
      %v357 = vshll.u32 %v230, 16
      %v359 = vrot.slane %v357, 5
      %v360 = vsel %vm274, %v355, %v359
      %v361 = vshrl.u32 %v230, 16
      %v363 = vrot.slane %v361, 4
      %v364 = vor.u32 %v363, %v359
      %v365 = vrot.slane %v364, 4
      %v367 = vshll.u32 %v259, 16
      %v369 = vrot.slane %v367, 5
      %v370 = vsel %vm274, %v365, %v369
      %v372 = vshrl.u32 %v231, 16
      %v374 = vrot.slane %v372, 4
      %v375 = vshll.u32 %v231, 16
      %v377 = vrot.slane %v375, 5
      %v378 = vor.u32 %v374, %v377
      %v379 = vrot.slane %v378, 4
      %v381 = vshll.u32 %v232, 16
      %v383 = vrot.slane %v381, 5
      %v384 = vsel %vm274, %v379, %v383
      %v385 = vshrl.u32 %v232, 16
      %v387 = vrot.slane %v385, 4
      %v388 = vor.u32 %v387, %v383
      %v389 = vrot.slane %v388, 4
      %v391 = vshll.u32 %v260, 16
      %v393 = vrot.slane %v391, 5
      %v394 = vsel %vm274, %v389, %v393
      %v396 = vshrl.u32 %v233, 16
      %v398 = vrot.slane %v396, 4
      %v399 = vshll.u32 %v233, 16
      %v401 = vrot.slane %v399, 5
      %v402 = vor.u32 %v398, %v401
      %v403 = vrot.slane %v402, 4
      %v405 = vshll.u32 %v234, 16
      %v407 = vrot.slane %v405, 5
      %v408 = vsel %vm274, %v403, %v407
      %v409 = vshrl.u32 %v234, 16
      %v411 = vrot.slane %v409, 4
      %v412 = vor.u32 %v411, %v407
      %v413 = vrot.slane %v412, 4
      %v415 = vshll.u32 %v261, 16
      %v417 = vrot.slane %v415, 5
      %v418 = vsel %vm274, %v413, %v417
      %v420 = vshrl.u32 %v235, 16
      %v422 = vrot.slane %v420, 4
      %v423 = vshll.u32 %v235, 16
      %v425 = vrot.slane %v423, 5
      %v426 = vor.u32 %v422, %v425
      %v427 = vrot.slane %v426, 4
      %v429 = vshll.u32 %v236, 16
      %v431 = vrot.slane %v429, 5
      %v432 = vsel %vm274, %v427, %v431
      %v433 = vshrl.u32 %v236, 16
      %v435 = vrot.slane %v433, 4
      %v436 = vor.u32 %v435, %v431
      %v437 = vrot.slane %v436, 4
      %v439 = vshll.u32 %v262, 16
      %v441 = vrot.slane %v439, 5
      %v442 = vsel %vm274, %v437, %v441
      %v444 = vshrl.u32 %v237, 16
      %v446 = vrot.slane %v444, 4
      %v447 = vshll.u32 %v237, 16
      %v449 = vrot.slane %v447, 5
      %v450 = vor.u32 %v446, %v449
      %v451 = vrot.slane %v450, 4
      %v453 = vshll.u32 %v238, 16
      %v455 = vrot.slane %v453, 5
      %v456 = vsel %vm274, %v451, %v455
      %v457 = vshrl.u32 %v238, 16
      %v459 = vrot.slane %v457, 4
      %v460 = vor.u32 %v459, %v455
      %v461 = vrot.slane %v460, 4
      %v463 = vshll.u32 %v263, 16
      %v465 = vrot.slane %v463, 5
      %v466 = vsel %vm274, %v461, %v465
      %v468 = vshrl.u32 %v239, 16
      %v470 = vrot.slane %v468, 4
      %v471 = vshll.u32 %v239, 16
      %v473 = vrot.slane %v471, 5
      %v474 = vor.u32 %v470, %v473
      %v475 = vrot.slane %v474, 4
      %v477 = vshll.u32 %v240, 16
      %v479 = vrot.slane %v477, 5
      %v480 = vsel %vm274, %v475, %v479
      %v481 = vshrl.u32 %v240, 16
      %v483 = vrot.slane %v481, 4
      %v484 = vor.u32 %v483, %v479
      %v485 = vrot.slane %v484, 4
      %v487 = vshll.u32 %v264, 16
      %v489 = vrot.slane %v487, 5
      %v490 = vsel %vm274, %v485, %v489
      %v492 = vshrl.u32 %v241, 16
      %v494 = vrot.slane %v492, 4
      %v495 = vshll.u32 %v241, 16
      %v497 = vrot.slane %v495, 5
      %v498 = vor.u32 %v494, %v497
      %v499 = vrot.slane %v498, 4
      %v501 = vshll.u32 %v242, 16
      %v503 = vrot.slane %v501, 5
      %v504 = vsel %vm274, %v499, %v503
      %v505 = vshrl.u32 %v242, 16
      %v507 = vrot.slane %v505, 4
      %v508 = vor.u32 %v507, %v503
      %v509 = vrot.slane %v508, 4
      %v511 = vshll.u32 %v265, 16
      %v513 = vrot.slane %v511, 5
      %v514 = vsel %vm274, %v509, %v513
      %v516 = vshrl.u32 %v243, 16
      %v518 = vrot.slane %v516, 4
      %v519 = vshll.u32 %v243, 16
      %v521 = vrot.slane %v519, 5
      %v522 = vor.u32 %v518, %v521
      %v523 = vrot.slane %v522, 4
      %v525 = vshll.u32 %v244, 16
      %v527 = vrot.slane %v525, 5
      %v528 = vsel %vm274, %v523, %v527
      %v529 = vshrl.u32 %v244, 16
      %v531 = vrot.slane %v529, 4
      %v532 = vor.u32 %v531, %v527
      %v533 = vrot.slane %v532, 4
      %v535 = vshll.u32 %v266, 16
      %v537 = vrot.slane %v535, 5
      %v538 = vsel %vm274, %v533, %v537
      %v540 = vshrl.u32 %v245, 16
      %v542 = vrot.slane %v540, 4
      %v543 = vshll.u32 %v245, 16
      %v545 = vrot.slane %v543, 5
      %v546 = vor.u32 %v542, %v545
      %v547 = vrot.slane %v546, 4
      %v549 = vshll.u32 %v246, 16
      %v551 = vrot.slane %v549, 5
      %v552 = vsel %vm274, %v547, %v551
      %v553 = vshrl.u32 %v246, 16
      %v555 = vrot.slane %v553, 4
      %v556 = vor.u32 %v555, %v551
      %v557 = vrot.slane %v556, 4
      %v559 = vshll.u32 %v267, 16
      %v561 = vrot.slane %v559, 5
      %v562 = vsel %vm274, %v557, %v561
      %v564 = vshrl.u32 %v247, 16
      %v566 = vrot.slane %v564, 4
      %v567 = vshll.u32 %v247, 16
      %v569 = vrot.slane %v567, 5
      %v570 = vor.u32 %v566, %v569
      %v571 = vrot.slane %v570, 4
      %v573 = vshll.u32 %v248, 16
      %v575 = vrot.slane %v573, 5
      %v576 = vsel %vm274, %v571, %v575
      %v577 = vshrl.u32 %v248, 16
      %v579 = vrot.slane %v577, 4
      %v580 = vor.u32 %v579, %v575
      %v581 = vrot.slane %v580, 4
      %v583 = vshll.u32 %v268, 16
      %v585 = vrot.slane %v583, 5
      %v586 = vsel %vm274, %v581, %v585
      %v588 = vshrl.u32 %v249, 16
      %v590 = vrot.slane %v588, 4
      %v591 = vshll.u32 %v249, 16
      %v593 = vrot.slane %v591, 5
      %v594 = vor.u32 %v590, %v593
      %v595 = vrot.slane %v594, 4
      %v597 = vshll.u32 %v250, 16
      %v599 = vrot.slane %v597, 5
      %v600 = vsel %vm274, %v595, %v599
      %v601 = vshrl.u32 %v250, 16
      %v603 = vrot.slane %v601, 4
      %v604 = vor.u32 %v603, %v599
      %v605 = vrot.slane %v604, 4
      %v607 = vshll.u32 %v269, 16
      %v609 = vrot.slane %v607, 5
      %v610 = vsel %vm274, %v605, %v609
      %v612 = vshrl.u32 %v251, 16
      %v614 = vrot.slane %v612, 4
      %v615 = vshll.u32 %v251, 16
      %v617 = vrot.slane %v615, 5
      %v618 = vor.u32 %v614, %v617
      %v619 = vrot.slane %v618, 4
      %v621 = vshll.u32 %v252, 16
      %v623 = vrot.slane %v621, 5
      %v624 = vsel %vm274, %v619, %v623
      %v625 = vshrl.u32 %v252, 16
      %v627 = vrot.slane %v625, 4
      %v628 = vor.u32 %v627, %v623
      %v629 = vrot.slane %v628, 4
      %v631 = vshll.u32 %v270, 16
      %v633 = vrot.slane %v631, 5
      %v634 = vsel %vm274, %v629, %v633
      %v636 = vshrl.u32 %v253, 16
      %v638 = vrot.slane %v636, 4
      %v639 = vshll.u32 %v253, 16
      %v641 = vrot.slane %v639, 5
      %v642 = vor.u32 %v638, %v641
      %v643 = vrot.slane %v642, 4
      %v645 = vshll.u32 %v254, 16
      %v647 = vrot.slane %v645, 5
      %v648 = vsel %vm274, %v643, %v647
      %v649 = vshrl.u32 %v254, 16
      %v651 = vrot.slane %v649, 4
      %v652 = vor.u32 %v651, %v647
      %v653 = vrot.slane %v652, 4
      %v655 = vshll.u32 %v271, 16
      %v657 = vrot.slane %v655, 5
      %v658 = vsel %vm274, %v653, %v657
      %s659 = scalar_lea.vmem %s210, 2
      %v660 = vld [vmem:[%s659] sm:$0x3]
      %v661 = vunpack.c.l.b16 %v288
      %v662 = vunpack.c.l.b16 %v298
      %v663 = vunpack.c.l.b16 %v312
      %v664 = vunpack.c.l.b16 %v322
      %v665 = vunpack.c.l.b16 %v336
      %v666 = vunpack.c.l.b16 %v346
      %v667 = vunpack.c.l.b16 %v360
      %v668 = vunpack.c.l.b16 %v370
      %v669 = vunpack.c.l.b16 %v384
      %v670 = vunpack.c.l.b16 %v394
      %v671 = vunpack.c.l.b16 %v408
      %v672 = vunpack.c.l.b16 %v418
      %v673 = vunpack.c.l.b16 %v432
      %v674 = vunpack.c.l.b16 %v442
      %v675 = vunpack.c.l.b16 %v456
      %v676 = vunpack.c.l.b16 %v466
      %v677 = vunpack.c.l.b16 %v480
      %v678 = vunpack.c.l.b16 %v490
      %v679 = vunpack.c.l.b16 %v504
      %v680 = vunpack.c.l.b16 %v514
      %v681 = vunpack.c.l.b16 %v528
      %v682 = vunpack.c.l.b16 %v538
      %v683 = vunpack.c.l.b16 %v552
      %v684 = vunpack.c.l.b16 %v562
      %v685 = vunpack.c.l.b16 %v576
      %v686 = vunpack.c.l.b16 %v586
      %v687 = vunpack.c.l.b16 %v600
      %v688 = vunpack.c.l.b16 %v610
      %v689 = vunpack.c.l.b16 %v624
      %v690 = vunpack.c.l.b16 %v634
      %v691 = vunpack.c.l.b16 %v648
      %v692 = vunpack.c.l.b16 %v658
      %v693 = vpack.c.b16 %v662, %v661
      %v694 = vpack.c.b16 %v664, %v663
      %v695 = vpack.c.b16 %v666, %v665
      %v696 = vpack.c.b16 %v668, %v667
      %v697 = vpack.c.b16 %v670, %v669
      %v698 = vpack.c.b16 %v672, %v671
      %v699 = vpack.c.b16 %v674, %v673
      %v700 = vpack.c.b16 %v676, %v675
      %v701 = vpack.c.b16 %v678, %v677
      %v702 = vpack.c.b16 %v680, %v679
      %v703 = vpack.c.b16 %v682, %v681
      %v704 = vpack.c.b16 %v684, %v683
      %v705 = vpack.c.b16 %v686, %v685
      %v706 = vpack.c.b16 %v688, %v687
      %v707 = vpack.c.b16 %v690, %v689
      %v708 = vpack.c.b16 %v692, %v691
      %vm709 = vcmask 31744
      %v711 = vsel %vm709, %v693, 0
      %v714 = vsel %vm709, %v694, 0
      %v717 = vsel %vm709, %v695, 0
      %v720 = vsel %vm709, %v696, 0
      %v723 = vsel %vm709, %v697, 0
      %v726 = vsel %vm709, %v698, 0
      %v729 = vsel %vm709, %v699, 0
      %v732 = vsel %vm709, %v700, 0
      %v735 = vsel %vm709, %v701, 0
      %v738 = vsel %vm709, %v702, 0
      %v741 = vsel %vm709, %v703, 0
      %v744 = vsel %vm709, %v704, 0
      %v747 = vsel %vm709, %v705, 0
      %v750 = vsel %vm709, %v706, 0
      %v753 = vsel %vm709, %v707, 0
      %v756 = vsel %vm709, %v708, 0
      %vm758 = vcmask 1041408
      %v760 = vsel %vm758, %v660, 0
      %762 = vmatprep.subr.bf16.mxu0 0
      %763 = vmatpush1.bf16.msra.mxu0 %v760
      %764 = vmatprep.subr.bf16.mxu0 0
      %765 = vmatpush1.bf16.msra.mxu0 0
      %766 = vmatprep.subr.bf16.mxu0 0
      %767 = vmatpush1.bf16.msra.mxu0 0
      %768 = vmatprep.subr.bf16.mxu0 0
      %769 = vmatpush1.bf16.msra.mxu0 0
      %770 = vmatprep.subr.bf16.mxu0 0
      %771 = vmatpush1.bf16.msra.mxu0 0
      %772 = vmatprep.subr.bf16.mxu0 0
      %773 = vmatpush1.bf16.msra.mxu0 0
      %774 = vmatprep.subr.bf16.mxu0 0
      %775 = vmatpush1.bf16.msra.mxu0 0
      %776 = vmatprep.subr.bf16.mxu0 0
      %777 = vmatpush1.bf16.msra.mxu0 0
      %778 = vmatprep.subr.bf16.mxu0 0
      %779 = vmatpush1.bf16.msra.mxu0 0
      %780 = vmatprep.subr.bf16.mxu0 0
      %781 = vmatpush1.bf16.msra.mxu0 0
      %782 = vmatprep.subr.bf16.mxu0 0
      %783 = vmatpush1.bf16.msra.mxu0 0
      %784 = vmatprep.subr.bf16.mxu0 0
      %785 = vmatpush1.bf16.msra.mxu0 0
      %786 = vmatprep.subr.bf16.mxu0 0
      %787 = vmatpush1.bf16.msra.mxu0 0
      %788 = vmatprep.subr.bf16.mxu0 0
      %789 = vmatpush1.bf16.msra.mxu0 0
      %790 = vmatprep.subr.bf16.mxu0 0
      %791 = vmatpush1.bf16.msra.mxu0 0
      %792 = vmatprep.subr.bf16.mxu0 0
      %793 = vmatpush1.bf16.msra.mxu0 0
      %794 = vmatprep.mubr.bf16.mxu0 0
      %795 = vmatmul.mubr.bf16.gmra.mrb[0].mxu0 %v711
      %v796 = vpop.f32.mrb[0].mxu0
      %v797 = vadd.f32 0.0, %v796
      %v798 = vpop.f32.mrb[0].mxu0
      %v799 = vpop.f32.mrb[0].mxu0
      %v800 = vadd.f32 0.0, %v799
      %v801 = vpop.f32.mrb[0].mxu0
      %802 = vmatprep.mubr.bf16.mxu0 0
      %803 = vmatmul.mubr.bf16.gmra.mrb[0].mxu0 %v714
      %v804 = vpop.f32.mrb[0].mxu0
      %v805 = vadd.f32 0.0, %v804
      %v806 = vpop.f32.mrb[0].mxu0
      %v807 = vpop.f32.mrb[0].mxu0
      %v808 = vadd.f32 0.0, %v807
      %v809 = vpop.f32.mrb[0].mxu0
      %810 = vmatprep.mubr.bf16.mxu0 0
      %811 = vmatmul.mubr.bf16.gmra.mrb[0].mxu0 %v717
      %v812 = vpop.f32.mrb[0].mxu0
      %v813 = vadd.f32 0.0, %v812
      %v814 = vpop.f32.mrb[0].mxu0
      %v815 = vpop.f32.mrb[0].mxu0
      %v816 = vadd.f32 0.0, %v815
      %v817 = vpop.f32.mrb[0].mxu0
      %818 = vmatprep.mubr.bf16.mxu0 0
      %819 = vmatmul.mubr.bf16.gmra.mrb[0].mxu0 %v720
      %v820 = vpop.f32.mrb[0].mxu0
      %v821 = vadd.f32 0.0, %v820
      %v822 = vpop.f32.mrb[0].mxu0
      %v823 = vpop.f32.mrb[0].mxu0
      %v824 = vadd.f32 0.0, %v823
      %v825 = vpop.f32.mrb[0].mxu0
      %826 = vmatprep.mubr.bf16.mxu0 0
      %827 = vmatmul.mubr.bf16.gmra.mrb[0].mxu0 %v723
      %v828 = vpop.f32.mrb[0].mxu0
      %v829 = vadd.f32 0.0, %v828
      %v830 = vpop.f32.mrb[0].mxu0
      %v831 = vpop.f32.mrb[0].mxu0
      %v832 = vadd.f32 0.0, %v831
      %v833 = vpop.f32.mrb[0].mxu0
      %834 = vmatprep.mubr.bf16.mxu0 0
      %835 = vmatmul.mubr.bf16.gmra.mrb[0].mxu0 %v726
      %v836 = vpop.f32.mrb[0].mxu0
      %v837 = vadd.f32 0.0, %v836
      %v838 = vpop.f32.mrb[0].mxu0
      %v839 = vpop.f32.mrb[0].mxu0
      %v840 = vadd.f32 0.0, %v839
      %v841 = vpop.f32.mrb[0].mxu0
      %842 = vmatprep.mubr.bf16.mxu0 0
      %843 = vmatmul.mubr.bf16.gmra.mrb[0].mxu0 %v729
      %v844 = vpop.f32.mrb[0].mxu0
      %v845 = vadd.f32 0.0, %v844
      %v846 = vpop.f32.mrb[0].mxu0
      %v847 = vpop.f32.mrb[0].mxu0
      %v848 = vadd.f32 0.0, %v847
      %v849 = vpop.f32.mrb[0].mxu0
      %850 = vmatprep.mubr.bf16.mxu0 0
      %851 = vmatmul.mubr.bf16.gmra.mrb[0].mxu0 %v732
      %v852 = vpop.f32.mrb[0].mxu0
      %v853 = vadd.f32 0.0, %v852
      %v854 = vpop.f32.mrb[0].mxu0
      %v855 = vpop.f32.mrb[0].mxu0
      %v856 = vadd.f32 0.0, %v855
      %v857 = vpop.f32.mrb[0].mxu0
      %858 = vmatprep.mubr.bf16.mxu0 0
      %859 = vmatmul.mubr.bf16.gmra.mrb[0].mxu0 %v735
      %v860 = vpop.f32.mrb[0].mxu0
      %v861 = vadd.f32 0.0, %v860
      %v862 = vpop.f32.mrb[0].mxu0
      %v863 = vpop.f32.mrb[0].mxu0
      %v864 = vadd.f32 0.0, %v863
      %v865 = vpop.f32.mrb[0].mxu0
      %866 = vmatprep.mubr.bf16.mxu0 0
      %867 = vmatmul.mubr.bf16.gmra.mrb[0].mxu0 %v738
      %v868 = vpop.f32.mrb[0].mxu0
      %v869 = vadd.f32 0.0, %v868
      %v870 = vpop.f32.mrb[0].mxu0
      %v871 = vpop.f32.mrb[0].mxu0
      %v872 = vadd.f32 0.0, %v871
      %v873 = vpop.f32.mrb[0].mxu0
      %874 = vmatprep.mubr.bf16.mxu0 0
      %875 = vmatmul.mubr.bf16.gmra.mrb[0].mxu0 %v741
      %v876 = vpop.f32.mrb[0].mxu0
      %v877 = vadd.f32 0.0, %v876
      %v878 = vpop.f32.mrb[0].mxu0
      %v879 = vpop.f32.mrb[0].mxu0
      %v880 = vadd.f32 0.0, %v879
      %v881 = vpop.f32.mrb[0].mxu0
      %882 = vmatprep.mubr.bf16.mxu0 0
      %883 = vmatmul.mubr.bf16.gmra.mrb[0].mxu0 %v744
      %v884 = vpop.f32.mrb[0].mxu0
      %v885 = vadd.f32 0.0, %v884
      %v886 = vpop.f32.mrb[0].mxu0
      %v887 = vpop.f32.mrb[0].mxu0
      %v888 = vadd.f32 0.0, %v887
      %v889 = vpop.f32.mrb[0].mxu0
      %890 = vmatprep.mubr.bf16.mxu0 0
      %891 = vmatmul.mubr.bf16.gmra.mrb[0].mxu0 %v747
      %v892 = vpop.f32.mrb[0].mxu0
      %v893 = vadd.f32 0.0, %v892
      %v894 = vpop.f32.mrb[0].mxu0
      %v895 = vpop.f32.mrb[0].mxu0
      %v896 = vadd.f32 0.0, %v895
      %v897 = vpop.f32.mrb[0].mxu0
      %898 = vmatprep.mubr.bf16.mxu0 0
      %899 = vmatmul.mubr.bf16.gmra.mrb[0].mxu0 %v750
      %v900 = vpop.f32.mrb[0].mxu0
      %v901 = vadd.f32 0.0, %v900
      %v902 = vpop.f32.mrb[0].mxu0
      %v903 = vpop.f32.mrb[0].mxu0
      %v904 = vadd.f32 0.0, %v903
      %v905 = vpop.f32.mrb[0].mxu0
      %906 = vmatprep.mubr.bf16.mxu0 0
      %907 = vmatmul.mubr.bf16.gmra.mrb[0].mxu0 %v753
      %v908 = vpop.f32.mrb[0].mxu0
      %v909 = vadd.f32 0.0, %v908
      %v910 = vpop.f32.mrb[0].mxu0
      %v911 = vpop.f32.mrb[0].mxu0
      %v912 = vadd.f32 0.0, %v911
      %v913 = vpop.f32.mrb[0].mxu0
      %914 = vmatprep.mubr.bf16.mxu0 0
      %915 = vmatmul.mubr.bf16.gmra.mrb[0].mxu0 %v756
      %v916 = vpop.f32.mrb[0].mxu0
      %v917 = vadd.f32 0.0, %v916
      %v918 = vpop.f32.mrb[0].mxu0
      %v919 = vpop.f32.mrb[0].mxu0
      %v920 = vadd.f32 0.0, %v919
      %v921 = vpop.f32.mrb[0].mxu0
      %922 = vdwg.mxu0
      %v955 = vunpack.c.l.b16 %v223
      %v956 = vunpack.c.l.b16 %v224
      %v957 = vunpack.c.l.b16 %v225
      %v958 = vunpack.c.l.b16 %v226
      %v959 = vunpack.c.l.b16 %v227
      %v960 = vunpack.c.l.b16 %v228
      %v961 = vunpack.c.l.b16 %v229
      %v962 = vunpack.c.l.b16 %v230
      %v963 = vunpack.c.l.b16 %v231
      %v964 = vunpack.c.l.b16 %v232
      %v965 = vunpack.c.l.b16 %v233
      %v966 = vunpack.c.l.b16 %v234
      %v967 = vunpack.c.l.b16 %v235
      %v968 = vunpack.c.l.b16 %v236
      %v969 = vunpack.c.l.b16 %v237
      %v970 = vunpack.c.l.b16 %v238
      %v971 = vunpack.c.l.b16 %v239
      %v972 = vunpack.c.l.b16 %v240
      %v973 = vunpack.c.l.b16 %v241
      %v974 = vunpack.c.l.b16 %v242
      %v975 = vunpack.c.l.b16 %v243
      %v976 = vunpack.c.l.b16 %v244
      %v977 = vunpack.c.l.b16 %v245
      %v978 = vunpack.c.l.b16 %v246
      %v979 = vunpack.c.l.b16 %v247
      %v980 = vunpack.c.l.b16 %v248
      %v981 = vunpack.c.l.b16 %v249
      %v982 = vunpack.c.l.b16 %v250
      %v983 = vunpack.c.l.b16 %v251
      %v984 = vunpack.c.l.b16 %v252
      %v985 = vunpack.c.l.b16 %v253
      %v986 = vunpack.c.l.b16 %v254
      %v987 = vpack.c.b16 %v956, %v955
      %v988 = vpack.c.b16 %v958, %v957
      %v989 = vpack.c.b16 %v960, %v959
      %v990 = vpack.c.b16 %v962, %v961
      %v991 = vpack.c.b16 %v964, %v963
      %v992 = vpack.c.b16 %v966, %v965
      %v993 = vpack.c.b16 %v968, %v967
      %v994 = vpack.c.b16 %v970, %v969
      %v995 = vpack.c.b16 %v972, %v971
      %v996 = vpack.c.b16 %v974, %v973
      %v997 = vpack.c.b16 %v976, %v975
      %v998 = vpack.c.b16 %v978, %v977
      %v999 = vpack.c.b16 %v980, %v979
      %v1000 = vpack.c.b16 %v982, %v981
      %v1001 = vpack.c.b16 %v984, %v983
      %v1002 = vpack.c.b16 %v986, %v985
      %v1004 = vsel %vm709, %v987, 0
      %v1007 = vsel %vm709, %v988, 0
      %v1010 = vsel %vm709, %v989, 0
      %v1013 = vsel %vm709, %v990, 0
      %v1016 = vsel %vm709, %v991, 0
      %v1019 = vsel %vm709, %v992, 0
      %v1022 = vsel %vm709, %v993, 0
      %v1025 = vsel %vm709, %v994, 0
      %v1028 = vsel %vm709, %v995, 0
      %v1031 = vsel %vm709, %v996, 0
      %v1034 = vsel %vm709, %v997, 0
      %v1037 = vsel %vm709, %v998, 0
      %v1040 = vsel %vm709, %v999, 0
      %v1043 = vsel %vm709, %v1000, 0
      %v1046 = vsel %vm709, %v1001, 0
      %v1049 = vsel %vm709, %v1002, 0
      %v1052 = vsel %vm758, %v255, 0
      %1054 = vmatprep.subr.bf16.mxu0 0
      %1055 = vmatpush1.bf16.msra.mxu0 %v1052
      %1056 = vmatprep.subr.bf16.mxu0 0
      %1057 = vmatpush1.bf16.msra.mxu0 0
      %1058 = vmatprep.subr.bf16.mxu0 0
      %1059 = vmatpush1.bf16.msra.mxu0 0
      %1060 = vmatprep.subr.bf16.mxu0 0
      %1061 = vmatpush1.bf16.msra.mxu0 0
      %1062 = vmatprep.subr.bf16.mxu0 0
      %1063 = vmatpush1.bf16.msra.mxu0 0
      %1064 = vmatprep.subr.bf16.mxu0 0
      %1065 = vmatpush1.bf16.msra.mxu0 0
      %1066 = vmatprep.subr.bf16.mxu0 0
      %1067 = vmatpush1.bf16.msra.mxu0 0
      %1068 = vmatprep.subr.bf16.mxu0 0
      %1069 = vmatpush1.bf16.msra.mxu0 0
      %1070 = vmatprep.subr.bf16.mxu0 0
      %1071 = vmatpush1.bf16.msra.mxu0 0
      %1072 = vmatprep.subr.bf16.mxu0 0
      %1073 = vmatpush1.bf16.msra.mxu0 0
      %1074 = vmatprep.subr.bf16.mxu0 0
      %1075 = vmatpush1.bf16.msra.mxu0 0
      %1076 = vmatprep.subr.bf16.mxu0 0
      %1077 = vmatpush1.bf16.msra.mxu0 0
      %1078 = vmatprep.subr.bf16.mxu0 0
      %1079 = vmatpush1.bf16.msra.mxu0 0
      %1080 = vmatprep.subr.bf16.mxu0 0
      %1081 = vmatpush1.bf16.msra.mxu0 0
      %1082 = vmatprep.subr.bf16.mxu0 0
      %1083 = vmatpush1.bf16.msra.mxu0 0
      %1084 = vmatprep.subr.bf16.mxu0 0
      %1085 = vmatpush1.bf16.msra.mxu0 0
      %1086 = vmatprep.mubr.bf16.mxu0 0
      %1087 = vmatmul.mubr.bf16.gmra.mrb[0].mxu0 %v1004
      %v1088 = vpop.f32.mrb[0].mxu0
      %v1089 = vadd.f32 %v797, %v1088
      %v1090 = vpop.f32.mrb[0].mxu0
      %v1091 = vpop.f32.mrb[0].mxu0
      %v1092 = vadd.f32 %v800, %v1091
      %v1093 = vpop.f32.mrb[0].mxu0
      %1094 = vmatprep.mubr.bf16.mxu0 0
      %1095 = vmatmul.mubr.bf16.gmra.mrb[0].mxu0 %v1007
      %v1096 = vpop.f32.mrb[0].mxu0
      %v1097 = vadd.f32 %v805, %v1096
      %v1098 = vpop.f32.mrb[0].mxu0
      %v1099 = vpop.f32.mrb[0].mxu0
      %v1100 = vadd.f32 %v808, %v1099
      %v1101 = vpop.f32.mrb[0].mxu0
      %1102 = vmatprep.mubr.bf16.mxu0 0
      %1103 = vmatmul.mubr.bf16.gmra.mrb[0].mxu0 %v1010
      %v1104 = vpop.f32.mrb[0].mxu0
      %v1105 = vadd.f32 %v813, %v1104
      %v1106 = vpop.f32.mrb[0].mxu0
      %v1107 = vpop.f32.mrb[0].mxu0
      %v1108 = vadd.f32 %v816, %v1107
      %v1109 = vpop.f32.mrb[0].mxu0
      %1110 = vmatprep.mubr.bf16.mxu0 0
      %1111 = vmatmul.mubr.bf16.gmra.mrb[0].mxu0 %v1013
      %v1112 = vpop.f32.mrb[0].mxu0
      %v1113 = vadd.f32 %v821, %v1112
      %v1114 = vpop.f32.mrb[0].mxu0
      %v1115 = vpop.f32.mrb[0].mxu0
      %v1116 = vadd.f32 %v824, %v1115
      %v1117 = vpop.f32.mrb[0].mxu0
      %1118 = vmatprep.mubr.bf16.mxu0 0
      %1119 = vmatmul.mubr.bf16.gmra.mrb[0].mxu0 %v1016
      %v1120 = vpop.f32.mrb[0].mxu0
      %v1121 = vadd.f32 %v829, %v1120
      %v1122 = vpop.f32.mrb[0].mxu0
      %v1123 = vpop.f32.mrb[0].mxu0
      %v1124 = vadd.f32 %v832, %v1123
      %v1125 = vpop.f32.mrb[0].mxu0
      %1126 = vmatprep.mubr.bf16.mxu0 0
      %1127 = vmatmul.mubr.bf16.gmra.mrb[0].mxu0 %v1019
      %v1128 = vpop.f32.mrb[0].mxu0
      %v1129 = vadd.f32 %v837, %v1128
      %v1130 = vpop.f32.mrb[0].mxu0
      %v1131 = vpop.f32.mrb[0].mxu0
      %v1132 = vadd.f32 %v840, %v1131
      %v1133 = vpop.f32.mrb[0].mxu0
      %1134 = vmatprep.mubr.bf16.mxu0 0
      %1135 = vmatmul.mubr.bf16.gmra.mrb[0].mxu0 %v1022
      %v1136 = vpop.f32.mrb[0].mxu0
      %v1137 = vadd.f32 %v845, %v1136
      %v1138 = vpop.f32.mrb[0].mxu0
      %v1139 = vpop.f32.mrb[0].mxu0
      %v1140 = vadd.f32 %v848, %v1139
      %v1141 = vpop.f32.mrb[0].mxu0
      %1142 = vmatprep.mubr.bf16.mxu0 0
      %1143 = vmatmul.mubr.bf16.gmra.mrb[0].mxu0 %v1025
      %v1144 = vpop.f32.mrb[0].mxu0
      %v1145 = vadd.f32 %v853, %v1144
      %v1146 = vpop.f32.mrb[0].mxu0
      %v1147 = vpop.f32.mrb[0].mxu0
      %v1148 = vadd.f32 %v856, %v1147
      %v1149 = vpop.f32.mrb[0].mxu0
      %1150 = vmatprep.mubr.bf16.mxu0 0
      %1151 = vmatmul.mubr.bf16.gmra.mrb[0].mxu0 %v1028
      %v1152 = vpop.f32.mrb[0].mxu0
      %v1153 = vadd.f32 %v861, %v1152
      %v1154 = vpop.f32.mrb[0].mxu0
      %v1155 = vpop.f32.mrb[0].mxu0
      %v1156 = vadd.f32 %v864, %v1155
      %v1157 = vpop.f32.mrb[0].mxu0
      %1158 = vmatprep.mubr.bf16.mxu0 0
      %1159 = vmatmul.mubr.bf16.gmra.mrb[0].mxu0 %v1031
      %v1160 = vpop.f32.mrb[0].mxu0
      %v1161 = vadd.f32 %v869, %v1160
      %v1162 = vpop.f32.mrb[0].mxu0
      %v1163 = vpop.f32.mrb[0].mxu0
      %v1164 = vadd.f32 %v872, %v1163
      %v1165 = vpop.f32.mrb[0].mxu0
      %1166 = vmatprep.mubr.bf16.mxu0 0
      %1167 = vmatmul.mubr.bf16.gmra.mrb[0].mxu0 %v1034
      %v1168 = vpop.f32.mrb[0].mxu0
      %v1169 = vadd.f32 %v877, %v1168
      %v1170 = vpop.f32.mrb[0].mxu0
      %v1171 = vpop.f32.mrb[0].mxu0
      %v1172 = vadd.f32 %v880, %v1171
      %v1173 = vpop.f32.mrb[0].mxu0
      %1174 = vmatprep.mubr.bf16.mxu0 0
      %1175 = vmatmul.mubr.bf16.gmra.mrb[0].mxu0 %v1037
      %v1176 = vpop.f32.mrb[0].mxu0
      %v1177 = vadd.f32 %v885, %v1176
      %v1178 = vpop.f32.mrb[0].mxu0
      %v1179 = vpop.f32.mrb[0].mxu0
      %v1180 = vadd.f32 %v888, %v1179
      %v1181 = vpop.f32.mrb[0].mxu0
      %1182 = vmatprep.mubr.bf16.mxu0 0
      %1183 = vmatmul.mubr.bf16.gmra.mrb[0].mxu0 %v1040
      %v1184 = vpop.f32.mrb[0].mxu0
      %v1185 = vadd.f32 %v893, %v1184
      %v1186 = vpop.f32.mrb[0].mxu0
      %v1187 = vpop.f32.mrb[0].mxu0
      %v1188 = vadd.f32 %v896, %v1187
      %v1189 = vpop.f32.mrb[0].mxu0
      %1190 = vmatprep.mubr.bf16.mxu0 0
      %1191 = vmatmul.mubr.bf16.gmra.mrb[0].mxu0 %v1043
      %v1192 = vpop.f32.mrb[0].mxu0
      %v1193 = vadd.f32 %v901, %v1192
      %v1194 = vpop.f32.mrb[0].mxu0
      %v1195 = vpop.f32.mrb[0].mxu0
      %v1196 = vadd.f32 %v904, %v1195
      %v1197 = vpop.f32.mrb[0].mxu0
      %1198 = vmatprep.mubr.bf16.mxu0 0
      %1199 = vmatmul.mubr.bf16.gmra.mrb[0].mxu0 %v1046
      %v1200 = vpop.f32.mrb[0].mxu0
      %v1201 = vadd.f32 %v909, %v1200
      %v1202 = vpop.f32.mrb[0].mxu0
      %v1203 = vpop.f32.mrb[0].mxu0
      %v1204 = vadd.f32 %v912, %v1203
      %v1205 = vpop.f32.mrb[0].mxu0
      %1206 = vmatprep.mubr.bf16.mxu0 0
      %1207 = vmatmul.mubr.bf16.gmra.mrb[0].mxu0 %v1049
      %v1208 = vpop.f32.mrb[0].mxu0
      %v1209 = vadd.f32 %v917, %v1208
      %v1210 = vpop.f32.mrb[0].mxu0
      %v1211 = vpop.f32.mrb[0].mxu0
      %v1212 = vadd.f32 %v920, %v1211
      %v1213 = vpop.f32.mrb[0].mxu0
      %1214 = vdwg.mxu0
      %v1215 = vld [vmem:[%s206] sm:$0xe]
      %v1216 = vld [vmem:[%s206 + $0xc] sm:$0xe]
      %v1217 = vld [vmem:[%s206 + $0x18] sm:$0xe]
      %v1218 = vld [vmem:[%s206 + $0x24] sm:$0xe]
      %v1219 = vld [vmem:[%s206 + $0x30] sm:$0xe]
      %v1220 = vld [vmem:[%s206 + $0x3c] sm:$0xe]
      %v1221 = vld [vmem:[%s206 + $0x48] sm:$0xe]
      %v1222 = vld [vmem:[%s206 + $0x54] sm:$0xe]
      %v1223 = vld [vmem:[%s206 + $0x60] sm:$0xe]
      %v1224 = vld [vmem:[%s206 + $0x6c] sm:$0xe]
      %v1225 = vld [vmem:[%s206 + $0x78] sm:$0xe]
      %v1226 = vld [vmem:[%s206 + $0x84] sm:$0xe]
      %v1227 = vld [vmem:[%s206 + $0x90] sm:$0xe]
      %v1228 = vld [vmem:[%s206 + $0x9c] sm:$0xe]
      %v1229 = vld [vmem:[%s206 + $0xa8] sm:$0xe]
      %v1230 = vld [vmem:[%s206 + $0xb4] sm:$0xe]
      %vm1263 = vcmask 1042432
      %vm1264 = vcmask 1046532
      %vm1265 = vmor %vm1263, %vm1264
      %v1266 = vrot.slane %v1215, 5
      %v1267 = vrot.slane %v1266, 4
      %v1268 = vrot.slane %v224, 5
      %v1269 = vsel %vm1265, %v1267, %v1268
      %v1270 = vrot.slane %v1268, 4
      %v1271 = vrot.slane %v256, 5
      %v1272 = vsel %vm1265, %v1270, %v1271
      %v1273 = vrot.slane %v1216, 5
      %v1274 = vrot.slane %v1273, 4
      %v1275 = vrot.slane %v226, 5
      %v1276 = vsel %vm1265, %v1274, %v1275
      %v1277 = vrot.slane %v1275, 4
      %v1278 = vrot.slane %v257, 5
      %v1279 = vsel %vm1265, %v1277, %v1278
      %v1280 = vrot.slane %v1217, 5
      %v1281 = vrot.slane %v1280, 4
      %v1282 = vrot.slane %v228, 5
      %v1283 = vsel %vm1265, %v1281, %v1282
      %v1284 = vrot.slane %v1282, 4
      %v1285 = vrot.slane %v258, 5
      %v1286 = vsel %vm1265, %v1284, %v1285
      %v1287 = vrot.slane %v1218, 5
      %v1288 = vrot.slane %v1287, 4
      %v1289 = vrot.slane %v230, 5
      %v1290 = vsel %vm1265, %v1288, %v1289
      %v1291 = vrot.slane %v1289, 4
      %v1292 = vrot.slane %v259, 5
      %v1293 = vsel %vm1265, %v1291, %v1292
      %v1294 = vrot.slane %v1219, 5
      %v1295 = vrot.slane %v1294, 4
      %v1296 = vrot.slane %v232, 5
      %v1297 = vsel %vm1265, %v1295, %v1296
      %v1298 = vrot.slane %v1296, 4
      %v1299 = vrot.slane %v260, 5
      %v1300 = vsel %vm1265, %v1298, %v1299
      %v1301 = vrot.slane %v1220, 5
      %v1302 = vrot.slane %v1301, 4
      %v1303 = vrot.slane %v234, 5
      %v1304 = vsel %vm1265, %v1302, %v1303
      %v1305 = vrot.slane %v1303, 4
      %v1306 = vrot.slane %v261, 5
      %v1307 = vsel %vm1265, %v1305, %v1306
      %v1308 = vrot.slane %v1221, 5
      %v1309 = vrot.slane %v1308, 4
      %v1310 = vrot.slane %v236, 5
      %v1311 = vsel %vm1265, %v1309, %v1310
      %v1312 = vrot.slane %v1310, 4
      %v1313 = vrot.slane %v262, 5
      %v1314 = vsel %vm1265, %v1312, %v1313
      %v1315 = vrot.slane %v1222, 5
      %v1316 = vrot.slane %v1315, 4
      %v1317 = vrot.slane %v238, 5
      %v1318 = vsel %vm1265, %v1316, %v1317
      %v1319 = vrot.slane %v1317, 4
      %v1320 = vrot.slane %v263, 5
      %v1321 = vsel %vm1265, %v1319, %v1320
      %v1322 = vrot.slane %v1223, 5
      %v1323 = vrot.slane %v1322, 4
      %v1324 = vrot.slane %v240, 5
      %v1325 = vsel %vm1265, %v1323, %v1324
      %v1326 = vrot.slane %v1324, 4
      %v1327 = vrot.slane %v264, 5
      %v1328 = vsel %vm1265, %v1326, %v1327
      %v1329 = vrot.slane %v1224, 5
      %v1330 = vrot.slane %v1329, 4
      %v1331 = vrot.slane %v242, 5
      %v1332 = vsel %vm1265, %v1330, %v1331
      %v1333 = vrot.slane %v1331, 4
      %v1334 = vrot.slane %v265, 5
      %v1335 = vsel %vm1265, %v1333, %v1334
      %v1336 = vrot.slane %v1225, 5
      %v1337 = vrot.slane %v1336, 4
      %v1338 = vrot.slane %v244, 5
      %v1339 = vsel %vm1265, %v1337, %v1338
      %v1340 = vrot.slane %v1338, 4
      %v1341 = vrot.slane %v266, 5
      %v1342 = vsel %vm1265, %v1340, %v1341
      %v1343 = vrot.slane %v1226, 5
      %v1344 = vrot.slane %v1343, 4
      %v1345 = vrot.slane %v246, 5
      %v1346 = vsel %vm1265, %v1344, %v1345
      %v1347 = vrot.slane %v1345, 4
      %v1348 = vrot.slane %v267, 5
      %v1349 = vsel %vm1265, %v1347, %v1348
      %v1350 = vrot.slane %v1227, 5
      %v1351 = vrot.slane %v1350, 4
      %v1352 = vrot.slane %v248, 5
      %v1353 = vsel %vm1265, %v1351, %v1352
      %v1354 = vrot.slane %v1352, 4
      %v1355 = vrot.slane %v268, 5
      %v1356 = vsel %vm1265, %v1354, %v1355
      %v1357 = vrot.slane %v1228, 5
      %v1358 = vrot.slane %v1357, 4
      %v1359 = vrot.slane %v250, 5
      %v1360 = vsel %vm1265, %v1358, %v1359
      %v1361 = vrot.slane %v1359, 4
      %v1362 = vrot.slane %v269, 5
      %v1363 = vsel %vm1265, %v1361, %v1362
      %v1364 = vrot.slane %v1229, 5
      %v1365 = vrot.slane %v1364, 4
      %v1366 = vrot.slane %v252, 5
      %v1367 = vsel %vm1265, %v1365, %v1366
      %v1368 = vrot.slane %v1366, 4
      %v1369 = vrot.slane %v270, 5
      %v1370 = vsel %vm1265, %v1368, %v1369
      %v1371 = vrot.slane %v1230, 5
      %v1372 = vrot.slane %v1371, 4
      %v1373 = vrot.slane %v254, 5
      %v1374 = vsel %vm1265, %v1372, %v1373
      %v1375 = vrot.slane %v1373, 4
      %v1376 = vrot.slane %v271, 5
      %v1377 = vsel %vm1265, %v1375, %v1376
      %s1378 = scalar_lea.vmem %s210, 4
      %v1379 = vld [vmem:[%s1378] sm:$0x3]
      %v1380 = vunpack.c.l.b16 %v1269
      %v1381 = vunpack.c.l.b16 %v1272
      %v1382 = vunpack.c.l.b16 %v1276
      %v1383 = vunpack.c.l.b16 %v1279
      %v1384 = vunpack.c.l.b16 %v1283
      %v1385 = vunpack.c.l.b16 %v1286
      %v1386 = vunpack.c.l.b16 %v1290
      %v1387 = vunpack.c.l.b16 %v1293
      %v1388 = vunpack.c.l.b16 %v1297
      %v1389 = vunpack.c.l.b16 %v1300
      %v1390 = vunpack.c.l.b16 %v1304
      %v1391 = vunpack.c.l.b16 %v1307
      %v1392 = vunpack.c.l.b16 %v1311
      %v1393 = vunpack.c.l.b16 %v1314
      %v1394 = vunpack.c.l.b16 %v1318
      %v1395 = vunpack.c.l.b16 %v1321
      %v1396 = vunpack.c.l.b16 %v1325
      %v1397 = vunpack.c.l.b16 %v1328
      %v1398 = vunpack.c.l.b16 %v1332
      %v1399 = vunpack.c.l.b16 %v1335
      %v1400 = vunpack.c.l.b16 %v1339
      %v1401 = vunpack.c.l.b16 %v1342
      %v1402 = vunpack.c.l.b16 %v1346
      %v1403 = vunpack.c.l.b16 %v1349
      %v1404 = vunpack.c.l.b16 %v1353
      %v1405 = vunpack.c.l.b16 %v1356
      %v1406 = vunpack.c.l.b16 %v1360
      %v1407 = vunpack.c.l.b16 %v1363
      %v1408 = vunpack.c.l.b16 %v1367
      %v1409 = vunpack.c.l.b16 %v1370
      %v1410 = vunpack.c.l.b16 %v1374
      %v1411 = vunpack.c.l.b16 %v1377
      %v1412 = vpack.c.b16 %v1381, %v1380
      %v1413 = vpack.c.b16 %v1383, %v1382
      %v1414 = vpack.c.b16 %v1385, %v1384
      %v1415 = vpack.c.b16 %v1387, %v1386
      %v1416 = vpack.c.b16 %v1389, %v1388
      %v1417 = vpack.c.b16 %v1391, %v1390
      %v1418 = vpack.c.b16 %v1393, %v1392
      %v1419 = vpack.c.b16 %v1395, %v1394
      %v1420 = vpack.c.b16 %v1397, %v1396
      %v1421 = vpack.c.b16 %v1399, %v1398
      %v1422 = vpack.c.b16 %v1401, %v1400
      %v1423 = vpack.c.b16 %v1403, %v1402
      %v1424 = vpack.c.b16 %v1405, %v1404
      %v1425 = vpack.c.b16 %v1407, %v1406
      %v1426 = vpack.c.b16 %v1409, %v1408
      %v1427 = vpack.c.b16 %v1411, %v1410
      %v1429 = vsel %vm709, %v1412, 0
      %v1432 = vsel %vm709, %v1413, 0
      %v1435 = vsel %vm709, %v1414, 0
      %v1438 = vsel %vm709, %v1415, 0
      %v1441 = vsel %vm709, %v1416, 0
      %v1444 = vsel %vm709, %v1417, 0
      %v1447 = vsel %vm709, %v1418, 0
      %v1450 = vsel %vm709, %v1419, 0
      %v1453 = vsel %vm709, %v1420, 0
      %v1456 = vsel %vm709, %v1421, 0
      %v1459 = vsel %vm709, %v1422, 0
      %v1462 = vsel %vm709, %v1423, 0
      %v1465 = vsel %vm709, %v1424, 0
      %v1468 = vsel %vm709, %v1425, 0
      %v1471 = vsel %vm709, %v1426, 0
      %v1474 = vsel %vm709, %v1427, 0
      %v1477 = vsel %vm758, %v1379, 0
      %1479 = vmatprep.subr.bf16.mxu0 0
      %1480 = vmatpush1.bf16.msra.mxu0 %v1477
      %1481 = vmatprep.subr.bf16.mxu0 0
      %1482 = vmatpush1.bf16.msra.mxu0 0
      %1483 = vmatprep.subr.bf16.mxu0 0
      %1484 = vmatpush1.bf16.msra.mxu0 0
      %1485 = vmatprep.subr.bf16.mxu0 0
      %1486 = vmatpush1.bf16.msra.mxu0 0
      %1487 = vmatprep.subr.bf16.mxu0 0
      %1488 = vmatpush1.bf16.msra.mxu0 0
      %1489 = vmatprep.subr.bf16.mxu0 0
      %1490 = vmatpush1.bf16.msra.mxu0 0
      %1491 = vmatprep.subr.bf16.mxu0 0
      %1492 = vmatpush1.bf16.msra.mxu0 0
      %1493 = vmatprep.subr.bf16.mxu0 0
      %1494 = vmatpush1.bf16.msra.mxu0 0
      %1495 = vmatprep.subr.bf16.mxu0 0
      %1496 = vmatpush1.bf16.msra.mxu0 0
      %1497 = vmatprep.subr.bf16.mxu0 0
      %1498 = vmatpush1.bf16.msra.mxu0 0
      %1499 = vmatprep.subr.bf16.mxu0 0
      %1500 = vmatpush1.bf16.msra.mxu0 0
      %1501 = vmatprep.subr.bf16.mxu0 0
      %1502 = vmatpush1.bf16.msra.mxu0 0
      %1503 = vmatprep.subr.bf16.mxu0 0
      %1504 = vmatpush1.bf16.msra.mxu0 0
      %1505 = vmatprep.subr.bf16.mxu0 0
      %1506 = vmatpush1.bf16.msra.mxu0 0
      %1507 = vmatprep.subr.bf16.mxu0 0
      %1508 = vmatpush1.bf16.msra.mxu0 0
      %1509 = vmatprep.subr.bf16.mxu0 0
      %1510 = vmatpush1.bf16.msra.mxu0 0
      %1511 = vmatprep.mubr.bf16.mxu0 0
      %1512 = vmatmul.mubr.bf16.gmra.mrb[0].mxu0 %v1429
      %v1513 = vpop.f32.mrb[0].mxu0
      %v1514 = vadd.f32 0.0, %v1513
      %v1515 = vpop.f32.mrb[0].mxu0
      %v1516 = vpop.f32.mrb[0].mxu0
      %v1517 = vadd.f32 0.0, %v1516
      %v1518 = vpop.f32.mrb[0].mxu0
      %1519 = vmatprep.mubr.bf16.mxu0 0
      %1520 = vmatmul.mubr.bf16.gmra.mrb[0].mxu0 %v1432
      %v1521 = vpop.f32.mrb[0].mxu0
      %v1522 = vadd.f32 0.0, %v1521
      %v1523 = vpop.f32.mrb[0].mxu0
      %v1524 = vpop.f32.mrb[0].mxu0
      %v1525 = vadd.f32 0.0, %v1524
      %v1526 = vpop.f32.mrb[0].mxu0
      %1527 = vmatprep.mubr.bf16.mxu0 0
      %1528 = vmatmul.mubr.bf16.gmra.mrb[0].mxu0 %v1435
      %v1529 = vpop.f32.mrb[0].mxu0
      %v1530 = vadd.f32 0.0, %v1529
      %v1531 = vpop.f32.mrb[0].mxu0
      %v1532 = vpop.f32.mrb[0].mxu0
      %v1533 = vadd.f32 0.0, %v1532
      %v1534 = vpop.f32.mrb[0].mxu0
      %1535 = vmatprep.mubr.bf16.mxu0 0
      %1536 = vmatmul.mubr.bf16.gmra.mrb[0].mxu0 %v1438
      %v1537 = vpop.f32.mrb[0].mxu0
      %v1538 = vadd.f32 0.0, %v1537
      %v1539 = vpop.f32.mrb[0].mxu0
      %v1540 = vpop.f32.mrb[0].mxu0
      %v1541 = vadd.f32 0.0, %v1540
      %v1542 = vpop.f32.mrb[0].mxu0
      %1543 = vmatprep.mubr.bf16.mxu0 0
      %1544 = vmatmul.mubr.bf16.gmra.mrb[0].mxu0 %v1441
      %v1545 = vpop.f32.mrb[0].mxu0
      %v1546 = vadd.f32 0.0, %v1545
      %v1547 = vpop.f32.mrb[0].mxu0
      %v1548 = vpop.f32.mrb[0].mxu0
      %v1549 = vadd.f32 0.0, %v1548
      %v1550 = vpop.f32.mrb[0].mxu0
      %1551 = vmatprep.mubr.bf16.mxu0 0
      %1552 = vmatmul.mubr.bf16.gmra.mrb[0].mxu0 %v1444
      %v1553 = vpop.f32.mrb[0].mxu0
      %v1554 = vadd.f32 0.0, %v1553
      %v1555 = vpop.f32.mrb[0].mxu0
      %v1556 = vpop.f32.mrb[0].mxu0
      %v1557 = vadd.f32 0.0, %v1556
      %v1558 = vpop.f32.mrb[0].mxu0
      %1559 = vmatprep.mubr.bf16.mxu0 0
      %1560 = vmatmul.mubr.bf16.gmra.mrb[0].mxu0 %v1447
      %v1561 = vpop.f32.mrb[0].mxu0
      %v1562 = vadd.f32 0.0, %v1561
      %v1563 = vpop.f32.mrb[0].mxu0
      %v1564 = vpop.f32.mrb[0].mxu0
      %v1565 = vadd.f32 0.0, %v1564
      %v1566 = vpop.f32.mrb[0].mxu0
      %1567 = vmatprep.mubr.bf16.mxu0 0
      %1568 = vmatmul.mubr.bf16.gmra.mrb[0].mxu0 %v1450
      %v1569 = vpop.f32.mrb[0].mxu0
      %v1570 = vadd.f32 0.0, %v1569
      %v1571 = vpop.f32.mrb[0].mxu0
      %v1572 = vpop.f32.mrb[0].mxu0
      %v1573 = vadd.f32 0.0, %v1572
      %v1574 = vpop.f32.mrb[0].mxu0
      %1575 = vmatprep.mubr.bf16.mxu0 0
      %1576 = vmatmul.mubr.bf16.gmra.mrb[0].mxu0 %v1453
      %v1577 = vpop.f32.mrb[0].mxu0
      %v1578 = vadd.f32 0.0, %v1577
      %v1579 = vpop.f32.mrb[0].mxu0
      %v1580 = vpop.f32.mrb[0].mxu0
      %v1581 = vadd.f32 0.0, %v1580
      %v1582 = vpop.f32.mrb[0].mxu0
      %1583 = vmatprep.mubr.bf16.mxu0 0
      %1584 = vmatmul.mubr.bf16.gmra.mrb[0].mxu0 %v1456
      %v1585 = vpop.f32.mrb[0].mxu0
      %v1586 = vadd.f32 0.0, %v1585
      %v1587 = vpop.f32.mrb[0].mxu0
      %v1588 = vpop.f32.mrb[0].mxu0
      %v1589 = vadd.f32 0.0, %v1588
      %v1590 = vpop.f32.mrb[0].mxu0
      %1591 = vmatprep.mubr.bf16.mxu0 0
      %1592 = vmatmul.mubr.bf16.gmra.mrb[0].mxu0 %v1459
      %v1593 = vpop.f32.mrb[0].mxu0
      %v1594 = vadd.f32 0.0, %v1593
      %v1595 = vpop.f32.mrb[0].mxu0
      %v1596 = vpop.f32.mrb[0].mxu0
      %v1597 = vadd.f32 0.0, %v1596
      %v1598 = vpop.f32.mrb[0].mxu0
      %1599 = vmatprep.mubr.bf16.mxu0 0
      %1600 = vmatmul.mubr.bf16.gmra.mrb[0].mxu0 %v1462
      %v1601 = vpop.f32.mrb[0].mxu0
      %v1602 = vadd.f32 0.0, %v1601
      %v1603 = vpop.f32.mrb[0].mxu0
      %v1604 = vpop.f32.mrb[0].mxu0
      %v1605 = vadd.f32 0.0, %v1604
      %v1606 = vpop.f32.mrb[0].mxu0
      %1607 = vmatprep.mubr.bf16.mxu0 0
      %1608 = vmatmul.mubr.bf16.gmra.mrb[0].mxu0 %v1465
      %v1609 = vpop.f32.mrb[0].mxu0
      %v1610 = vadd.f32 0.0, %v1609
      %v1611 = vpop.f32.mrb[0].mxu0
      %v1612 = vpop.f32.mrb[0].mxu0
      %v1613 = vadd.f32 0.0, %v1612
      %v1614 = vpop.f32.mrb[0].mxu0
      %1615 = vmatprep.mubr.bf16.mxu0 0
      %1616 = vmatmul.mubr.bf16.gmra.mrb[0].mxu0 %v1468
      %v1617 = vpop.f32.mrb[0].mxu0
      %v1618 = vadd.f32 0.0, %v1617
      %v1619 = vpop.f32.mrb[0].mxu0
      %v1620 = vpop.f32.mrb[0].mxu0
      %v1621 = vadd.f32 0.0, %v1620
      %v1622 = vpop.f32.mrb[0].mxu0
      %1623 = vmatprep.mubr.bf16.mxu0 0
      %1624 = vmatmul.mubr.bf16.gmra.mrb[0].mxu0 %v1471
      %v1625 = vpop.f32.mrb[0].mxu0
      %v1626 = vadd.f32 0.0, %v1625
      %v1627 = vpop.f32.mrb[0].mxu0
      %v1628 = vpop.f32.mrb[0].mxu0
      %v1629 = vadd.f32 0.0, %v1628
      %v1630 = vpop.f32.mrb[0].mxu0
      %1631 = vmatprep.mubr.bf16.mxu0 0
      %1632 = vmatmul.mubr.bf16.gmra.mrb[0].mxu0 %v1474
      %v1633 = vpop.f32.mrb[0].mxu0
      %v1634 = vadd.f32 0.0, %v1633
      %v1635 = vpop.f32.mrb[0].mxu0
      %v1636 = vpop.f32.mrb[0].mxu0
      %v1637 = vadd.f32 0.0, %v1636
      %v1638 = vpop.f32.mrb[0].mxu0
      %1639 = vdwg.mxu0
      %v1640 = vadd.f32 %v1089, %v1514
      %v1641 = vadd.f32 %v1092, %v1517
      %v1642 = vadd.f32 %v1097, %v1522
      %v1643 = vadd.f32 %v1100, %v1525
      %v1644 = vadd.f32 %v1105, %v1530
      %v1645 = vadd.f32 %v1108, %v1533
      %v1646 = vadd.f32 %v1113, %v1538
      %v1647 = vadd.f32 %v1116, %v1541
      %v1648 = vadd.f32 %v1121, %v1546
      %v1649 = vadd.f32 %v1124, %v1549
      %v1650 = vadd.f32 %v1129, %v1554
      %v1651 = vadd.f32 %v1132, %v1557
      %v1652 = vadd.f32 %v1137, %v1562
      %v1653 = vadd.f32 %v1140, %v1565
      %v1654 = vadd.f32 %v1145, %v1570
      %v1655 = vadd.f32 %v1148, %v1573
      %v1656 = vadd.f32 %v1153, %v1578
      %v1657 = vadd.f32 %v1156, %v1581
      %v1658 = vadd.f32 %v1161, %v1586
      %v1659 = vadd.f32 %v1164, %v1589
      %v1660 = vadd.f32 %v1169, %v1594
      %v1661 = vadd.f32 %v1172, %v1597
      %v1662 = vadd.f32 %v1177, %v1602
      %v1663 = vadd.f32 %v1180, %v1605
      %v1664 = vadd.f32 %v1185, %v1610
      %v1665 = vadd.f32 %v1188, %v1613
      %v1666 = vadd.f32 %v1193, %v1618
      %v1667 = vadd.f32 %v1196, %v1621
      %v1668 = vadd.f32 %v1201, %v1626
      %v1669 = vadd.f32 %v1204, %v1629
      %v1670 = vadd.f32 %v1209, %v1634
      %v1671 = vadd.f32 %v1212, %v1637
      %s1672 = scalar_lea.vmem %s206, 12
      %v1673 = vld [vmem:[%s1672] sm:$0xf]
      %v1674 = vld [vmem:[%s1672 + $0x4] sm:$0xf]
      %v1675 = vld [vmem:[%s1672 + $0xc] sm:$0xf]
      %v1676 = vld [vmem:[%s1672 + $0x10] sm:$0xf]
      %v1677 = vld [vmem:[%s1672 + $0x18] sm:$0xf]
      %v1678 = vld [vmem:[%s1672 + $0x1c] sm:$0xf]
      %v1679 = vld [vmem:[%s1672 + $0x24] sm:$0xf]
      %v1680 = vld [vmem:[%s1672 + $0x28] sm:$0xf]
      %v1681 = vld [vmem:[%s1672 + $0x30] sm:$0xf]
      %v1682 = vld [vmem:[%s1672 + $0x34] sm:$0xf]
      %v1683 = vld [vmem:[%s1672 + $0x3c] sm:$0xf]
      %v1684 = vld [vmem:[%s1672 + $0x40] sm:$0xf]
      %v1685 = vld [vmem:[%s1672 + $0x48] sm:$0xf]
      %v1686 = vld [vmem:[%s1672 + $0x4c] sm:$0xf]
      %v1687 = vld [vmem:[%s1672 + $0x54] sm:$0xf]
      %v1688 = vld [vmem:[%s1672 + $0x58] sm:$0xf]
      %v1689 = vld [vmem:[%s1672 + $0x60] sm:$0xf]
      %v1690 = vld [vmem:[%s1672 + $0x64] sm:$0xf]
      %v1691 = vld [vmem:[%s1672 + $0x6c] sm:$0xf]
      %v1692 = vld [vmem:[%s1672 + $0x70] sm:$0xf]
      %v1693 = vld [vmem:[%s1672 + $0x78] sm:$0xf]
      %v1694 = vld [vmem:[%s1672 + $0x7c] sm:$0xf]
      %v1695 = vld [vmem:[%s1672 + $0x84] sm:$0xf]
      %v1696 = vld [vmem:[%s1672 + $0x88] sm:$0xf]
      %v1697 = vld [vmem:[%s1672 + $0x90] sm:$0xf]
      %v1698 = vld [vmem:[%s1672 + $0x94] sm:$0xf]
      %v1699 = vld [vmem:[%s1672 + $0x9c] sm:$0xf]
      %v1700 = vld [vmem:[%s1672 + $0xa0] sm:$0xf]
      %v1701 = vld [vmem:[%s1672 + $0xa8] sm:$0xf]
      %v1702 = vld [vmem:[%s1672 + $0xac] sm:$0xf]
      %v1703 = vld [vmem:[%s1672 + $0xb4] sm:$0xf]
      %v1704 = vld [vmem:[%s1672 + $0xb8] sm:$0xf]
      %s1705 = scalar_lea.vmem %s210, 6
      %v1706 = vld [vmem:[%s1705] sm:$0x3]
      %v1739 = vunpack.c.l.b16 %v1673
      %v1740 = vunpack.c.l.b16 %v1674
      %v1741 = vunpack.c.l.b16 %v1675
      %v1742 = vunpack.c.l.b16 %v1676
      %v1743 = vunpack.c.l.b16 %v1677
      %v1744 = vunpack.c.l.b16 %v1678
      %v1745 = vunpack.c.l.b16 %v1679
      %v1746 = vunpack.c.l.b16 %v1680
      %v1747 = vunpack.c.l.b16 %v1681
      %v1748 = vunpack.c.l.b16 %v1682
      %v1749 = vunpack.c.l.b16 %v1683
      %v1750 = vunpack.c.l.b16 %v1684
      %v1751 = vunpack.c.l.b16 %v1685
      %v1752 = vunpack.c.l.b16 %v1686
      %v1753 = vunpack.c.l.b16 %v1687
      %v1754 = vunpack.c.l.b16 %v1688
      %v1755 = vunpack.c.l.b16 %v1689
      %v1756 = vunpack.c.l.b16 %v1690
      %v1757 = vunpack.c.l.b16 %v1691
      %v1758 = vunpack.c.l.b16 %v1692
      %v1759 = vunpack.c.l.b16 %v1693
      %v1760 = vunpack.c.l.b16 %v1694
      %v1761 = vunpack.c.l.b16 %v1695
      %v1762 = vunpack.c.l.b16 %v1696
      %v1763 = vunpack.c.l.b16 %v1697
      %v1764 = vunpack.c.l.b16 %v1698
      %v1765 = vunpack.c.l.b16 %v1699
      %v1766 = vunpack.c.l.b16 %v1700
      %v1767 = vunpack.c.l.b16 %v1701
      %v1768 = vunpack.c.l.b16 %v1702
      %v1769 = vunpack.c.l.b16 %v1703
      %v1770 = vunpack.c.l.b16 %v1704
      %v1771 = vpack.c.b16 %v1740, %v1739
      %v1772 = vpack.c.b16 %v1742, %v1741
      %v1773 = vpack.c.b16 %v1744, %v1743
      %v1774 = vpack.c.b16 %v1746, %v1745
      %v1775 = vpack.c.b16 %v1748, %v1747
      %v1776 = vpack.c.b16 %v1750, %v1749
      %v1777 = vpack.c.b16 %v1752, %v1751
      %v1778 = vpack.c.b16 %v1754, %v1753
      %v1779 = vpack.c.b16 %v1756, %v1755
      %v1780 = vpack.c.b16 %v1758, %v1757
      %v1781 = vpack.c.b16 %v1760, %v1759
      %v1782 = vpack.c.b16 %v1762, %v1761
      %v1783 = vpack.c.b16 %v1764, %v1763
      %v1784 = vpack.c.b16 %v1766, %v1765
      %v1785 = vpack.c.b16 %v1768, %v1767
      %v1786 = vpack.c.b16 %v1770, %v1769
      %v1788 = vsel %vm709, %v1771, 0
      %v1791 = vsel %vm709, %v1772, 0
      %v1794 = vsel %vm709, %v1773, 0
      %v1797 = vsel %vm709, %v1774, 0
      %v1800 = vsel %vm709, %v1775, 0
      %v1803 = vsel %vm709, %v1776, 0
      %v1806 = vsel %vm709, %v1777, 0
      %v1809 = vsel %vm709, %v1778, 0
      %v1812 = vsel %vm709, %v1779, 0
      %v1815 = vsel %vm709, %v1780, 0
      %v1818 = vsel %vm709, %v1781, 0
      %v1821 = vsel %vm709, %v1782, 0
      %v1824 = vsel %vm709, %v1783, 0
      %v1827 = vsel %vm709, %v1784, 0
      %v1830 = vsel %vm709, %v1785, 0
      %v1833 = vsel %vm709, %v1786, 0
      %v1836 = vsel %vm758, %v1706, 0
      %1838 = vmatprep.subr.bf16.mxu0 0
      %1839 = vmatpush1.bf16.msra.mxu0 %v1836
      %1840 = vmatprep.subr.bf16.mxu0 0
      %1841 = vmatpush1.bf16.msra.mxu0 0
      %1842 = vmatprep.subr.bf16.mxu0 0
      %1843 = vmatpush1.bf16.msra.mxu0 0
      %1844 = vmatprep.subr.bf16.mxu0 0
      %1845 = vmatpush1.bf16.msra.mxu0 0
      %1846 = vmatprep.subr.bf16.mxu0 0
      %1847 = vmatpush1.bf16.msra.mxu0 0
      %1848 = vmatprep.subr.bf16.mxu0 0
      %1849 = vmatpush1.bf16.msra.mxu0 0
      %1850 = vmatprep.subr.bf16.mxu0 0
      %1851 = vmatpush1.bf16.msra.mxu0 0
      %1852 = vmatprep.subr.bf16.mxu0 0
      %1853 = vmatpush1.bf16.msra.mxu0 0
      %1854 = vmatprep.subr.bf16.mxu0 0
      %1855 = vmatpush1.bf16.msra.mxu0 0
      %1856 = vmatprep.subr.bf16.mxu0 0
      %1857 = vmatpush1.bf16.msra.mxu0 0
      %1858 = vmatprep.subr.bf16.mxu0 0
      %1859 = vmatpush1.bf16.msra.mxu0 0
      %1860 = vmatprep.subr.bf16.mxu0 0
      %1861 = vmatpush1.bf16.msra.mxu0 0
      %1862 = vmatprep.subr.bf16.mxu0 0
      %1863 = vmatpush1.bf16.msra.mxu0 0
      %1864 = vmatprep.subr.bf16.mxu0 0
      %1865 = vmatpush1.bf16.msra.mxu0 0
      %1866 = vmatprep.subr.bf16.mxu0 0
      %1867 = vmatpush1.bf16.msra.mxu0 0
      %1868 = vmatprep.subr.bf16.mxu0 0
      %1869 = vmatpush1.bf16.msra.mxu0 0
      %1870 = vmatprep.mubr.bf16.mxu0 0
      %1871 = vmatmul.mubr.bf16.gmra.mrb[0].mxu0 %v1788
      %v1872 = vpop.f32.mrb[0].mxu0
      %v1873 = vadd.f32 0.0, %v1872
      %v1874 = vpop.f32.mrb[0].mxu0
      %v1875 = vpop.f32.mrb[0].mxu0
      %v1876 = vadd.f32 0.0, %v1875
      %v1877 = vpop.f32.mrb[0].mxu0
      %1878 = vmatprep.mubr.bf16.mxu0 0
      %1879 = vmatmul.mubr.bf16.gmra.mrb[0].mxu0 %v1791
      %v1880 = vpop.f32.mrb[0].mxu0
      %v1881 = vadd.f32 0.0, %v1880
      %v1882 = vpop.f32.mrb[0].mxu0
      %v1883 = vpop.f32.mrb[0].mxu0
      %v1884 = vadd.f32 0.0, %v1883
      %v1885 = vpop.f32.mrb[0].mxu0
      %1886 = vmatprep.mubr.bf16.mxu0 0
      %1887 = vmatmul.mubr.bf16.gmra.mrb[0].mxu0 %v1794
      %v1888 = vpop.f32.mrb[0].mxu0
      %v1889 = vadd.f32 0.0, %v1888
      %v1890 = vpop.f32.mrb[0].mxu0
      %v1891 = vpop.f32.mrb[0].mxu0
      %v1892 = vadd.f32 0.0, %v1891
      %v1893 = vpop.f32.mrb[0].mxu0
      %1894 = vmatprep.mubr.bf16.mxu0 0
      %1895 = vmatmul.mubr.bf16.gmra.mrb[0].mxu0 %v1797
      %v1896 = vpop.f32.mrb[0].mxu0
      %v1897 = vadd.f32 0.0, %v1896
      %v1898 = vpop.f32.mrb[0].mxu0
      %v1899 = vpop.f32.mrb[0].mxu0
      %v1900 = vadd.f32 0.0, %v1899
      %v1901 = vpop.f32.mrb[0].mxu0
      %1902 = vmatprep.mubr.bf16.mxu0 0
      %1903 = vmatmul.mubr.bf16.gmra.mrb[0].mxu0 %v1800
      %v1904 = vpop.f32.mrb[0].mxu0
      %v1905 = vadd.f32 0.0, %v1904
      %v1906 = vpop.f32.mrb[0].mxu0
      %v1907 = vpop.f32.mrb[0].mxu0
      %v1908 = vadd.f32 0.0, %v1907
      %v1909 = vpop.f32.mrb[0].mxu0
      %1910 = vmatprep.mubr.bf16.mxu0 0
      %1911 = vmatmul.mubr.bf16.gmra.mrb[0].mxu0 %v1803
      %v1912 = vpop.f32.mrb[0].mxu0
      %v1913 = vadd.f32 0.0, %v1912
      %v1914 = vpop.f32.mrb[0].mxu0
      %v1915 = vpop.f32.mrb[0].mxu0
      %v1916 = vadd.f32 0.0, %v1915
      %v1917 = vpop.f32.mrb[0].mxu0
      %1918 = vmatprep.mubr.bf16.mxu0 0
      %1919 = vmatmul.mubr.bf16.gmra.mrb[0].mxu0 %v1806
      %v1920 = vpop.f32.mrb[0].mxu0
      %v1921 = vadd.f32 0.0, %v1920
      %v1922 = vpop.f32.mrb[0].mxu0
      %v1923 = vpop.f32.mrb[0].mxu0
      %v1924 = vadd.f32 0.0, %v1923
      %v1925 = vpop.f32.mrb[0].mxu0
      %1926 = vmatprep.mubr.bf16.mxu0 0
      %1927 = vmatmul.mubr.bf16.gmra.mrb[0].mxu0 %v1809
      %v1928 = vpop.f32.mrb[0].mxu0
      %v1929 = vadd.f32 0.0, %v1928
      %v1930 = vpop.f32.mrb[0].mxu0
      %v1931 = vpop.f32.mrb[0].mxu0
      %v1932 = vadd.f32 0.0, %v1931
      %v1933 = vpop.f32.mrb[0].mxu0
      %1934 = vmatprep.mubr.bf16.mxu0 0
      %1935 = vmatmul.mubr.bf16.gmra.mrb[0].mxu0 %v1812
      %v1936 = vpop.f32.mrb[0].mxu0
      %v1937 = vadd.f32 0.0, %v1936
      %v1938 = vpop.f32.mrb[0].mxu0
      %v1939 = vpop.f32.mrb[0].mxu0
      %v1940 = vadd.f32 0.0, %v1939
      %v1941 = vpop.f32.mrb[0].mxu0
      %1942 = vmatprep.mubr.bf16.mxu0 0
      %1943 = vmatmul.mubr.bf16.gmra.mrb[0].mxu0 %v1815
      %v1944 = vpop.f32.mrb[0].mxu0
      %v1945 = vadd.f32 0.0, %v1944
      %v1946 = vpop.f32.mrb[0].mxu0
      %v1947 = vpop.f32.mrb[0].mxu0
      %v1948 = vadd.f32 0.0, %v1947
      %v1949 = vpop.f32.mrb[0].mxu0
      %1950 = vmatprep.mubr.bf16.mxu0 0
      %1951 = vmatmul.mubr.bf16.gmra.mrb[0].mxu0 %v1818
      %v1952 = vpop.f32.mrb[0].mxu0
      %v1953 = vadd.f32 0.0, %v1952
      %v1954 = vpop.f32.mrb[0].mxu0
      %v1955 = vpop.f32.mrb[0].mxu0
      %v1956 = vadd.f32 0.0, %v1955
      %v1957 = vpop.f32.mrb[0].mxu0
      %1958 = vmatprep.mubr.bf16.mxu0 0
      %1959 = vmatmul.mubr.bf16.gmra.mrb[0].mxu0 %v1821
      %v1960 = vpop.f32.mrb[0].mxu0
      %v1961 = vadd.f32 0.0, %v1960
      %v1962 = vpop.f32.mrb[0].mxu0
      %v1963 = vpop.f32.mrb[0].mxu0
      %v1964 = vadd.f32 0.0, %v1963
      %v1965 = vpop.f32.mrb[0].mxu0
      %1966 = vmatprep.mubr.bf16.mxu0 0
      %1967 = vmatmul.mubr.bf16.gmra.mrb[0].mxu0 %v1824
      %v1968 = vpop.f32.mrb[0].mxu0
      %v1969 = vadd.f32 0.0, %v1968
      %v1970 = vpop.f32.mrb[0].mxu0
      %v1971 = vpop.f32.mrb[0].mxu0
      %v1972 = vadd.f32 0.0, %v1971
      %v1973 = vpop.f32.mrb[0].mxu0
      %1974 = vmatprep.mubr.bf16.mxu0 0
      %1975 = vmatmul.mubr.bf16.gmra.mrb[0].mxu0 %v1827
      %v1976 = vpop.f32.mrb[0].mxu0
      %v1977 = vadd.f32 0.0, %v1976
      %v1978 = vpop.f32.mrb[0].mxu0
      %v1979 = vpop.f32.mrb[0].mxu0
      %v1980 = vadd.f32 0.0, %v1979
      %v1981 = vpop.f32.mrb[0].mxu0
      %1982 = vmatprep.mubr.bf16.mxu0 0
      %1983 = vmatmul.mubr.bf16.gmra.mrb[0].mxu0 %v1830
      %v1984 = vpop.f32.mrb[0].mxu0
      %v1985 = vadd.f32 0.0, %v1984
      %v1986 = vpop.f32.mrb[0].mxu0
      %v1987 = vpop.f32.mrb[0].mxu0
      %v1988 = vadd.f32 0.0, %v1987
      %v1989 = vpop.f32.mrb[0].mxu0
      %1990 = vmatprep.mubr.bf16.mxu0 0
      %1991 = vmatmul.mubr.bf16.gmra.mrb[0].mxu0 %v1833
      %v1992 = vpop.f32.mrb[0].mxu0
      %v1993 = vadd.f32 0.0, %v1992
      %v1994 = vpop.f32.mrb[0].mxu0
      %v1995 = vpop.f32.mrb[0].mxu0
      %v1996 = vadd.f32 0.0, %v1995
      %v1997 = vpop.f32.mrb[0].mxu0
      %1998 = vdwg.mxu0
      %v1999 = vadd.f32 %v1640, %v1873
      %v2000 = vadd.f32 %v1641, %v1876
      %v2001 = vadd.f32 %v1642, %v1881
      %v2002 = vadd.f32 %v1643, %v1884
      %v2003 = vadd.f32 %v1644, %v1889
      %v2004 = vadd.f32 %v1645, %v1892
      %v2005 = vadd.f32 %v1646, %v1897
      %v2006 = vadd.f32 %v1647, %v1900
      %v2007 = vadd.f32 %v1648, %v1905
      %v2008 = vadd.f32 %v1649, %v1908
      %v2009 = vadd.f32 %v1650, %v1913
      %v2010 = vadd.f32 %v1651, %v1916
      %v2011 = vadd.f32 %v1652, %v1921
      %v2012 = vadd.f32 %v1653, %v1924
      %v2013 = vadd.f32 %v1654, %v1929
      %v2014 = vadd.f32 %v1655, %v1932
      %v2015 = vadd.f32 %v1656, %v1937
      %v2016 = vadd.f32 %v1657, %v1940
      %v2017 = vadd.f32 %v1658, %v1945
      %v2018 = vadd.f32 %v1659, %v1948
      %v2019 = vadd.f32 %v1660, %v1953
      %v2020 = vadd.f32 %v1661, %v1956
      %v2021 = vadd.f32 %v1662, %v1961
      %v2022 = vadd.f32 %v1663, %v1964
      %v2023 = vadd.f32 %v1664, %v1969
      %v2024 = vadd.f32 %v1665, %v1972
      %v2025 = vadd.f32 %v1666, %v1977
      %v2026 = vadd.f32 %v1667, %v1980
      %v2027 = vadd.f32 %v1668, %v1985
      %v2028 = vadd.f32 %v1669, %v1988
      %v2029 = vadd.f32 %v1670, %v1993
      %v2030 = vadd.f32 %v1671, %v1996
      %v2031 = vld [vmem:[%s1672] sm:$0xf]
      %v2032 = vld [vmem:[%s1672 + $0x4] sm:$0xf]
      %v2033 = vld [vmem:[%s1672 + $0x8] sm:$0x1]
      %v2034 = vld [vmem:[%s1672 + $0xc] sm:$0xf]
      %v2035 = vld [vmem:[%s1672 + $0x10] sm:$0xf]
      %v2036 = vld [vmem:[%s1672 + $0x14] sm:$0x1]
      %v2037 = vld [vmem:[%s1672 + $0x18] sm:$0xf]
      %v2038 = vld [vmem:[%s1672 + $0x1c] sm:$0xf]
      %v2039 = vld [vmem:[%s1672 + $0x20] sm:$0x1]
      %v2040 = vld [vmem:[%s1672 + $0x24] sm:$0xf]
      %v2041 = vld [vmem:[%s1672 + $0x28] sm:$0xf]
      %v2042 = vld [vmem:[%s1672 + $0x2c] sm:$0x1]
      %v2043 = vld [vmem:[%s1672 + $0x30] sm:$0xf]
      %v2044 = vld [vmem:[%s1672 + $0x34] sm:$0xf]
      %v2045 = vld [vmem:[%s1672 + $0x38] sm:$0x1]
      %v2046 = vld [vmem:[%s1672 + $0x3c] sm:$0xf]
      %v2047 = vld [vmem:[%s1672 + $0x40] sm:$0xf]
      %v2048 = vld [vmem:[%s1672 + $0x44] sm:$0x1]
      %v2049 = vld [vmem:[%s1672 + $0x48] sm:$0xf]
      %v2050 = vld [vmem:[%s1672 + $0x4c] sm:$0xf]
      %v2051 = vld [vmem:[%s1672 + $0x50] sm:$0x1]
      %v2052 = vld [vmem:[%s1672 + $0x54] sm:$0xf]
      %v2053 = vld [vmem:[%s1672 + $0x58] sm:$0xf]
      %v2054 = vld [vmem:[%s1672 + $0x5c] sm:$0x1]
      %v2055 = vld [vmem:[%s1672 + $0x60] sm:$0xf]
      %v2056 = vld [vmem:[%s1672 + $0x64] sm:$0xf]
      %v2057 = vld [vmem:[%s1672 + $0x68] sm:$0x1]
      %v2058 = vld [vmem:[%s1672 + $0x6c] sm:$0xf]
      %v2059 = vld [vmem:[%s1672 + $0x70] sm:$0xf]
      %v2060 = vld [vmem:[%s1672 + $0x74] sm:$0x1]
      %v2061 = vld [vmem:[%s1672 + $0x78] sm:$0xf]
      %v2062 = vld [vmem:[%s1672 + $0x7c] sm:$0xf]
      %v2063 = vld [vmem:[%s1672 + $0x80] sm:$0x1]
      %v2064 = vld [vmem:[%s1672 + $0x84] sm:$0xf]
      %v2065 = vld [vmem:[%s1672 + $0x88] sm:$0xf]
      %v2066 = vld [vmem:[%s1672 + $0x8c] sm:$0x1]
      %v2067 = vld [vmem:[%s1672 + $0x90] sm:$0xf]
      %v2068 = vld [vmem:[%s1672 + $0x94] sm:$0xf]
      %v2069 = vld [vmem:[%s1672 + $0x98] sm:$0x1]
      %v2070 = vld [vmem:[%s1672 + $0x9c] sm:$0xf]
      %v2071 = vld [vmem:[%s1672 + $0xa0] sm:$0xf]
      %v2072 = vld [vmem:[%s1672 + $0xa4] sm:$0x1]
      %v2073 = vld [vmem:[%s1672 + $0xa8] sm:$0xf]
      %v2074 = vld [vmem:[%s1672 + $0xac] sm:$0xf]
      %v2075 = vld [vmem:[%s1672 + $0xb0] sm:$0x1]
      %v2076 = vld [vmem:[%s1672 + $0xb4] sm:$0xf]
      %v2077 = vld [vmem:[%s1672 + $0xb8] sm:$0xf]
      %v2078 = vld [vmem:[%s1672 + $0xbc] sm:$0x1]
      %v2080 = vshrl.u32 %v2031, 16
      %v2082 = vrot.slane %v2080, 4
      %v2083 = vshll.u32 %v2031, 16
      %v2085 = vrot.slane %v2083, 5
      %v2086 = vor.u32 %v2082, %v2085
      %v2087 = vrot.slane %v2086, 4
      %v2089 = vshll.u32 %v2032, 16
      %v2091 = vrot.slane %v2089, 5
      %v2092 = vsel %vm274, %v2087, %v2091
      %v2093 = vshrl.u32 %v2032, 16
      %v2095 = vrot.slane %v2093, 4
      %v2096 = vor.u32 %v2095, %v2091
      %v2097 = vrot.slane %v2096, 4
      %v2099 = vshll.u32 %v2033, 16
      %v2101 = vrot.slane %v2099, 5
      %v2102 = vsel %vm274, %v2097, %v2101
      %v2104 = vshrl.u32 %v2034, 16
      %v2106 = vrot.slane %v2104, 4
      %v2107 = vshll.u32 %v2034, 16
      %v2109 = vrot.slane %v2107, 5
      %v2110 = vor.u32 %v2106, %v2109
      %v2111 = vrot.slane %v2110, 4
      %v2113 = vshll.u32 %v2035, 16
      %v2115 = vrot.slane %v2113, 5
      %v2116 = vsel %vm274, %v2111, %v2115
      %v2117 = vshrl.u32 %v2035, 16
      %v2119 = vrot.slane %v2117, 4
      %v2120 = vor.u32 %v2119, %v2115
      %v2121 = vrot.slane %v2120, 4
      %v2123 = vshll.u32 %v2036, 16
      %v2125 = vrot.slane %v2123, 5
      %v2126 = vsel %vm274, %v2121, %v2125
      %v2128 = vshrl.u32 %v2037, 16
      %v2130 = vrot.slane %v2128, 4
      %v2131 = vshll.u32 %v2037, 16
      %v2133 = vrot.slane %v2131, 5
      %v2134 = vor.u32 %v2130, %v2133
      %v2135 = vrot.slane %v2134, 4
      %v2137 = vshll.u32 %v2038, 16
      %v2139 = vrot.slane %v2137, 5
      %v2140 = vsel %vm274, %v2135, %v2139
      %v2141 = vshrl.u32 %v2038, 16
      %v2143 = vrot.slane %v2141, 4
      %v2144 = vor.u32 %v2143, %v2139
      %v2145 = vrot.slane %v2144, 4
      %v2147 = vshll.u32 %v2039, 16
      %v2149 = vrot.slane %v2147, 5
      %v2150 = vsel %vm274, %v2145, %v2149
      %v2152 = vshrl.u32 %v2040, 16
      %v2154 = vrot.slane %v2152, 4
      %v2155 = vshll.u32 %v2040, 16
      %v2157 = vrot.slane %v2155, 5
      %v2158 = vor.u32 %v2154, %v2157
      %v2159 = vrot.slane %v2158, 4
      %v2161 = vshll.u32 %v2041, 16
      %v2163 = vrot.slane %v2161, 5
      %v2164 = vsel %vm274, %v2159, %v2163
      %v2165 = vshrl.u32 %v2041, 16
      %v2167 = vrot.slane %v2165, 4
      %v2168 = vor.u32 %v2167, %v2163
      %v2169 = vrot.slane %v2168, 4
      %v2171 = vshll.u32 %v2042, 16
      %v2173 = vrot.slane %v2171, 5
      %v2174 = vsel %vm274, %v2169, %v2173
      %v2176 = vshrl.u32 %v2043, 16
      %v2178 = vrot.slane %v2176, 4
      %v2179 = vshll.u32 %v2043, 16
      %v2181 = vrot.slane %v2179, 5
      %v2182 = vor.u32 %v2178, %v2181
      %v2183 = vrot.slane %v2182, 4
      %v2185 = vshll.u32 %v2044, 16
      %v2187 = vrot.slane %v2185, 5
      %v2188 = vsel %vm274, %v2183, %v2187
      %v2189 = vshrl.u32 %v2044, 16
      %v2191 = vrot.slane %v2189, 4
      %v2192 = vor.u32 %v2191, %v2187
      %v2193 = vrot.slane %v2192, 4
      %v2195 = vshll.u32 %v2045, 16
      %v2197 = vrot.slane %v2195, 5
      %v2198 = vsel %vm274, %v2193, %v2197
      %v2200 = vshrl.u32 %v2046, 16
      %v2202 = vrot.slane %v2200, 4
      %v2203 = vshll.u32 %v2046, 16
      %v2205 = vrot.slane %v2203, 5
      %v2206 = vor.u32 %v2202, %v2205
      %v2207 = vrot.slane %v2206, 4
      %v2209 = vshll.u32 %v2047, 16
      %v2211 = vrot.slane %v2209, 5
      %v2212 = vsel %vm274, %v2207, %v2211
      %v2213 = vshrl.u32 %v2047, 16
      %v2215 = vrot.slane %v2213, 4
      %v2216 = vor.u32 %v2215, %v2211
      %v2217 = vrot.slane %v2216, 4
      %v2219 = vshll.u32 %v2048, 16
      %v2221 = vrot.slane %v2219, 5
      %v2222 = vsel %vm274, %v2217, %v2221
      %v2224 = vshrl.u32 %v2049, 16
      %v2226 = vrot.slane %v2224, 4
      %v2227 = vshll.u32 %v2049, 16
      %v2229 = vrot.slane %v2227, 5
      %v2230 = vor.u32 %v2226, %v2229
      %v2231 = vrot.slane %v2230, 4
      %v2233 = vshll.u32 %v2050, 16
      %v2235 = vrot.slane %v2233, 5
      %v2236 = vsel %vm274, %v2231, %v2235
      %v2237 = vshrl.u32 %v2050, 16
      %v2239 = vrot.slane %v2237, 4
      %v2240 = vor.u32 %v2239, %v2235
      %v2241 = vrot.slane %v2240, 4
      %v2243 = vshll.u32 %v2051, 16
      %v2245 = vrot.slane %v2243, 5
      %v2246 = vsel %vm274, %v2241, %v2245
      %v2248 = vshrl.u32 %v2052, 16
      %v2250 = vrot.slane %v2248, 4
      %v2251 = vshll.u32 %v2052, 16
      %v2253 = vrot.slane %v2251, 5
      %v2254 = vor.u32 %v2250, %v2253
      %v2255 = vrot.slane %v2254, 4
      %v2257 = vshll.u32 %v2053, 16
      %v2259 = vrot.slane %v2257, 5
      %v2260 = vsel %vm274, %v2255, %v2259
      %v2261 = vshrl.u32 %v2053, 16
      %v2263 = vrot.slane %v2261, 4
      %v2264 = vor.u32 %v2263, %v2259
      %v2265 = vrot.slane %v2264, 4
      %v2267 = vshll.u32 %v2054, 16
      %v2269 = vrot.slane %v2267, 5
      %v2270 = vsel %vm274, %v2265, %v2269
      %v2272 = vshrl.u32 %v2055, 16
      %v2274 = vrot.slane %v2272, 4
      %v2275 = vshll.u32 %v2055, 16
      %v2277 = vrot.slane %v2275, 5
      %v2278 = vor.u32 %v2274, %v2277
      %v2279 = vrot.slane %v2278, 4
      %v2281 = vshll.u32 %v2056, 16
      %v2283 = vrot.slane %v2281, 5
      %v2284 = vsel %vm274, %v2279, %v2283
      %v2285 = vshrl.u32 %v2056, 16
      %v2287 = vrot.slane %v2285, 4
      %v2288 = vor.u32 %v2287, %v2283
      %v2289 = vrot.slane %v2288, 4
      %v2291 = vshll.u32 %v2057, 16
      %v2293 = vrot.slane %v2291, 5
      %v2294 = vsel %vm274, %v2289, %v2293
      %v2296 = vshrl.u32 %v2058, 16
      %v2298 = vrot.slane %v2296, 4
      %v2299 = vshll.u32 %v2058, 16
      %v2301 = vrot.slane %v2299, 5
      %v2302 = vor.u32 %v2298, %v2301
      %v2303 = vrot.slane %v2302, 4
      %v2305 = vshll.u32 %v2059, 16
      %v2307 = vrot.slane %v2305, 5
      %v2308 = vsel %vm274, %v2303, %v2307
      %v2309 = vshrl.u32 %v2059, 16
      %v2311 = vrot.slane %v2309, 4
      %v2312 = vor.u32 %v2311, %v2307
      %v2313 = vrot.slane %v2312, 4
      %v2315 = vshll.u32 %v2060, 16
      %v2317 = vrot.slane %v2315, 5
      %v2318 = vsel %vm274, %v2313, %v2317
      %v2320 = vshrl.u32 %v2061, 16
      %v2322 = vrot.slane %v2320, 4
      %v2323 = vshll.u32 %v2061, 16
      %v2325 = vrot.slane %v2323, 5
      %v2326 = vor.u32 %v2322, %v2325
      %v2327 = vrot.slane %v2326, 4
      %v2329 = vshll.u32 %v2062, 16
      %v2331 = vrot.slane %v2329, 5
      %v2332 = vsel %vm274, %v2327, %v2331
      %v2333 = vshrl.u32 %v2062, 16
      %v2335 = vrot.slane %v2333, 4
      %v2336 = vor.u32 %v2335, %v2331
      %v2337 = vrot.slane %v2336, 4
      %v2339 = vshll.u32 %v2063, 16
      %v2341 = vrot.slane %v2339, 5
      %v2342 = vsel %vm274, %v2337, %v2341
      %v2344 = vshrl.u32 %v2064, 16
      %v2346 = vrot.slane %v2344, 4
      %v2347 = vshll.u32 %v2064, 16
      %v2349 = vrot.slane %v2347, 5
      %v2350 = vor.u32 %v2346, %v2349
      %v2351 = vrot.slane %v2350, 4
      %v2353 = vshll.u32 %v2065, 16
      %v2355 = vrot.slane %v2353, 5
      %v2356 = vsel %vm274, %v2351, %v2355
      %v2357 = vshrl.u32 %v2065, 16
      %v2359 = vrot.slane %v2357, 4
      %v2360 = vor.u32 %v2359, %v2355
      %v2361 = vrot.slane %v2360, 4
      %v2363 = vshll.u32 %v2066, 16
      %v2365 = vrot.slane %v2363, 5
      %v2366 = vsel %vm274, %v2361, %v2365
      %v2368 = vshrl.u32 %v2067, 16
      %v2370 = vrot.slane %v2368, 4
      %v2371 = vshll.u32 %v2067, 16
      %v2373 = vrot.slane %v2371, 5
      %v2374 = vor.u32 %v2370, %v2373
      %v2375 = vrot.slane %v2374, 4
      %v2377 = vshll.u32 %v2068, 16
      %v2379 = vrot.slane %v2377, 5
      %v2380 = vsel %vm274, %v2375, %v2379
      %v2381 = vshrl.u32 %v2068, 16
      %v2383 = vrot.slane %v2381, 4
      %v2384 = vor.u32 %v2383, %v2379
      %v2385 = vrot.slane %v2384, 4
      %v2387 = vshll.u32 %v2069, 16
      %v2389 = vrot.slane %v2387, 5
      %v2390 = vsel %vm274, %v2385, %v2389
      %v2392 = vshrl.u32 %v2070, 16
      %v2394 = vrot.slane %v2392, 4
      %v2395 = vshll.u32 %v2070, 16
      %v2397 = vrot.slane %v2395, 5
      %v2398 = vor.u32 %v2394, %v2397
      %v2399 = vrot.slane %v2398, 4
      %v2401 = vshll.u32 %v2071, 16
      %v2403 = vrot.slane %v2401, 5
      %v2404 = vsel %vm274, %v2399, %v2403
      %v2405 = vshrl.u32 %v2071, 16
      %v2407 = vrot.slane %v2405, 4
      %v2408 = vor.u32 %v2407, %v2403
      %v2409 = vrot.slane %v2408, 4
      %v2411 = vshll.u32 %v2072, 16
      %v2413 = vrot.slane %v2411, 5
      %v2414 = vsel %vm274, %v2409, %v2413
      %v2416 = vshrl.u32 %v2073, 16
      %v2418 = vrot.slane %v2416, 4
      %v2419 = vshll.u32 %v2073, 16
      %v2421 = vrot.slane %v2419, 5
      %v2422 = vor.u32 %v2418, %v2421
      %v2423 = vrot.slane %v2422, 4
      %v2425 = vshll.u32 %v2074, 16
      %v2427 = vrot.slane %v2425, 5
      %v2428 = vsel %vm274, %v2423, %v2427
      %v2429 = vshrl.u32 %v2074, 16
      %v2431 = vrot.slane %v2429, 4
      %v2432 = vor.u32 %v2431, %v2427
      %v2433 = vrot.slane %v2432, 4
      %v2435 = vshll.u32 %v2075, 16
      %v2437 = vrot.slane %v2435, 5
      %v2438 = vsel %vm274, %v2433, %v2437
      %v2440 = vshrl.u32 %v2076, 16
      %v2442 = vrot.slane %v2440, 4
      %v2443 = vshll.u32 %v2076, 16
      %v2445 = vrot.slane %v2443, 5
      %v2446 = vor.u32 %v2442, %v2445
      %v2447 = vrot.slane %v2446, 4
      %v2449 = vshll.u32 %v2077, 16
      %v2451 = vrot.slane %v2449, 5
      %v2452 = vsel %vm274, %v2447, %v2451
      %v2453 = vshrl.u32 %v2077, 16
      %v2455 = vrot.slane %v2453, 4
      %v2456 = vor.u32 %v2455, %v2451
      %v2457 = vrot.slane %v2456, 4
      %v2459 = vshll.u32 %v2078, 16
      %v2461 = vrot.slane %v2459, 5
      %v2462 = vsel %vm274, %v2457, %v2461
      %s2463 = scalar_lea.vmem %s210, 8
      %v2464 = vld [vmem:[%s2463] sm:$0x3]
      %v2465 = vunpack.c.l.b16 %v2092
      %v2466 = vunpack.c.l.b16 %v2102
      %v2467 = vunpack.c.l.b16 %v2116
      %v2468 = vunpack.c.l.b16 %v2126
      %v2469 = vunpack.c.l.b16 %v2140
      %v2470 = vunpack.c.l.b16 %v2150
      %v2471 = vunpack.c.l.b16 %v2164
      %v2472 = vunpack.c.l.b16 %v2174
      %v2473 = vunpack.c.l.b16 %v2188
      %v2474 = vunpack.c.l.b16 %v2198
      %v2475 = vunpack.c.l.b16 %v2212
      %v2476 = vunpack.c.l.b16 %v2222
      %v2477 = vunpack.c.l.b16 %v2236
      %v2478 = vunpack.c.l.b16 %v2246
      %v2479 = vunpack.c.l.b16 %v2260
      %v2480 = vunpack.c.l.b16 %v2270
      %v2481 = vunpack.c.l.b16 %v2284
      %v2482 = vunpack.c.l.b16 %v2294
      %v2483 = vunpack.c.l.b16 %v2308
      %v2484 = vunpack.c.l.b16 %v2318
      %v2485 = vunpack.c.l.b16 %v2332
      %v2486 = vunpack.c.l.b16 %v2342
      %v2487 = vunpack.c.l.b16 %v2356
      %v2488 = vunpack.c.l.b16 %v2366
      %v2489 = vunpack.c.l.b16 %v2380
      %v2490 = vunpack.c.l.b16 %v2390
      %v2491 = vunpack.c.l.b16 %v2404
      %v2492 = vunpack.c.l.b16 %v2414
      %v2493 = vunpack.c.l.b16 %v2428
      %v2494 = vunpack.c.l.b16 %v2438
      %v2495 = vunpack.c.l.b16 %v2452
      %v2496 = vunpack.c.l.b16 %v2462
      %v2497 = vpack.c.b16 %v2466, %v2465
      %v2498 = vpack.c.b16 %v2468, %v2467
      %v2499 = vpack.c.b16 %v2470, %v2469
      %v2500 = vpack.c.b16 %v2472, %v2471
      %v2501 = vpack.c.b16 %v2474, %v2473
      %v2502 = vpack.c.b16 %v2476, %v2475
      %v2503 = vpack.c.b16 %v2478, %v2477
      %v2504 = vpack.c.b16 %v2480, %v2479
      %v2505 = vpack.c.b16 %v2482, %v2481
      %v2506 = vpack.c.b16 %v2484, %v2483
      %v2507 = vpack.c.b16 %v2486, %v2485
      %v2508 = vpack.c.b16 %v2488, %v2487
      %v2509 = vpack.c.b16 %v2490, %v2489
      %v2510 = vpack.c.b16 %v2492, %v2491
      %v2511 = vpack.c.b16 %v2494, %v2493
      %v2512 = vpack.c.b16 %v2496, %v2495
      %v2514 = vsel %vm709, %v2497, 0
      %v2517 = vsel %vm709, %v2498, 0
      %v2520 = vsel %vm709, %v2499, 0
      %v2523 = vsel %vm709, %v2500, 0
      %v2526 = vsel %vm709, %v2501, 0
      %v2529 = vsel %vm709, %v2502, 0
      %v2532 = vsel %vm709, %v2503, 0
      %v2535 = vsel %vm709, %v2504, 0
      %v2538 = vsel %vm709, %v2505, 0
      %v2541 = vsel %vm709, %v2506, 0
      %v2544 = vsel %vm709, %v2507, 0
      %v2547 = vsel %vm709, %v2508, 0
      %v2550 = vsel %vm709, %v2509, 0
      %v2553 = vsel %vm709, %v2510, 0
      %v2556 = vsel %vm709, %v2511, 0
      %v2559 = vsel %vm709, %v2512, 0
      %v2562 = vsel %vm758, %v2464, 0
      %2564 = vmatprep.subr.bf16.mxu0 0
      %2565 = vmatpush1.bf16.msra.mxu0 %v2562
      %2566 = vmatprep.subr.bf16.mxu0 0
      %2567 = vmatpush1.bf16.msra.mxu0 0
      %2568 = vmatprep.subr.bf16.mxu0 0
      %2569 = vmatpush1.bf16.msra.mxu0 0
      %2570 = vmatprep.subr.bf16.mxu0 0
      %2571 = vmatpush1.bf16.msra.mxu0 0
      %2572 = vmatprep.subr.bf16.mxu0 0
      %2573 = vmatpush1.bf16.msra.mxu0 0
      %2574 = vmatprep.subr.bf16.mxu0 0
      %2575 = vmatpush1.bf16.msra.mxu0 0
      %2576 = vmatprep.subr.bf16.mxu0 0
      %2577 = vmatpush1.bf16.msra.mxu0 0
      %2578 = vmatprep.subr.bf16.mxu0 0
      %2579 = vmatpush1.bf16.msra.mxu0 0
      %2580 = vmatprep.subr.bf16.mxu0 0
      %2581 = vmatpush1.bf16.msra.mxu0 0
      %2582 = vmatprep.subr.bf16.mxu0 0
      %2583 = vmatpush1.bf16.msra.mxu0 0
      %2584 = vmatprep.subr.bf16.mxu0 0
      %2585 = vmatpush1.bf16.msra.mxu0 0
      %2586 = vmatprep.subr.bf16.mxu0 0
      %2587 = vmatpush1.bf16.msra.mxu0 0
      %2588 = vmatprep.subr.bf16.mxu0 0
      %2589 = vmatpush1.bf16.msra.mxu0 0
      %2590 = vmatprep.subr.bf16.mxu0 0
      %2591 = vmatpush1.bf16.msra.mxu0 0
      %2592 = vmatprep.subr.bf16.mxu0 0
      %2593 = vmatpush1.bf16.msra.mxu0 0
      %2594 = vmatprep.subr.bf16.mxu0 0
      %2595 = vmatpush1.bf16.msra.mxu0 0
      %2596 = vmatprep.mubr.bf16.mxu0 0
      %2597 = vmatmul.mubr.bf16.gmra.mrb[0].mxu0 %v2514
      %v2598 = vpop.f32.mrb[0].mxu0
      %v2599 = vadd.f32 0.0, %v2598
      %v2600 = vpop.f32.mrb[0].mxu0
      %v2601 = vpop.f32.mrb[0].mxu0
      %v2602 = vadd.f32 0.0, %v2601
      %v2603 = vpop.f32.mrb[0].mxu0
      %2604 = vmatprep.mubr.bf16.mxu0 0
      %2605 = vmatmul.mubr.bf16.gmra.mrb[0].mxu0 %v2517
      %v2606 = vpop.f32.mrb[0].mxu0
      %v2607 = vadd.f32 0.0, %v2606
      %v2608 = vpop.f32.mrb[0].mxu0
      %v2609 = vpop.f32.mrb[0].mxu0
      %v2610 = vadd.f32 0.0, %v2609
      %v2611 = vpop.f32.mrb[0].mxu0
      %2612 = vmatprep.mubr.bf16.mxu0 0
      %2613 = vmatmul.mubr.bf16.gmra.mrb[0].mxu0 %v2520
      %v2614 = vpop.f32.mrb[0].mxu0
      %v2615 = vadd.f32 0.0, %v2614
      %v2616 = vpop.f32.mrb[0].mxu0
      %v2617 = vpop.f32.mrb[0].mxu0
      %v2618 = vadd.f32 0.0, %v2617
      %v2619 = vpop.f32.mrb[0].mxu0
      %2620 = vmatprep.mubr.bf16.mxu0 0
      %2621 = vmatmul.mubr.bf16.gmra.mrb[0].mxu0 %v2523
      %v2622 = vpop.f32.mrb[0].mxu0
      %v2623 = vadd.f32 0.0, %v2622
      %v2624 = vpop.f32.mrb[0].mxu0
      %v2625 = vpop.f32.mrb[0].mxu0
      %v2626 = vadd.f32 0.0, %v2625
      %v2627 = vpop.f32.mrb[0].mxu0
      %2628 = vmatprep.mubr.bf16.mxu0 0
      %2629 = vmatmul.mubr.bf16.gmra.mrb[0].mxu0 %v2526
      %v2630 = vpop.f32.mrb[0].mxu0
      %v2631 = vadd.f32 0.0, %v2630
      %v2632 = vpop.f32.mrb[0].mxu0
      %v2633 = vpop.f32.mrb[0].mxu0
      %v2634 = vadd.f32 0.0, %v2633
      %v2635 = vpop.f32.mrb[0].mxu0
      %2636 = vmatprep.mubr.bf16.mxu0 0
      %2637 = vmatmul.mubr.bf16.gmra.mrb[0].mxu0 %v2529
      %v2638 = vpop.f32.mrb[0].mxu0
      %v2639 = vadd.f32 0.0, %v2638
      %v2640 = vpop.f32.mrb[0].mxu0
      %v2641 = vpop.f32.mrb[0].mxu0
      %v2642 = vadd.f32 0.0, %v2641
      %v2643 = vpop.f32.mrb[0].mxu0
      %2644 = vmatprep.mubr.bf16.mxu0 0
      %2645 = vmatmul.mubr.bf16.gmra.mrb[0].mxu0 %v2532
      %v2646 = vpop.f32.mrb[0].mxu0
      %v2647 = vadd.f32 0.0, %v2646
      %v2648 = vpop.f32.mrb[0].mxu0
      %v2649 = vpop.f32.mrb[0].mxu0
      %v2650 = vadd.f32 0.0, %v2649
      %v2651 = vpop.f32.mrb[0].mxu0
      %2652 = vmatprep.mubr.bf16.mxu0 0
      %2653 = vmatmul.mubr.bf16.gmra.mrb[0].mxu0 %v2535
      %v2654 = vpop.f32.mrb[0].mxu0
      %v2655 = vadd.f32 0.0, %v2654
      %v2656 = vpop.f32.mrb[0].mxu0
      %v2657 = vpop.f32.mrb[0].mxu0
      %v2658 = vadd.f32 0.0, %v2657
      %v2659 = vpop.f32.mrb[0].mxu0
      %2660 = vmatprep.mubr.bf16.mxu0 0
      %2661 = vmatmul.mubr.bf16.gmra.mrb[0].mxu0 %v2538
      %v2662 = vpop.f32.mrb[0].mxu0
      %v2663 = vadd.f32 0.0, %v2662
      %v2664 = vpop.f32.mrb[0].mxu0
      %v2665 = vpop.f32.mrb[0].mxu0
      %v2666 = vadd.f32 0.0, %v2665
      %v2667 = vpop.f32.mrb[0].mxu0
      %2668 = vmatprep.mubr.bf16.mxu0 0
      %2669 = vmatmul.mubr.bf16.gmra.mrb[0].mxu0 %v2541
      %v2670 = vpop.f32.mrb[0].mxu0
      %v2671 = vadd.f32 0.0, %v2670
      %v2672 = vpop.f32.mrb[0].mxu0
      %v2673 = vpop.f32.mrb[0].mxu0
      %v2674 = vadd.f32 0.0, %v2673
      %v2675 = vpop.f32.mrb[0].mxu0
      %2676 = vmatprep.mubr.bf16.mxu0 0
      %2677 = vmatmul.mubr.bf16.gmra.mrb[0].mxu0 %v2544
      %v2678 = vpop.f32.mrb[0].mxu0
      %v2679 = vadd.f32 0.0, %v2678
      %v2680 = vpop.f32.mrb[0].mxu0
      %v2681 = vpop.f32.mrb[0].mxu0
      %v2682 = vadd.f32 0.0, %v2681
      %v2683 = vpop.f32.mrb[0].mxu0
      %2684 = vmatprep.mubr.bf16.mxu0 0
      %2685 = vmatmul.mubr.bf16.gmra.mrb[0].mxu0 %v2547
      %v2686 = vpop.f32.mrb[0].mxu0
      %v2687 = vadd.f32 0.0, %v2686
      %v2688 = vpop.f32.mrb[0].mxu0
      %v2689 = vpop.f32.mrb[0].mxu0
      %v2690 = vadd.f32 0.0, %v2689
      %v2691 = vpop.f32.mrb[0].mxu0
      %2692 = vmatprep.mubr.bf16.mxu0 0
      %2693 = vmatmul.mubr.bf16.gmra.mrb[0].mxu0 %v2550
      %v2694 = vpop.f32.mrb[0].mxu0
      %v2695 = vadd.f32 0.0, %v2694
      %v2696 = vpop.f32.mrb[0].mxu0
      %v2697 = vpop.f32.mrb[0].mxu0
      %v2698 = vadd.f32 0.0, %v2697
      %v2699 = vpop.f32.mrb[0].mxu0
      %2700 = vmatprep.mubr.bf16.mxu0 0
      %2701 = vmatmul.mubr.bf16.gmra.mrb[0].mxu0 %v2553
      %v2702 = vpop.f32.mrb[0].mxu0
      %v2703 = vadd.f32 0.0, %v2702
      %v2704 = vpop.f32.mrb[0].mxu0
      %v2705 = vpop.f32.mrb[0].mxu0
      %v2706 = vadd.f32 0.0, %v2705
      %v2707 = vpop.f32.mrb[0].mxu0
      %2708 = vmatprep.mubr.bf16.mxu0 0
      %2709 = vmatmul.mubr.bf16.gmra.mrb[0].mxu0 %v2556
      %v2710 = vpop.f32.mrb[0].mxu0
      %v2711 = vadd.f32 0.0, %v2710
      %v2712 = vpop.f32.mrb[0].mxu0
      %v2713 = vpop.f32.mrb[0].mxu0
      %v2714 = vadd.f32 0.0, %v2713
      %v2715 = vpop.f32.mrb[0].mxu0
      %2716 = vmatprep.mubr.bf16.mxu0 0
      %2717 = vmatmul.mubr.bf16.gmra.mrb[0].mxu0 %v2559
      %v2718 = vpop.f32.mrb[0].mxu0
      %v2719 = vadd.f32 0.0, %v2718
      %v2720 = vpop.f32.mrb[0].mxu0
      %v2721 = vpop.f32.mrb[0].mxu0
      %v2722 = vadd.f32 0.0, %v2721
      %v2723 = vpop.f32.mrb[0].mxu0
      %2724 = vdwg.mxu0
      %v2725 = vadd.f32 %v1999, %v2599
      %v2726 = vadd.f32 %v2000, %v2602
      %v2727 = vadd.f32 %v2001, %v2607
      %v2728 = vadd.f32 %v2002, %v2610
      %v2729 = vadd.f32 %v2003, %v2615
      %v2730 = vadd.f32 %v2004, %v2618
      %v2731 = vadd.f32 %v2005, %v2623
      %v2732 = vadd.f32 %v2006, %v2626
      %v2733 = vadd.f32 %v2007, %v2631
      %v2734 = vadd.f32 %v2008, %v2634
      %v2735 = vadd.f32 %v2009, %v2639
      %v2736 = vadd.f32 %v2010, %v2642
      %v2737 = vadd.f32 %v2011, %v2647
      %v2738 = vadd.f32 %v2012, %v2650
      %v2739 = vadd.f32 %v2013, %v2655
      %v2740 = vadd.f32 %v2014, %v2658
      %v2741 = vadd.f32 %v2015, %v2663
      %v2742 = vadd.f32 %v2016, %v2666
      %v2743 = vadd.f32 %v2017, %v2671
      %v2744 = vadd.f32 %v2018, %v2674
      %v2745 = vadd.f32 %v2019, %v2679
      %v2746 = vadd.f32 %v2020, %v2682
      %v2747 = vadd.f32 %v2021, %v2687
      %v2748 = vadd.f32 %v2022, %v2690
      %v2749 = vadd.f32 %v2023, %v2695
      %v2750 = vadd.f32 %v2024, %v2698
      %v2751 = vadd.f32 %v2025, %v2703
      %v2752 = vadd.f32 %v2026, %v2706
      %v2753 = vadd.f32 %v2027, %v2711
      %v2754 = vadd.f32 %v2028, %v2714
      %v2755 = vadd.f32 %v2029, %v2719
      %v2756 = vadd.f32 %v2030, %v2722
      %v2757 = vld [vmem:[%s1672] sm:$0xe]
      %v2758 = vld [vmem:[%s1672 + $0xc] sm:$0xe]
      %v2759 = vld [vmem:[%s1672 + $0x18] sm:$0xe]
      %v2760 = vld [vmem:[%s1672 + $0x24] sm:$0xe]
      %v2761 = vld [vmem:[%s1672 + $0x30] sm:$0xe]
      %v2762 = vld [vmem:[%s1672 + $0x3c] sm:$0xe]
      %v2763 = vld [vmem:[%s1672 + $0x48] sm:$0xe]
      %v2764 = vld [vmem:[%s1672 + $0x54] sm:$0xe]
      %v2765 = vld [vmem:[%s1672 + $0x60] sm:$0xe]
      %v2766 = vld [vmem:[%s1672 + $0x6c] sm:$0xe]
      %v2767 = vld [vmem:[%s1672 + $0x78] sm:$0xe]
      %v2768 = vld [vmem:[%s1672 + $0x84] sm:$0xe]
      %v2769 = vld [vmem:[%s1672 + $0x90] sm:$0xe]
      %v2770 = vld [vmem:[%s1672 + $0x9c] sm:$0xe]
      %v2771 = vld [vmem:[%s1672 + $0xa8] sm:$0xe]
      %v2772 = vld [vmem:[%s1672 + $0xb4] sm:$0xe]
      %v2821 = vrot.slane %v2757, 5
      %v2822 = vrot.slane %v2821, 4
      %v2823 = vrot.slane %v2032, 5
      %v2824 = vsel %vm1265, %v2822, %v2823
      %v2825 = vrot.slane %v2823, 4
      %v2826 = vrot.slane %v2033, 5
      %v2827 = vsel %vm1265, %v2825, %v2826
      %v2828 = vrot.slane %v2758, 5
      %v2829 = vrot.slane %v2828, 4
      %v2830 = vrot.slane %v2035, 5
      %v2831 = vsel %vm1265, %v2829, %v2830
      %v2832 = vrot.slane %v2830, 4
      %v2833 = vrot.slane %v2036, 5
      %v2834 = vsel %vm1265, %v2832, %v2833
      %v2835 = vrot.slane %v2759, 5
      %v2836 = vrot.slane %v2835, 4
      %v2837 = vrot.slane %v2038, 5
      %v2838 = vsel %vm1265, %v2836, %v2837
      %v2839 = vrot.slane %v2837, 4
      %v2840 = vrot.slane %v2039, 5
      %v2841 = vsel %vm1265, %v2839, %v2840
      %v2842 = vrot.slane %v2760, 5
      %v2843 = vrot.slane %v2842, 4
      %v2844 = vrot.slane %v2041, 5
      %v2845 = vsel %vm1265, %v2843, %v2844
      %v2846 = vrot.slane %v2844, 4
      %v2847 = vrot.slane %v2042, 5
      %v2848 = vsel %vm1265, %v2846, %v2847
      %v2849 = vrot.slane %v2761, 5
      %v2850 = vrot.slane %v2849, 4
      %v2851 = vrot.slane %v2044, 5
      %v2852 = vsel %vm1265, %v2850, %v2851
      %v2853 = vrot.slane %v2851, 4
      %v2854 = vrot.slane %v2045, 5
      %v2855 = vsel %vm1265, %v2853, %v2854
      %v2856 = vrot.slane %v2762, 5
      %v2857 = vrot.slane %v2856, 4
      %v2858 = vrot.slane %v2047, 5
      %v2859 = vsel %vm1265, %v2857, %v2858
      %v2860 = vrot.slane %v2858, 4
      %v2861 = vrot.slane %v2048, 5
      %v2862 = vsel %vm1265, %v2860, %v2861
      %v2863 = vrot.slane %v2763, 5
      %v2864 = vrot.slane %v2863, 4
      %v2865 = vrot.slane %v2050, 5
      %v2866 = vsel %vm1265, %v2864, %v2865
      %v2867 = vrot.slane %v2865, 4
      %v2868 = vrot.slane %v2051, 5
      %v2869 = vsel %vm1265, %v2867, %v2868
      %v2870 = vrot.slane %v2764, 5
      %v2871 = vrot.slane %v2870, 4
      %v2872 = vrot.slane %v2053, 5
      %v2873 = vsel %vm1265, %v2871, %v2872
      %v2874 = vrot.slane %v2872, 4
      %v2875 = vrot.slane %v2054, 5
      %v2876 = vsel %vm1265, %v2874, %v2875
      %v2877 = vrot.slane %v2765, 5
      %v2878 = vrot.slane %v2877, 4
      %v2879 = vrot.slane %v2056, 5
      %v2880 = vsel %vm1265, %v2878, %v2879
      %v2881 = vrot.slane %v2879, 4
      %v2882 = vrot.slane %v2057, 5
      %v2883 = vsel %vm1265, %v2881, %v2882
      %v2884 = vrot.slane %v2766, 5
      %v2885 = vrot.slane %v2884, 4
      %v2886 = vrot.slane %v2059, 5
      %v2887 = vsel %vm1265, %v2885, %v2886
      %v2888 = vrot.slane %v2886, 4
      %v2889 = vrot.slane %v2060, 5
      %v2890 = vsel %vm1265, %v2888, %v2889
      %v2891 = vrot.slane %v2767, 5
      %v2892 = vrot.slane %v2891, 4
      %v2893 = vrot.slane %v2062, 5
      %v2894 = vsel %vm1265, %v2892, %v2893
      %v2895 = vrot.slane %v2893, 4
      %v2896 = vrot.slane %v2063, 5
      %v2897 = vsel %vm1265, %v2895, %v2896
      %v2898 = vrot.slane %v2768, 5
      %v2899 = vrot.slane %v2898, 4
      %v2900 = vrot.slane %v2065, 5
      %v2901 = vsel %vm1265, %v2899, %v2900
      %v2902 = vrot.slane %v2900, 4
      %v2903 = vrot.slane %v2066, 5
      %v2904 = vsel %vm1265, %v2902, %v2903
      %v2905 = vrot.slane %v2769, 5
      %v2906 = vrot.slane %v2905, 4
      %v2907 = vrot.slane %v2068, 5
      %v2908 = vsel %vm1265, %v2906, %v2907
      %v2909 = vrot.slane %v2907, 4
      %v2910 = vrot.slane %v2069, 5
      %v2911 = vsel %vm1265, %v2909, %v2910
      %v2912 = vrot.slane %v2770, 5
      %v2913 = vrot.slane %v2912, 4
      %v2914 = vrot.slane %v2071, 5
      %v2915 = vsel %vm1265, %v2913, %v2914
      %v2916 = vrot.slane %v2914, 4
      %v2917 = vrot.slane %v2072, 5
      %v2918 = vsel %vm1265, %v2916, %v2917
      %v2919 = vrot.slane %v2771, 5
      %v2920 = vrot.slane %v2919, 4
      %v2921 = vrot.slane %v2074, 5
      %v2922 = vsel %vm1265, %v2920, %v2921
      %v2923 = vrot.slane %v2921, 4
      %v2924 = vrot.slane %v2075, 5
      %v2925 = vsel %vm1265, %v2923, %v2924
      %v2926 = vrot.slane %v2772, 5
      %v2927 = vrot.slane %v2926, 4
      %v2928 = vrot.slane %v2077, 5
      %v2929 = vsel %vm1265, %v2927, %v2928
      %v2930 = vrot.slane %v2928, 4
      %v2931 = vrot.slane %v2078, 5
      %v2932 = vsel %vm1265, %v2930, %v2931
      %s2933 = scalar_lea.vmem %s210, 10
      %v2934 = vld [vmem:[%s2933] sm:$0x3]
      %v2935 = vunpack.c.l.b16 %v2824
      %v2936 = vunpack.c.l.b16 %v2827
      %v2937 = vunpack.c.l.b16 %v2831
      %v2938 = vunpack.c.l.b16 %v2834
      %v2939 = vunpack.c.l.b16 %v2838
      %v2940 = vunpack.c.l.b16 %v2841
      %v2941 = vunpack.c.l.b16 %v2845
      %v2942 = vunpack.c.l.b16 %v2848
      %v2943 = vunpack.c.l.b16 %v2852
      %v2944 = vunpack.c.l.b16 %v2855
      %v2945 = vunpack.c.l.b16 %v2859
      %v2946 = vunpack.c.l.b16 %v2862
      %v2947 = vunpack.c.l.b16 %v2866
      %v2948 = vunpack.c.l.b16 %v2869
      %v2949 = vunpack.c.l.b16 %v2873
      %v2950 = vunpack.c.l.b16 %v2876
      %v2951 = vunpack.c.l.b16 %v2880
      %v2952 = vunpack.c.l.b16 %v2883
      %v2953 = vunpack.c.l.b16 %v2887
      %v2954 = vunpack.c.l.b16 %v2890
      %v2955 = vunpack.c.l.b16 %v2894
      %v2956 = vunpack.c.l.b16 %v2897
      %v2957 = vunpack.c.l.b16 %v2901
      %v2958 = vunpack.c.l.b16 %v2904
      %v2959 = vunpack.c.l.b16 %v2908
      %v2960 = vunpack.c.l.b16 %v2911
      %v2961 = vunpack.c.l.b16 %v2915
      %v2962 = vunpack.c.l.b16 %v2918
      %v2963 = vunpack.c.l.b16 %v2922
      %v2964 = vunpack.c.l.b16 %v2925
      %v2965 = vunpack.c.l.b16 %v2929
      %v2966 = vunpack.c.l.b16 %v2932
      %v2967 = vpack.c.b16 %v2936, %v2935
      %v2968 = vpack.c.b16 %v2938, %v2937
      %v2969 = vpack.c.b16 %v2940, %v2939
      %v2970 = vpack.c.b16 %v2942, %v2941
      %v2971 = vpack.c.b16 %v2944, %v2943
      %v2972 = vpack.c.b16 %v2946, %v2945
      %v2973 = vpack.c.b16 %v2948, %v2947
      %v2974 = vpack.c.b16 %v2950, %v2949
      %v2975 = vpack.c.b16 %v2952, %v2951
      %v2976 = vpack.c.b16 %v2954, %v2953
      %v2977 = vpack.c.b16 %v2956, %v2955
      %v2978 = vpack.c.b16 %v2958, %v2957
      %v2979 = vpack.c.b16 %v2960, %v2959
      %v2980 = vpack.c.b16 %v2962, %v2961
      %v2981 = vpack.c.b16 %v2964, %v2963
      %v2982 = vpack.c.b16 %v2966, %v2965
      %v2984 = vsel %vm709, %v2967, 0
      %v2987 = vsel %vm709, %v2968, 0
      %v2990 = vsel %vm709, %v2969, 0
      %v2993 = vsel %vm709, %v2970, 0
      %v2996 = vsel %vm709, %v2971, 0
      %v2999 = vsel %vm709, %v2972, 0
      %v3002 = vsel %vm709, %v2973, 0
      %v3005 = vsel %vm709, %v2974, 0
      %v3008 = vsel %vm709, %v2975, 0
      %v3011 = vsel %vm709, %v2976, 0
      %v3014 = vsel %vm709, %v2977, 0
      %v3017 = vsel %vm709, %v2978, 0
      %v3020 = vsel %vm709, %v2979, 0
      %v3023 = vsel %vm709, %v2980, 0
      %v3026 = vsel %vm709, %v2981, 0
      %v3029 = vsel %vm709, %v2982, 0
      %v3032 = vsel %vm758, %v2934, 0
      %3034 = vmatprep.subr.bf16.mxu0 0
      %3035 = vmatpush1.bf16.msra.mxu0 %v3032
      %3036 = vmatprep.subr.bf16.mxu0 0
      %3037 = vmatpush1.bf16.msra.mxu0 0
      %3038 = vmatprep.subr.bf16.mxu0 0
      %3039 = vmatpush1.bf16.msra.mxu0 0
      %3040 = vmatprep.subr.bf16.mxu0 0
      %3041 = vmatpush1.bf16.msra.mxu0 0
      %3042 = vmatprep.subr.bf16.mxu0 0
      %3043 = vmatpush1.bf16.msra.mxu0 0
      %3044 = vmatprep.subr.bf16.mxu0 0
      %3045 = vmatpush1.bf16.msra.mxu0 0
      %3046 = vmatprep.subr.bf16.mxu0 0
      %3047 = vmatpush1.bf16.msra.mxu0 0
      %3048 = vmatprep.subr.bf16.mxu0 0
      %3049 = vmatpush1.bf16.msra.mxu0 0
      %3050 = vmatprep.subr.bf16.mxu0 0
      %3051 = vmatpush1.bf16.msra.mxu0 0
      %3052 = vmatprep.subr.bf16.mxu0 0
      %3053 = vmatpush1.bf16.msra.mxu0 0
      %3054 = vmatprep.subr.bf16.mxu0 0
      %3055 = vmatpush1.bf16.msra.mxu0 0
      %3056 = vmatprep.subr.bf16.mxu0 0
      %3057 = vmatpush1.bf16.msra.mxu0 0
      %3058 = vmatprep.subr.bf16.mxu0 0
      %3059 = vmatpush1.bf16.msra.mxu0 0
      %3060 = vmatprep.subr.bf16.mxu0 0
      %3061 = vmatpush1.bf16.msra.mxu0 0
      %3062 = vmatprep.subr.bf16.mxu0 0
      %3063 = vmatpush1.bf16.msra.mxu0 0
      %3064 = vmatprep.subr.bf16.mxu0 0
      %3065 = vmatpush1.bf16.msra.mxu0 0
      %3066 = vmatprep.mubr.bf16.mxu0 0
      %3067 = vmatmul.mubr.bf16.gmra.mrb[0].mxu0 %v2984
      %v3068 = vpop.f32.mrb[0].mxu0
      %v3069 = vadd.f32 0.0, %v3068
      %v3070 = vpop.f32.mrb[0].mxu0
      %v3071 = vpop.f32.mrb[0].mxu0
      %v3072 = vadd.f32 0.0, %v3071
      %v3073 = vpop.f32.mrb[0].mxu0
      %3074 = vmatprep.mubr.bf16.mxu0 0
      %3075 = vmatmul.mubr.bf16.gmra.mrb[0].mxu0 %v2987
      %v3076 = vpop.f32.mrb[0].mxu0
      %v3077 = vadd.f32 0.0, %v3076
      %v3078 = vpop.f32.mrb[0].mxu0
      %v3079 = vpop.f32.mrb[0].mxu0
      %v3080 = vadd.f32 0.0, %v3079
      %v3081 = vpop.f32.mrb[0].mxu0
      %3082 = vmatprep.mubr.bf16.mxu0 0
      %3083 = vmatmul.mubr.bf16.gmra.mrb[0].mxu0 %v2990
      %v3084 = vpop.f32.mrb[0].mxu0
      %v3085 = vadd.f32 0.0, %v3084
      %v3086 = vpop.f32.mrb[0].mxu0
      %v3087 = vpop.f32.mrb[0].mxu0
      %v3088 = vadd.f32 0.0, %v3087
      %v3089 = vpop.f32.mrb[0].mxu0
      %3090 = vmatprep.mubr.bf16.mxu0 0
      %3091 = vmatmul.mubr.bf16.gmra.mrb[0].mxu0 %v2993
      %v3092 = vpop.f32.mrb[0].mxu0
      %v3093 = vadd.f32 0.0, %v3092
      %v3094 = vpop.f32.mrb[0].mxu0
      %v3095 = vpop.f32.mrb[0].mxu0
      %v3096 = vadd.f32 0.0, %v3095
      %v3097 = vpop.f32.mrb[0].mxu0
      %3098 = vmatprep.mubr.bf16.mxu0 0
      %3099 = vmatmul.mubr.bf16.gmra.mrb[0].mxu0 %v2996
      %v3100 = vpop.f32.mrb[0].mxu0
      %v3101 = vadd.f32 0.0, %v3100
      %v3102 = vpop.f32.mrb[0].mxu0
      %v3103 = vpop.f32.mrb[0].mxu0
      %v3104 = vadd.f32 0.0, %v3103
      %v3105 = vpop.f32.mrb[0].mxu0
      %3106 = vmatprep.mubr.bf16.mxu0 0
      %3107 = vmatmul.mubr.bf16.gmra.mrb[0].mxu0 %v2999
      %v3108 = vpop.f32.mrb[0].mxu0
      %v3109 = vadd.f32 0.0, %v3108
      %v3110 = vpop.f32.mrb[0].mxu0
      %v3111 = vpop.f32.mrb[0].mxu0
      %v3112 = vadd.f32 0.0, %v3111
      %v3113 = vpop.f32.mrb[0].mxu0
      %3114 = vmatprep.mubr.bf16.mxu0 0
      %3115 = vmatmul.mubr.bf16.gmra.mrb[0].mxu0 %v3002
      %v3116 = vpop.f32.mrb[0].mxu0
      %v3117 = vadd.f32 0.0, %v3116
      %v3118 = vpop.f32.mrb[0].mxu0
      %v3119 = vpop.f32.mrb[0].mxu0
      %v3120 = vadd.f32 0.0, %v3119
      %v3121 = vpop.f32.mrb[0].mxu0
      %3122 = vmatprep.mubr.bf16.mxu0 0
      %3123 = vmatmul.mubr.bf16.gmra.mrb[0].mxu0 %v3005
      %v3124 = vpop.f32.mrb[0].mxu0
      %v3125 = vadd.f32 0.0, %v3124
      %v3126 = vpop.f32.mrb[0].mxu0
      %v3127 = vpop.f32.mrb[0].mxu0
      %v3128 = vadd.f32 0.0, %v3127
      %v3129 = vpop.f32.mrb[0].mxu0
      %3130 = vmatprep.mubr.bf16.mxu0 0
      %3131 = vmatmul.mubr.bf16.gmra.mrb[0].mxu0 %v3008
      %v3132 = vpop.f32.mrb[0].mxu0
      %v3133 = vadd.f32 0.0, %v3132
      %v3134 = vpop.f32.mrb[0].mxu0
      %v3135 = vpop.f32.mrb[0].mxu0
      %v3136 = vadd.f32 0.0, %v3135
      %v3137 = vpop.f32.mrb[0].mxu0
      %3138 = vmatprep.mubr.bf16.mxu0 0
      %3139 = vmatmul.mubr.bf16.gmra.mrb[0].mxu0 %v3011
      %v3140 = vpop.f32.mrb[0].mxu0
      %v3141 = vadd.f32 0.0, %v3140
      %v3142 = vpop.f32.mrb[0].mxu0
      %v3143 = vpop.f32.mrb[0].mxu0
      %v3144 = vadd.f32 0.0, %v3143
      %v3145 = vpop.f32.mrb[0].mxu0
      %3146 = vmatprep.mubr.bf16.mxu0 0
      %3147 = vmatmul.mubr.bf16.gmra.mrb[0].mxu0 %v3014
      %v3148 = vpop.f32.mrb[0].mxu0
      %v3149 = vadd.f32 0.0, %v3148
      %v3150 = vpop.f32.mrb[0].mxu0
      %v3151 = vpop.f32.mrb[0].mxu0
      %v3152 = vadd.f32 0.0, %v3151
      %v3153 = vpop.f32.mrb[0].mxu0
      %3154 = vmatprep.mubr.bf16.mxu0 0
      %3155 = vmatmul.mubr.bf16.gmra.mrb[0].mxu0 %v3017
      %v3156 = vpop.f32.mrb[0].mxu0
      %v3157 = vadd.f32 0.0, %v3156
      %v3158 = vpop.f32.mrb[0].mxu0
      %v3159 = vpop.f32.mrb[0].mxu0
      %v3160 = vadd.f32 0.0, %v3159
      %v3161 = vpop.f32.mrb[0].mxu0
      %3162 = vmatprep.mubr.bf16.mxu0 0
      %3163 = vmatmul.mubr.bf16.gmra.mrb[0].mxu0 %v3020
      %v3164 = vpop.f32.mrb[0].mxu0
      %v3165 = vadd.f32 0.0, %v3164
      %v3166 = vpop.f32.mrb[0].mxu0
      %v3167 = vpop.f32.mrb[0].mxu0
      %v3168 = vadd.f32 0.0, %v3167
      %v3169 = vpop.f32.mrb[0].mxu0
      %3170 = vmatprep.mubr.bf16.mxu0 0
      %3171 = vmatmul.mubr.bf16.gmra.mrb[0].mxu0 %v3023
      %v3172 = vpop.f32.mrb[0].mxu0
      %v3173 = vadd.f32 0.0, %v3172
      %v3174 = vpop.f32.mrb[0].mxu0
      %v3175 = vpop.f32.mrb[0].mxu0
      %v3176 = vadd.f32 0.0, %v3175
      %v3177 = vpop.f32.mrb[0].mxu0
      %3178 = vmatprep.mubr.bf16.mxu0 0
      %3179 = vmatmul.mubr.bf16.gmra.mrb[0].mxu0 %v3026
      %v3180 = vpop.f32.mrb[0].mxu0
      %v3181 = vadd.f32 0.0, %v3180
      %v3182 = vpop.f32.mrb[0].mxu0
      %v3183 = vpop.f32.mrb[0].mxu0
      %v3184 = vadd.f32 0.0, %v3183
      %v3185 = vpop.f32.mrb[0].mxu0
      %3186 = vmatprep.mubr.bf16.mxu0 0
      %3187 = vmatmul.mubr.bf16.gmra.mrb[0].mxu0 %v3029
      %v3188 = vpop.f32.mrb[0].mxu0
      %v3189 = vadd.f32 0.0, %v3188
      %v3190 = vpop.f32.mrb[0].mxu0
      %v3191 = vpop.f32.mrb[0].mxu0
      %v3192 = vadd.f32 0.0, %v3191
      %v3193 = vpop.f32.mrb[0].mxu0
      %3194 = vdwg.mxu0
      %v3195 = vadd.f32 %v2725, %v3069
      %v3196 = vadd.f32 %v2726, %v3072
      %v3197 = vadd.f32 %v2727, %v3077
      %v3198 = vadd.f32 %v2728, %v3080
      %v3199 = vadd.f32 %v2729, %v3085
      %v3200 = vadd.f32 %v2730, %v3088
      %v3201 = vadd.f32 %v2731, %v3093
      %v3202 = vadd.f32 %v2732, %v3096
      %v3203 = vadd.f32 %v2733, %v3101
      %v3204 = vadd.f32 %v2734, %v3104
      %v3205 = vadd.f32 %v2735, %v3109
      %v3206 = vadd.f32 %v2736, %v3112
      %v3207 = vadd.f32 %v2737, %v3117
      %v3208 = vadd.f32 %v2738, %v3120
      %v3209 = vadd.f32 %v2739, %v3125
      %v3210 = vadd.f32 %v2740, %v3128
      %v3211 = vadd.f32 %v2741, %v3133
      %v3212 = vadd.f32 %v2742, %v3136
      %v3213 = vadd.f32 %v2743, %v3141
      %v3214 = vadd.f32 %v2744, %v3144
      %v3215 = vadd.f32 %v2745, %v3149
      %v3216 = vadd.f32 %v2746, %v3152
      %v3217 = vadd.f32 %v2747, %v3157
      %v3218 = vadd.f32 %v2748, %v3160
      %v3219 = vadd.f32 %v2749, %v3165
      %v3220 = vadd.f32 %v2750, %v3168
      %v3221 = vadd.f32 %v2751, %v3173
      %v3222 = vadd.f32 %v2752, %v3176
      %v3223 = vadd.f32 %v2753, %v3181
      %v3224 = vadd.f32 %v2754, %v3184
      %v3225 = vadd.f32 %v2755, %v3189
      %v3226 = vadd.f32 %v2756, %v3192
      %s3227 = scalar_lea.vmem %s206, 24
      %v3228 = vld [vmem:[%s3227] sm:$0xf]
      %v3229 = vld [vmem:[%s3227 + $0x4] sm:$0xf]
      %v3230 = vld [vmem:[%s3227 + $0xc] sm:$0xf]
      %v3231 = vld [vmem:[%s3227 + $0x10] sm:$0xf]
      %v3232 = vld [vmem:[%s3227 + $0x18] sm:$0xf]
      %v3233 = vld [vmem:[%s3227 + $0x1c] sm:$0xf]
      %v3234 = vld [vmem:[%s3227 + $0x24] sm:$0xf]
      %v3235 = vld [vmem:[%s3227 + $0x28] sm:$0xf]
      %v3236 = vld [vmem:[%s3227 + $0x30] sm:$0xf]
      %v3237 = vld [vmem:[%s3227 + $0x34] sm:$0xf]
      %v3238 = vld [vmem:[%s3227 + $0x3c] sm:$0xf]
      %v3239 = vld [vmem:[%s3227 + $0x40] sm:$0xf]
      %v3240 = vld [vmem:[%s3227 + $0x48] sm:$0xf]
      %v3241 = vld [vmem:[%s3227 + $0x4c] sm:$0xf]
      %v3242 = vld [vmem:[%s3227 + $0x54] sm:$0xf]
      %v3243 = vld [vmem:[%s3227 + $0x58] sm:$0xf]
      %v3244 = vld [vmem:[%s3227 + $0x60] sm:$0xf]
      %v3245 = vld [vmem:[%s3227 + $0x64] sm:$0xf]
      %v3246 = vld [vmem:[%s3227 + $0x6c] sm:$0xf]
      %v3247 = vld [vmem:[%s3227 + $0x70] sm:$0xf]
      %v3248 = vld [vmem:[%s3227 + $0x78] sm:$0xf]
      %v3249 = vld [vmem:[%s3227 + $0x7c] sm:$0xf]
      %v3250 = vld [vmem:[%s3227 + $0x84] sm:$0xf]
      %v3251 = vld [vmem:[%s3227 + $0x88] sm:$0xf]
      %v3252 = vld [vmem:[%s3227 + $0x90] sm:$0xf]
      %v3253 = vld [vmem:[%s3227 + $0x94] sm:$0xf]
      %v3254 = vld [vmem:[%s3227 + $0x9c] sm:$0xf]
      %v3255 = vld [vmem:[%s3227 + $0xa0] sm:$0xf]
      %v3256 = vld [vmem:[%s3227 + $0xa8] sm:$0xf]
      %v3257 = vld [vmem:[%s3227 + $0xac] sm:$0xf]
      %v3258 = vld [vmem:[%s3227 + $0xb4] sm:$0xf]
      %v3259 = vld [vmem:[%s3227 + $0xb8] sm:$0xf]
      %s3260 = scalar_lea.vmem %s210, 12
      %v3261 = vld [vmem:[%s3260] sm:$0x3]
      %v3294 = vunpack.c.l.b16 %v3228
      %v3295 = vunpack.c.l.b16 %v3229
      %v3296 = vunpack.c.l.b16 %v3230
      %v3297 = vunpack.c.l.b16 %v3231
      %v3298 = vunpack.c.l.b16 %v3232
      %v3299 = vunpack.c.l.b16 %v3233
      %v3300 = vunpack.c.l.b16 %v3234
      %v3301 = vunpack.c.l.b16 %v3235
      %v3302 = vunpack.c.l.b16 %v3236
      %v3303 = vunpack.c.l.b16 %v3237
      %v3304 = vunpack.c.l.b16 %v3238
      %v3305 = vunpack.c.l.b16 %v3239
      %v3306 = vunpack.c.l.b16 %v3240
      %v3307 = vunpack.c.l.b16 %v3241
      %v3308 = vunpack.c.l.b16 %v3242
      %v3309 = vunpack.c.l.b16 %v3243
      %v3310 = vunpack.c.l.b16 %v3244
      %v3311 = vunpack.c.l.b16 %v3245
      %v3312 = vunpack.c.l.b16 %v3246
      %v3313 = vunpack.c.l.b16 %v3247
      %v3314 = vunpack.c.l.b16 %v3248
      %v3315 = vunpack.c.l.b16 %v3249
      %v3316 = vunpack.c.l.b16 %v3250
      %v3317 = vunpack.c.l.b16 %v3251
      %v3318 = vunpack.c.l.b16 %v3252
      %v3319 = vunpack.c.l.b16 %v3253
      %v3320 = vunpack.c.l.b16 %v3254
      %v3321 = vunpack.c.l.b16 %v3255
      %v3322 = vunpack.c.l.b16 %v3256
      %v3323 = vunpack.c.l.b16 %v3257
      %v3324 = vunpack.c.l.b16 %v3258
      %v3325 = vunpack.c.l.b16 %v3259
      %v3326 = vpack.c.b16 %v3295, %v3294
      %v3327 = vpack.c.b16 %v3297, %v3296
      %v3328 = vpack.c.b16 %v3299, %v3298
      %v3329 = vpack.c.b16 %v3301, %v3300
      %v3330 = vpack.c.b16 %v3303, %v3302
      %v3331 = vpack.c.b16 %v3305, %v3304
      %v3332 = vpack.c.b16 %v3307, %v3306
      %v3333 = vpack.c.b16 %v3309, %v3308
      %v3334 = vpack.c.b16 %v3311, %v3310
      %v3335 = vpack.c.b16 %v3313, %v3312
      %v3336 = vpack.c.b16 %v3315, %v3314
      %v3337 = vpack.c.b16 %v3317, %v3316
      %v3338 = vpack.c.b16 %v3319, %v3318
      %v3339 = vpack.c.b16 %v3321, %v3320
      %v3340 = vpack.c.b16 %v3323, %v3322
      %v3341 = vpack.c.b16 %v3325, %v3324
      %v3343 = vsel %vm709, %v3326, 0
      %v3346 = vsel %vm709, %v3327, 0
      %v3349 = vsel %vm709, %v3328, 0
      %v3352 = vsel %vm709, %v3329, 0
      %v3355 = vsel %vm709, %v3330, 0
      %v3358 = vsel %vm709, %v3331, 0
      %v3361 = vsel %vm709, %v3332, 0
      %v3364 = vsel %vm709, %v3333, 0
      %v3367 = vsel %vm709, %v3334, 0
      %v3370 = vsel %vm709, %v3335, 0
      %v3373 = vsel %vm709, %v3336, 0
      %v3376 = vsel %vm709, %v3337, 0
      %v3379 = vsel %vm709, %v3338, 0
      %v3382 = vsel %vm709, %v3339, 0
      %v3385 = vsel %vm709, %v3340, 0
      %v3388 = vsel %vm709, %v3341, 0
      %v3391 = vsel %vm758, %v3261, 0
      %3393 = vmatprep.subr.bf16.mxu0 0
      %3394 = vmatpush1.bf16.msra.mxu0 %v3391
      %3395 = vmatprep.subr.bf16.mxu0 0
      %3396 = vmatpush1.bf16.msra.mxu0 0
      %3397 = vmatprep.subr.bf16.mxu0 0
      %3398 = vmatpush1.bf16.msra.mxu0 0
      %3399 = vmatprep.subr.bf16.mxu0 0
      %3400 = vmatpush1.bf16.msra.mxu0 0
      %3401 = vmatprep.subr.bf16.mxu0 0
      %3402 = vmatpush1.bf16.msra.mxu0 0
      %3403 = vmatprep.subr.bf16.mxu0 0
      %3404 = vmatpush1.bf16.msra.mxu0 0
      %3405 = vmatprep.subr.bf16.mxu0 0
      %3406 = vmatpush1.bf16.msra.mxu0 0
      %3407 = vmatprep.subr.bf16.mxu0 0
      %3408 = vmatpush1.bf16.msra.mxu0 0
      %3409 = vmatprep.subr.bf16.mxu0 0
      %3410 = vmatpush1.bf16.msra.mxu0 0
      %3411 = vmatprep.subr.bf16.mxu0 0
      %3412 = vmatpush1.bf16.msra.mxu0 0
      %3413 = vmatprep.subr.bf16.mxu0 0
      %3414 = vmatpush1.bf16.msra.mxu0 0
      %3415 = vmatprep.subr.bf16.mxu0 0
      %3416 = vmatpush1.bf16.msra.mxu0 0
      %3417 = vmatprep.subr.bf16.mxu0 0
      %3418 = vmatpush1.bf16.msra.mxu0 0
      %3419 = vmatprep.subr.bf16.mxu0 0
      %3420 = vmatpush1.bf16.msra.mxu0 0
      %3421 = vmatprep.subr.bf16.mxu0 0
      %3422 = vmatpush1.bf16.msra.mxu0 0
      %3423 = vmatprep.subr.bf16.mxu0 0
      %3424 = vmatpush1.bf16.msra.mxu0 0
      %3425 = vmatprep.mubr.bf16.mxu0 0
      %3426 = vmatmul.mubr.bf16.gmra.mrb[0].mxu0 %v3343
      %v3427 = vpop.f32.mrb[0].mxu0
      %v3428 = vadd.f32 0.0, %v3427
      %v3429 = vpop.f32.mrb[0].mxu0
      %v3430 = vpop.f32.mrb[0].mxu0
      %v3431 = vadd.f32 0.0, %v3430
      %v3432 = vpop.f32.mrb[0].mxu0
      %3433 = vmatprep.mubr.bf16.mxu0 0
      %3434 = vmatmul.mubr.bf16.gmra.mrb[0].mxu0 %v3346
      %v3435 = vpop.f32.mrb[0].mxu0
      %v3436 = vadd.f32 0.0, %v3435
      %v3437 = vpop.f32.mrb[0].mxu0
      %v3438 = vpop.f32.mrb[0].mxu0
      %v3439 = vadd.f32 0.0, %v3438
      %v3440 = vpop.f32.mrb[0].mxu0
      %3441 = vmatprep.mubr.bf16.mxu0 0
      %3442 = vmatmul.mubr.bf16.gmra.mrb[0].mxu0 %v3349
      %v3443 = vpop.f32.mrb[0].mxu0
      %v3444 = vadd.f32 0.0, %v3443
      %v3445 = vpop.f32.mrb[0].mxu0
      %v3446 = vpop.f32.mrb[0].mxu0
      %v3447 = vadd.f32 0.0, %v3446
      %v3448 = vpop.f32.mrb[0].mxu0
      %3449 = vmatprep.mubr.bf16.mxu0 0
      %3450 = vmatmul.mubr.bf16.gmra.mrb[0].mxu0 %v3352
      %v3451 = vpop.f32.mrb[0].mxu0
      %v3452 = vadd.f32 0.0, %v3451
      %v3453 = vpop.f32.mrb[0].mxu0
      %v3454 = vpop.f32.mrb[0].mxu0
      %v3455 = vadd.f32 0.0, %v3454
      %v3456 = vpop.f32.mrb[0].mxu0
      %3457 = vmatprep.mubr.bf16.mxu0 0
      %3458 = vmatmul.mubr.bf16.gmra.mrb[0].mxu0 %v3355
      %v3459 = vpop.f32.mrb[0].mxu0
      %v3460 = vadd.f32 0.0, %v3459
      %v3461 = vpop.f32.mrb[0].mxu0
      %v3462 = vpop.f32.mrb[0].mxu0
      %v3463 = vadd.f32 0.0, %v3462
      %v3464 = vpop.f32.mrb[0].mxu0
      %3465 = vmatprep.mubr.bf16.mxu0 0
      %3466 = vmatmul.mubr.bf16.gmra.mrb[0].mxu0 %v3358
      %v3467 = vpop.f32.mrb[0].mxu0
      %v3468 = vadd.f32 0.0, %v3467
      %v3469 = vpop.f32.mrb[0].mxu0
      %v3470 = vpop.f32.mrb[0].mxu0
      %v3471 = vadd.f32 0.0, %v3470
      %v3472 = vpop.f32.mrb[0].mxu0
      %3473 = vmatprep.mubr.bf16.mxu0 0
      %3474 = vmatmul.mubr.bf16.gmra.mrb[0].mxu0 %v3361
      %v3475 = vpop.f32.mrb[0].mxu0
      %v3476 = vadd.f32 0.0, %v3475
      %v3477 = vpop.f32.mrb[0].mxu0
      %v3478 = vpop.f32.mrb[0].mxu0
      %v3479 = vadd.f32 0.0, %v3478
      %v3480 = vpop.f32.mrb[0].mxu0
      %3481 = vmatprep.mubr.bf16.mxu0 0
      %3482 = vmatmul.mubr.bf16.gmra.mrb[0].mxu0 %v3364
      %v3483 = vpop.f32.mrb[0].mxu0
      %v3484 = vadd.f32 0.0, %v3483
      %v3485 = vpop.f32.mrb[0].mxu0
      %v3486 = vpop.f32.mrb[0].mxu0
      %v3487 = vadd.f32 0.0, %v3486
      %v3488 = vpop.f32.mrb[0].mxu0
      %3489 = vmatprep.mubr.bf16.mxu0 0
      %3490 = vmatmul.mubr.bf16.gmra.mrb[0].mxu0 %v3367
      %v3491 = vpop.f32.mrb[0].mxu0
      %v3492 = vadd.f32 0.0, %v3491
      %v3493 = vpop.f32.mrb[0].mxu0
      %v3494 = vpop.f32.mrb[0].mxu0
      %v3495 = vadd.f32 0.0, %v3494
      %v3496 = vpop.f32.mrb[0].mxu0
      %3497 = vmatprep.mubr.bf16.mxu0 0
      %3498 = vmatmul.mubr.bf16.gmra.mrb[0].mxu0 %v3370
      %v3499 = vpop.f32.mrb[0].mxu0
      %v3500 = vadd.f32 0.0, %v3499
      %v3501 = vpop.f32.mrb[0].mxu0
      %v3502 = vpop.f32.mrb[0].mxu0
      %v3503 = vadd.f32 0.0, %v3502
      %v3504 = vpop.f32.mrb[0].mxu0
      %3505 = vmatprep.mubr.bf16.mxu0 0
      %3506 = vmatmul.mubr.bf16.gmra.mrb[0].mxu0 %v3373
      %v3507 = vpop.f32.mrb[0].mxu0
      %v3508 = vadd.f32 0.0, %v3507
      %v3509 = vpop.f32.mrb[0].mxu0
      %v3510 = vpop.f32.mrb[0].mxu0
      %v3511 = vadd.f32 0.0, %v3510
      %v3512 = vpop.f32.mrb[0].mxu0
      %3513 = vmatprep.mubr.bf16.mxu0 0
      %3514 = vmatmul.mubr.bf16.gmra.mrb[0].mxu0 %v3376
      %v3515 = vpop.f32.mrb[0].mxu0
      %v3516 = vadd.f32 0.0, %v3515
      %v3517 = vpop.f32.mrb[0].mxu0
      %v3518 = vpop.f32.mrb[0].mxu0
      %v3519 = vadd.f32 0.0, %v3518
      %v3520 = vpop.f32.mrb[0].mxu0
      %3521 = vmatprep.mubr.bf16.mxu0 0
      %3522 = vmatmul.mubr.bf16.gmra.mrb[0].mxu0 %v3379
      %v3523 = vpop.f32.mrb[0].mxu0
      %v3524 = vadd.f32 0.0, %v3523
      %v3525 = vpop.f32.mrb[0].mxu0
      %v3526 = vpop.f32.mrb[0].mxu0
      %v3527 = vadd.f32 0.0, %v3526
      %v3528 = vpop.f32.mrb[0].mxu0
      %3529 = vmatprep.mubr.bf16.mxu0 0
      %3530 = vmatmul.mubr.bf16.gmra.mrb[0].mxu0 %v3382
      %v3531 = vpop.f32.mrb[0].mxu0
      %v3532 = vadd.f32 0.0, %v3531
      %v3533 = vpop.f32.mrb[0].mxu0
      %v3534 = vpop.f32.mrb[0].mxu0
      %v3535 = vadd.f32 0.0, %v3534
      %v3536 = vpop.f32.mrb[0].mxu0
      %3537 = vmatprep.mubr.bf16.mxu0 0
      %3538 = vmatmul.mubr.bf16.gmra.mrb[0].mxu0 %v3385
      %v3539 = vpop.f32.mrb[0].mxu0
      %v3540 = vadd.f32 0.0, %v3539
      %v3541 = vpop.f32.mrb[0].mxu0
      %v3542 = vpop.f32.mrb[0].mxu0
      %v3543 = vadd.f32 0.0, %v3542
      %v3544 = vpop.f32.mrb[0].mxu0
      %3545 = vmatprep.mubr.bf16.mxu0 0
      %3546 = vmatmul.mubr.bf16.gmra.mrb[0].mxu0 %v3388
      %v3547 = vpop.f32.mrb[0].mxu0
      %v3548 = vadd.f32 0.0, %v3547
      %v3549 = vpop.f32.mrb[0].mxu0
      %v3550 = vpop.f32.mrb[0].mxu0
      %v3551 = vadd.f32 0.0, %v3550
      %v3552 = vpop.f32.mrb[0].mxu0
      %3553 = vdwg.mxu0
      %v3554 = vadd.f32 %v3195, %v3428
      %v3555 = vadd.f32 %v3196, %v3431
      %v3556 = vadd.f32 %v3197, %v3436
      %v3557 = vadd.f32 %v3198, %v3439
      %v3558 = vadd.f32 %v3199, %v3444
      %v3559 = vadd.f32 %v3200, %v3447
      %v3560 = vadd.f32 %v3201, %v3452
      %v3561 = vadd.f32 %v3202, %v3455
      %v3562 = vadd.f32 %v3203, %v3460
      %v3563 = vadd.f32 %v3204, %v3463
      %v3564 = vadd.f32 %v3205, %v3468
      %v3565 = vadd.f32 %v3206, %v3471
      %v3566 = vadd.f32 %v3207, %v3476
      %v3567 = vadd.f32 %v3208, %v3479
      %v3568 = vadd.f32 %v3209, %v3484
      %v3569 = vadd.f32 %v3210, %v3487
      %v3570 = vadd.f32 %v3211, %v3492
      %v3571 = vadd.f32 %v3212, %v3495
      %v3572 = vadd.f32 %v3213, %v3500
      %v3573 = vadd.f32 %v3214, %v3503
      %v3574 = vadd.f32 %v3215, %v3508
      %v3575 = vadd.f32 %v3216, %v3511
      %v3576 = vadd.f32 %v3217, %v3516
      %v3577 = vadd.f32 %v3218, %v3519
      %v3578 = vadd.f32 %v3219, %v3524
      %v3579 = vadd.f32 %v3220, %v3527
      %v3580 = vadd.f32 %v3221, %v3532
      %v3581 = vadd.f32 %v3222, %v3535
      %v3582 = vadd.f32 %v3223, %v3540
      %v3583 = vadd.f32 %v3224, %v3543
      %v3584 = vadd.f32 %v3225, %v3548
      %v3585 = vadd.f32 %v3226, %v3551
      %v3586 = vld [vmem:[%s3227] sm:$0xf]
      %v3587 = vld [vmem:[%s3227 + $0x4] sm:$0xf]
      %v3588 = vld [vmem:[%s3227 + $0x8] sm:$0x1]
      %v3589 = vld [vmem:[%s3227 + $0xc] sm:$0xf]
      %v3590 = vld [vmem:[%s3227 + $0x10] sm:$0xf]
      %v3591 = vld [vmem:[%s3227 + $0x14] sm:$0x1]
      %v3592 = vld [vmem:[%s3227 + $0x18] sm:$0xf]
      %v3593 = vld [vmem:[%s3227 + $0x1c] sm:$0xf]
      %v3594 = vld [vmem:[%s3227 + $0x20] sm:$0x1]
      %v3595 = vld [vmem:[%s3227 + $0x24] sm:$0xf]
      %v3596 = vld [vmem:[%s3227 + $0x28] sm:$0xf]
      %v3597 = vld [vmem:[%s3227 + $0x2c] sm:$0x1]
      %v3598 = vld [vmem:[%s3227 + $0x30] sm:$0xf]
      %v3599 = vld [vmem:[%s3227 + $0x34] sm:$0xf]
      %v3600 = vld [vmem:[%s3227 + $0x38] sm:$0x1]
      %v3601 = vld [vmem:[%s3227 + $0x3c] sm:$0xf]
      %v3602 = vld [vmem:[%s3227 + $0x40] sm:$0xf]
      %v3603 = vld [vmem:[%s3227 + $0x44] sm:$0x1]
      %v3604 = vld [vmem:[%s3227 + $0x48] sm:$0xf]
      %v3605 = vld [vmem:[%s3227 + $0x4c] sm:$0xf]
      %v3606 = vld [vmem:[%s3227 + $0x50] sm:$0x1]
      %v3607 = vld [vmem:[%s3227 + $0x54] sm:$0xf]
      %v3608 = vld [vmem:[%s3227 + $0x58] sm:$0xf]
      %v3609 = vld [vmem:[%s3227 + $0x5c] sm:$0x1]
      %v3610 = vld [vmem:[%s3227 + $0x60] sm:$0xf]
      %v3611 = vld [vmem:[%s3227 + $0x64] sm:$0xf]
      %v3612 = vld [vmem:[%s3227 + $0x68] sm:$0x1]
      %v3613 = vld [vmem:[%s3227 + $0x6c] sm:$0xf]
      %v3614 = vld [vmem:[%s3227 + $0x70] sm:$0xf]
      %v3615 = vld [vmem:[%s3227 + $0x74] sm:$0x1]
      %v3616 = vld [vmem:[%s3227 + $0x78] sm:$0xf]
      %v3617 = vld [vmem:[%s3227 + $0x7c] sm:$0xf]
      %v3618 = vld [vmem:[%s3227 + $0x80] sm:$0x1]
      %v3619 = vld [vmem:[%s3227 + $0x84] sm:$0xf]
      %v3620 = vld [vmem:[%s3227 + $0x88] sm:$0xf]
      %v3621 = vld [vmem:[%s3227 + $0x8c] sm:$0x1]
      %v3622 = vld [vmem:[%s3227 + $0x90] sm:$0xf]
      %v3623 = vld [vmem:[%s3227 + $0x94] sm:$0xf]
      %v3624 = vld [vmem:[%s3227 + $0x98] sm:$0x1]
      %v3625 = vld [vmem:[%s3227 + $0x9c] sm:$0xf]
      %v3626 = vld [vmem:[%s3227 + $0xa0] sm:$0xf]
      %v3627 = vld [vmem:[%s3227 + $0xa4] sm:$0x1]
      %v3628 = vld [vmem:[%s3227 + $0xa8] sm:$0xf]
      %v3629 = vld [vmem:[%s3227 + $0xac] sm:$0xf]
      %v3630 = vld [vmem:[%s3227 + $0xb0] sm:$0x1]
      %v3631 = vld [vmem:[%s3227 + $0xb4] sm:$0xf]
      %v3632 = vld [vmem:[%s3227 + $0xb8] sm:$0xf]
      %v3633 = vld [vmem:[%s3227 + $0xbc] sm:$0x1]
      %v3635 = vshrl.u32 %v3586, 16
      %v3637 = vrot.slane %v3635, 4
      %v3638 = vshll.u32 %v3586, 16
      %v3640 = vrot.slane %v3638, 5
      %v3641 = vor.u32 %v3637, %v3640
      %v3642 = vrot.slane %v3641, 4
      %v3644 = vshll.u32 %v3587, 16
      %v3646 = vrot.slane %v3644, 5
      %v3647 = vsel %vm274, %v3642, %v3646
      %v3648 = vshrl.u32 %v3587, 16
      %v3650 = vrot.slane %v3648, 4
      %v3651 = vor.u32 %v3650, %v3646
      %v3652 = vrot.slane %v3651, 4
      %v3654 = vshll.u32 %v3588, 16
      %v3656 = vrot.slane %v3654, 5
      %v3657 = vsel %vm274, %v3652, %v3656
      %v3659 = vshrl.u32 %v3589, 16
      %v3661 = vrot.slane %v3659, 4
      %v3662 = vshll.u32 %v3589, 16
      %v3664 = vrot.slane %v3662, 5
      %v3665 = vor.u32 %v3661, %v3664
      %v3666 = vrot.slane %v3665, 4
      %v3668 = vshll.u32 %v3590, 16
      %v3670 = vrot.slane %v3668, 5
      %v3671 = vsel %vm274, %v3666, %v3670
      %v3672 = vshrl.u32 %v3590, 16
      %v3674 = vrot.slane %v3672, 4
      %v3675 = vor.u32 %v3674, %v3670
      %v3676 = vrot.slane %v3675, 4
      %v3678 = vshll.u32 %v3591, 16
      %v3680 = vrot.slane %v3678, 5
      %v3681 = vsel %vm274, %v3676, %v3680
      %v3683 = vshrl.u32 %v3592, 16
      %v3685 = vrot.slane %v3683, 4
      %v3686 = vshll.u32 %v3592, 16
      %v3688 = vrot.slane %v3686, 5
      %v3689 = vor.u32 %v3685, %v3688
      %v3690 = vrot.slane %v3689, 4
      %v3692 = vshll.u32 %v3593, 16
      %v3694 = vrot.slane %v3692, 5
      %v3695 = vsel %vm274, %v3690, %v3694
      %v3696 = vshrl.u32 %v3593, 16
      %v3698 = vrot.slane %v3696, 4
      %v3699 = vor.u32 %v3698, %v3694
      %v3700 = vrot.slane %v3699, 4
      %v3702 = vshll.u32 %v3594, 16
      %v3704 = vrot.slane %v3702, 5
      %v3705 = vsel %vm274, %v3700, %v3704
      %v3707 = vshrl.u32 %v3595, 16
      %v3709 = vrot.slane %v3707, 4
      %v3710 = vshll.u32 %v3595, 16
      %v3712 = vrot.slane %v3710, 5
      %v3713 = vor.u32 %v3709, %v3712
      %v3714 = vrot.slane %v3713, 4
      %v3716 = vshll.u32 %v3596, 16
      %v3718 = vrot.slane %v3716, 5
      %v3719 = vsel %vm274, %v3714, %v3718
      %v3720 = vshrl.u32 %v3596, 16
      %v3722 = vrot.slane %v3720, 4
      %v3723 = vor.u32 %v3722, %v3718
      %v3724 = vrot.slane %v3723, 4
      %v3726 = vshll.u32 %v3597, 16
      %v3728 = vrot.slane %v3726, 5
      %v3729 = vsel %vm274, %v3724, %v3728
      %v3731 = vshrl.u32 %v3598, 16
      %v3733 = vrot.slane %v3731, 4
      %v3734 = vshll.u32 %v3598, 16
      %v3736 = vrot.slane %v3734, 5
      %v3737 = vor.u32 %v3733, %v3736
      %v3738 = vrot.slane %v3737, 4
      %v3740 = vshll.u32 %v3599, 16
      %v3742 = vrot.slane %v3740, 5
      %v3743 = vsel %vm274, %v3738, %v3742
      %v3744 = vshrl.u32 %v3599, 16
      %v3746 = vrot.slane %v3744, 4
      %v3747 = vor.u32 %v3746, %v3742
      %v3748 = vrot.slane %v3747, 4
      %v3750 = vshll.u32 %v3600, 16
      %v3752 = vrot.slane %v3750, 5
      %v3753 = vsel %vm274, %v3748, %v3752
      %v3755 = vshrl.u32 %v3601, 16
      %v3757 = vrot.slane %v3755, 4
      %v3758 = vshll.u32 %v3601, 16
      %v3760 = vrot.slane %v3758, 5
      %v3761 = vor.u32 %v3757, %v3760
      %v3762 = vrot.slane %v3761, 4
      %v3764 = vshll.u32 %v3602, 16
      %v3766 = vrot.slane %v3764, 5
      %v3767 = vsel %vm274, %v3762, %v3766
      %v3768 = vshrl.u32 %v3602, 16
      %v3770 = vrot.slane %v3768, 4
      %v3771 = vor.u32 %v3770, %v3766
      %v3772 = vrot.slane %v3771, 4
      %v3774 = vshll.u32 %v3603, 16
      %v3776 = vrot.slane %v3774, 5
      %v3777 = vsel %vm274, %v3772, %v3776
      %v3779 = vshrl.u32 %v3604, 16
      %v3781 = vrot.slane %v3779, 4
      %v3782 = vshll.u32 %v3604, 16
      %v3784 = vrot.slane %v3782, 5
      %v3785 = vor.u32 %v3781, %v3784
      %v3786 = vrot.slane %v3785, 4
      %v3788 = vshll.u32 %v3605, 16
      %v3790 = vrot.slane %v3788, 5
      %v3791 = vsel %vm274, %v3786, %v3790
      %v3792 = vshrl.u32 %v3605, 16
      %v3794 = vrot.slane %v3792, 4
      %v3795 = vor.u32 %v3794, %v3790
      %v3796 = vrot.slane %v3795, 4
      %v3798 = vshll.u32 %v3606, 16
      %v3800 = vrot.slane %v3798, 5
      %v3801 = vsel %vm274, %v3796, %v3800
      %v3803 = vshrl.u32 %v3607, 16
      %v3805 = vrot.slane %v3803, 4
      %v3806 = vshll.u32 %v3607, 16
      %v3808 = vrot.slane %v3806, 5
      %v3809 = vor.u32 %v3805, %v3808
      %v3810 = vrot.slane %v3809, 4
      %v3812 = vshll.u32 %v3608, 16
      %v3814 = vrot.slane %v3812, 5
      %v3815 = vsel %vm274, %v3810, %v3814
      %v3816 = vshrl.u32 %v3608, 16
      %v3818 = vrot.slane %v3816, 4
      %v3819 = vor.u32 %v3818, %v3814
      %v3820 = vrot.slane %v3819, 4
      %v3822 = vshll.u32 %v3609, 16
      %v3824 = vrot.slane %v3822, 5
      %v3825 = vsel %vm274, %v3820, %v3824
      %v3827 = vshrl.u32 %v3610, 16
      %v3829 = vrot.slane %v3827, 4
      %v3830 = vshll.u32 %v3610, 16
      %v3832 = vrot.slane %v3830, 5
      %v3833 = vor.u32 %v3829, %v3832
      %v3834 = vrot.slane %v3833, 4
      %v3836 = vshll.u32 %v3611, 16
      %v3838 = vrot.slane %v3836, 5
      %v3839 = vsel %vm274, %v3834, %v3838
      %v3840 = vshrl.u32 %v3611, 16
      %v3842 = vrot.slane %v3840, 4
      %v3843 = vor.u32 %v3842, %v3838
      %v3844 = vrot.slane %v3843, 4
      %v3846 = vshll.u32 %v3612, 16
      %v3848 = vrot.slane %v3846, 5
      %v3849 = vsel %vm274, %v3844, %v3848
      %v3851 = vshrl.u32 %v3613, 16
      %v3853 = vrot.slane %v3851, 4
      %v3854 = vshll.u32 %v3613, 16
      %v3856 = vrot.slane %v3854, 5
      %v3857 = vor.u32 %v3853, %v3856
      %v3858 = vrot.slane %v3857, 4
      %v3860 = vshll.u32 %v3614, 16
      %v3862 = vrot.slane %v3860, 5
      %v3863 = vsel %vm274, %v3858, %v3862
      %v3864 = vshrl.u32 %v3614, 16
      %v3866 = vrot.slane %v3864, 4
      %v3867 = vor.u32 %v3866, %v3862
      %v3868 = vrot.slane %v3867, 4
      %v3870 = vshll.u32 %v3615, 16
      %v3872 = vrot.slane %v3870, 5
      %v3873 = vsel %vm274, %v3868, %v3872
      %v3875 = vshrl.u32 %v3616, 16
      %v3877 = vrot.slane %v3875, 4
      %v3878 = vshll.u32 %v3616, 16
      %v3880 = vrot.slane %v3878, 5
      %v3881 = vor.u32 %v3877, %v3880
      %v3882 = vrot.slane %v3881, 4
      %v3884 = vshll.u32 %v3617, 16
      %v3886 = vrot.slane %v3884, 5
      %v3887 = vsel %vm274, %v3882, %v3886
      %v3888 = vshrl.u32 %v3617, 16
      %v3890 = vrot.slane %v3888, 4
      %v3891 = vor.u32 %v3890, %v3886
      %v3892 = vrot.slane %v3891, 4
      %v3894 = vshll.u32 %v3618, 16
      %v3896 = vrot.slane %v3894, 5
      %v3897 = vsel %vm274, %v3892, %v3896
      %v3899 = vshrl.u32 %v3619, 16
      %v3901 = vrot.slane %v3899, 4
      %v3902 = vshll.u32 %v3619, 16
      %v3904 = vrot.slane %v3902, 5
      %v3905 = vor.u32 %v3901, %v3904
      %v3906 = vrot.slane %v3905, 4
      %v3908 = vshll.u32 %v3620, 16
      %v3910 = vrot.slane %v3908, 5
      %v3911 = vsel %vm274, %v3906, %v3910
      %v3912 = vshrl.u32 %v3620, 16
      %v3914 = vrot.slane %v3912, 4
      %v3915 = vor.u32 %v3914, %v3910
      %v3916 = vrot.slane %v3915, 4
      %v3918 = vshll.u32 %v3621, 16
      %v3920 = vrot.slane %v3918, 5
      %v3921 = vsel %vm274, %v3916, %v3920
      %v3923 = vshrl.u32 %v3622, 16
      %v3925 = vrot.slane %v3923, 4
      %v3926 = vshll.u32 %v3622, 16
      %v3928 = vrot.slane %v3926, 5
      %v3929 = vor.u32 %v3925, %v3928
      %v3930 = vrot.slane %v3929, 4
      %v3932 = vshll.u32 %v3623, 16
      %v3934 = vrot.slane %v3932, 5
      %v3935 = vsel %vm274, %v3930, %v3934
      %v3936 = vshrl.u32 %v3623, 16
      %v3938 = vrot.slane %v3936, 4
      %v3939 = vor.u32 %v3938, %v3934
      %v3940 = vrot.slane %v3939, 4
      %v3942 = vshll.u32 %v3624, 16
      %v3944 = vrot.slane %v3942, 5
      %v3945 = vsel %vm274, %v3940, %v3944
      %v3947 = vshrl.u32 %v3625, 16
      %v3949 = vrot.slane %v3947, 4
      %v3950 = vshll.u32 %v3625, 16
      %v3952 = vrot.slane %v3950, 5
      %v3953 = vor.u32 %v3949, %v3952
      %v3954 = vrot.slane %v3953, 4
      %v3956 = vshll.u32 %v3626, 16
      %v3958 = vrot.slane %v3956, 5
      %v3959 = vsel %vm274, %v3954, %v3958
      %v3960 = vshrl.u32 %v3626, 16
      %v3962 = vrot.slane %v3960, 4
      %v3963 = vor.u32 %v3962, %v3958
      %v3964 = vrot.slane %v3963, 4
      %v3966 = vshll.u32 %v3627, 16
      %v3968 = vrot.slane %v3966, 5
      %v3969 = vsel %vm274, %v3964, %v3968
      %v3971 = vshrl.u32 %v3628, 16
      %v3973 = vrot.slane %v3971, 4
      %v3974 = vshll.u32 %v3628, 16
      %v3976 = vrot.slane %v3974, 5
      %v3977 = vor.u32 %v3973, %v3976
      %v3978 = vrot.slane %v3977, 4
      %v3980 = vshll.u32 %v3629, 16
      %v3982 = vrot.slane %v3980, 5
      %v3983 = vsel %vm274, %v3978, %v3982
      %v3984 = vshrl.u32 %v3629, 16
      %v3986 = vrot.slane %v3984, 4
      %v3987 = vor.u32 %v3986, %v3982
      %v3988 = vrot.slane %v3987, 4
      %v3990 = vshll.u32 %v3630, 16
      %v3992 = vrot.slane %v3990, 5
      %v3993 = vsel %vm274, %v3988, %v3992
      %v3995 = vshrl.u32 %v3631, 16
      %v3997 = vrot.slane %v3995, 4
      %v3998 = vshll.u32 %v3631, 16
      %v4000 = vrot.slane %v3998, 5
      %v4001 = vor.u32 %v3997, %v4000
      %v4002 = vrot.slane %v4001, 4
      %v4004 = vshll.u32 %v3632, 16
      %v4006 = vrot.slane %v4004, 5
      %v4007 = vsel %vm274, %v4002, %v4006
      %v4008 = vshrl.u32 %v3632, 16
      %v4010 = vrot.slane %v4008, 4
      %v4011 = vor.u32 %v4010, %v4006
      %v4012 = vrot.slane %v4011, 4
      %v4014 = vshll.u32 %v3633, 16
      %v4016 = vrot.slane %v4014, 5
      %v4017 = vsel %vm274, %v4012, %v4016
      %s4018 = scalar_lea.vmem %s210, 14
      %v4019 = vld [vmem:[%s4018] sm:$0x3]
      %v4020 = vunpack.c.l.b16 %v3647
      %v4021 = vunpack.c.l.b16 %v3657
      %v4022 = vunpack.c.l.b16 %v3671
      %v4023 = vunpack.c.l.b16 %v3681
      %v4024 = vunpack.c.l.b16 %v3695
      %v4025 = vunpack.c.l.b16 %v3705
      %v4026 = vunpack.c.l.b16 %v3719
      %v4027 = vunpack.c.l.b16 %v3729
      %v4028 = vunpack.c.l.b16 %v3743
      %v4029 = vunpack.c.l.b16 %v3753
      %v4030 = vunpack.c.l.b16 %v3767
      %v4031 = vunpack.c.l.b16 %v3777
      %v4032 = vunpack.c.l.b16 %v3791
      %v4033 = vunpack.c.l.b16 %v3801
      %v4034 = vunpack.c.l.b16 %v3815
      %v4035 = vunpack.c.l.b16 %v3825
      %v4036 = vunpack.c.l.b16 %v3839
      %v4037 = vunpack.c.l.b16 %v3849
      %v4038 = vunpack.c.l.b16 %v3863
      %v4039 = vunpack.c.l.b16 %v3873
      %v4040 = vunpack.c.l.b16 %v3887
      %v4041 = vunpack.c.l.b16 %v3897
      %v4042 = vunpack.c.l.b16 %v3911
      %v4043 = vunpack.c.l.b16 %v3921
      %v4044 = vunpack.c.l.b16 %v3935
      %v4045 = vunpack.c.l.b16 %v3945
      %v4046 = vunpack.c.l.b16 %v3959
      %v4047 = vunpack.c.l.b16 %v3969
      %v4048 = vunpack.c.l.b16 %v3983
      %v4049 = vunpack.c.l.b16 %v3993
      %v4050 = vunpack.c.l.b16 %v4007
      %v4051 = vunpack.c.l.b16 %v4017
      %v4052 = vpack.c.b16 %v4021, %v4020
      %v4053 = vpack.c.b16 %v4023, %v4022
      %v4054 = vpack.c.b16 %v4025, %v4024
      %v4055 = vpack.c.b16 %v4027, %v4026
      %v4056 = vpack.c.b16 %v4029, %v4028
      %v4057 = vpack.c.b16 %v4031, %v4030
      %v4058 = vpack.c.b16 %v4033, %v4032
      %v4059 = vpack.c.b16 %v4035, %v4034
      %v4060 = vpack.c.b16 %v4037, %v4036
      %v4061 = vpack.c.b16 %v4039, %v4038
      %v4062 = vpack.c.b16 %v4041, %v4040
      %v4063 = vpack.c.b16 %v4043, %v4042
      %v4064 = vpack.c.b16 %v4045, %v4044
      %v4065 = vpack.c.b16 %v4047, %v4046
      %v4066 = vpack.c.b16 %v4049, %v4048
      %v4067 = vpack.c.b16 %v4051, %v4050
      %v4069 = vsel %vm709, %v4052, 0
      %v4072 = vsel %vm709, %v4053, 0
      %v4075 = vsel %vm709, %v4054, 0
      %v4078 = vsel %vm709, %v4055, 0
      %v4081 = vsel %vm709, %v4056, 0
      %v4084 = vsel %vm709, %v4057, 0
      %v4087 = vsel %vm709, %v4058, 0
      %v4090 = vsel %vm709, %v4059, 0
      %v4093 = vsel %vm709, %v4060, 0
      %v4096 = vsel %vm709, %v4061, 0
      %v4099 = vsel %vm709, %v4062, 0
      %v4102 = vsel %vm709, %v4063, 0
      %v4105 = vsel %vm709, %v4064, 0
      %v4108 = vsel %vm709, %v4065, 0
      %v4111 = vsel %vm709, %v4066, 0
      %v4114 = vsel %vm709, %v4067, 0
      %v4117 = vsel %vm758, %v4019, 0
      %4119 = vmatprep.subr.bf16.mxu0 0
      %4120 = vmatpush1.bf16.msra.mxu0 %v4117
      %4121 = vmatprep.subr.bf16.mxu0 0
      %4122 = vmatpush1.bf16.msra.mxu0 0
      %4123 = vmatprep.subr.bf16.mxu0 0
      %4124 = vmatpush1.bf16.msra.mxu0 0
      %4125 = vmatprep.subr.bf16.mxu0 0
      %4126 = vmatpush1.bf16.msra.mxu0 0
      %4127 = vmatprep.subr.bf16.mxu0 0
      %4128 = vmatpush1.bf16.msra.mxu0 0
      %4129 = vmatprep.subr.bf16.mxu0 0
      %4130 = vmatpush1.bf16.msra.mxu0 0
      %4131 = vmatprep.subr.bf16.mxu0 0
      %4132 = vmatpush1.bf16.msra.mxu0 0
      %4133 = vmatprep.subr.bf16.mxu0 0
      %4134 = vmatpush1.bf16.msra.mxu0 0
      %4135 = vmatprep.subr.bf16.mxu0 0
      %4136 = vmatpush1.bf16.msra.mxu0 0
      %4137 = vmatprep.subr.bf16.mxu0 0
      %4138 = vmatpush1.bf16.msra.mxu0 0
      %4139 = vmatprep.subr.bf16.mxu0 0
      %4140 = vmatpush1.bf16.msra.mxu0 0
      %4141 = vmatprep.subr.bf16.mxu0 0
      %4142 = vmatpush1.bf16.msra.mxu0 0
      %4143 = vmatprep.subr.bf16.mxu0 0
      %4144 = vmatpush1.bf16.msra.mxu0 0
      %4145 = vmatprep.subr.bf16.mxu0 0
      %4146 = vmatpush1.bf16.msra.mxu0 0
      %4147 = vmatprep.subr.bf16.mxu0 0
      %4148 = vmatpush1.bf16.msra.mxu0 0
      %4149 = vmatprep.subr.bf16.mxu0 0
      %4150 = vmatpush1.bf16.msra.mxu0 0
      %4151 = vmatprep.mubr.bf16.mxu0 0
      %4152 = vmatmul.mubr.bf16.gmra.mrb[0].mxu0 %v4069
      %v4153 = vpop.f32.mrb[0].mxu0
      %v4154 = vadd.f32 0.0, %v4153
      %v4155 = vpop.f32.mrb[0].mxu0
      %v4156 = vpop.f32.mrb[0].mxu0
      %v4157 = vadd.f32 0.0, %v4156
      %v4158 = vpop.f32.mrb[0].mxu0
      %4159 = vmatprep.mubr.bf16.mxu0 0
      %4160 = vmatmul.mubr.bf16.gmra.mrb[0].mxu0 %v4072
      %v4161 = vpop.f32.mrb[0].mxu0
      %v4162 = vadd.f32 0.0, %v4161
      %v4163 = vpop.f32.mrb[0].mxu0
      %v4164 = vpop.f32.mrb[0].mxu0
      %v4165 = vadd.f32 0.0, %v4164
      %v4166 = vpop.f32.mrb[0].mxu0
      %4167 = vmatprep.mubr.bf16.mxu0 0
      %4168 = vmatmul.mubr.bf16.gmra.mrb[0].mxu0 %v4075
      %v4169 = vpop.f32.mrb[0].mxu0
      %v4170 = vadd.f32 0.0, %v4169
      %v4171 = vpop.f32.mrb[0].mxu0
      %v4172 = vpop.f32.mrb[0].mxu0
      %v4173 = vadd.f32 0.0, %v4172
      %v4174 = vpop.f32.mrb[0].mxu0
      %4175 = vmatprep.mubr.bf16.mxu0 0
      %4176 = vmatmul.mubr.bf16.gmra.mrb[0].mxu0 %v4078
      %v4177 = vpop.f32.mrb[0].mxu0
      %v4178 = vadd.f32 0.0, %v4177
      %v4179 = vpop.f32.mrb[0].mxu0
      %v4180 = vpop.f32.mrb[0].mxu0
      %v4181 = vadd.f32 0.0, %v4180
      %v4182 = vpop.f32.mrb[0].mxu0
      %4183 = vmatprep.mubr.bf16.mxu0 0
      %4184 = vmatmul.mubr.bf16.gmra.mrb[0].mxu0 %v4081
      %v4185 = vpop.f32.mrb[0].mxu0
      %v4186 = vadd.f32 0.0, %v4185
      %v4187 = vpop.f32.mrb[0].mxu0
      %v4188 = vpop.f32.mrb[0].mxu0
      %v4189 = vadd.f32 0.0, %v4188
      %v4190 = vpop.f32.mrb[0].mxu0
      %4191 = vmatprep.mubr.bf16.mxu0 0
      %4192 = vmatmul.mubr.bf16.gmra.mrb[0].mxu0 %v4084
      %v4193 = vpop.f32.mrb[0].mxu0
      %v4194 = vadd.f32 0.0, %v4193
      %v4195 = vpop.f32.mrb[0].mxu0
      %v4196 = vpop.f32.mrb[0].mxu0
      %v4197 = vadd.f32 0.0, %v4196
      %v4198 = vpop.f32.mrb[0].mxu0
      %4199 = vmatprep.mubr.bf16.mxu0 0
      %4200 = vmatmul.mubr.bf16.gmra.mrb[0].mxu0 %v4087
      %v4201 = vpop.f32.mrb[0].mxu0
      %v4202 = vadd.f32 0.0, %v4201
      %v4203 = vpop.f32.mrb[0].mxu0
      %v4204 = vpop.f32.mrb[0].mxu0
      %v4205 = vadd.f32 0.0, %v4204
      %v4206 = vpop.f32.mrb[0].mxu0
      %4207 = vmatprep.mubr.bf16.mxu0 0
      %4208 = vmatmul.mubr.bf16.gmra.mrb[0].mxu0 %v4090
      %v4209 = vpop.f32.mrb[0].mxu0
      %v4210 = vadd.f32 0.0, %v4209
      %v4211 = vpop.f32.mrb[0].mxu0
      %v4212 = vpop.f32.mrb[0].mxu0
      %v4213 = vadd.f32 0.0, %v4212
      %v4214 = vpop.f32.mrb[0].mxu0
      %4215 = vmatprep.mubr.bf16.mxu0 0
      %4216 = vmatmul.mubr.bf16.gmra.mrb[0].mxu0 %v4093
      %v4217 = vpop.f32.mrb[0].mxu0
      %v4218 = vadd.f32 0.0, %v4217
      %v4219 = vpop.f32.mrb[0].mxu0
      %v4220 = vpop.f32.mrb[0].mxu0
      %v4221 = vadd.f32 0.0, %v4220
      %v4222 = vpop.f32.mrb[0].mxu0
      %4223 = vmatprep.mubr.bf16.mxu0 0
      %4224 = vmatmul.mubr.bf16.gmra.mrb[0].mxu0 %v4096
      %v4225 = vpop.f32.mrb[0].mxu0
      %v4226 = vadd.f32 0.0, %v4225
      %v4227 = vpop.f32.mrb[0].mxu0
      %v4228 = vpop.f32.mrb[0].mxu0
      %v4229 = vadd.f32 0.0, %v4228
      %v4230 = vpop.f32.mrb[0].mxu0
      %4231 = vmatprep.mubr.bf16.mxu0 0
      %4232 = vmatmul.mubr.bf16.gmra.mrb[0].mxu0 %v4099
      %v4233 = vpop.f32.mrb[0].mxu0
      %v4234 = vadd.f32 0.0, %v4233
      %v4235 = vpop.f32.mrb[0].mxu0
      %v4236 = vpop.f32.mrb[0].mxu0
      %v4237 = vadd.f32 0.0, %v4236
      %v4238 = vpop.f32.mrb[0].mxu0
      %4239 = vmatprep.mubr.bf16.mxu0 0
      %4240 = vmatmul.mubr.bf16.gmra.mrb[0].mxu0 %v4102
      %v4241 = vpop.f32.mrb[0].mxu0
      %v4242 = vadd.f32 0.0, %v4241
      %v4243 = vpop.f32.mrb[0].mxu0
      %v4244 = vpop.f32.mrb[0].mxu0
      %v4245 = vadd.f32 0.0, %v4244
      %v4246 = vpop.f32.mrb[0].mxu0
      %4247 = vmatprep.mubr.bf16.mxu0 0
      %4248 = vmatmul.mubr.bf16.gmra.mrb[0].mxu0 %v4105
      %v4249 = vpop.f32.mrb[0].mxu0
      %v4250 = vadd.f32 0.0, %v4249
      %v4251 = vpop.f32.mrb[0].mxu0
      %v4252 = vpop.f32.mrb[0].mxu0
      %v4253 = vadd.f32 0.0, %v4252
      %v4254 = vpop.f32.mrb[0].mxu0
      %4255 = vmatprep.mubr.bf16.mxu0 0
      %4256 = vmatmul.mubr.bf16.gmra.mrb[0].mxu0 %v4108
      %v4257 = vpop.f32.mrb[0].mxu0
      %v4258 = vadd.f32 0.0, %v4257
      %v4259 = vpop.f32.mrb[0].mxu0
      %v4260 = vpop.f32.mrb[0].mxu0
      %v4261 = vadd.f32 0.0, %v4260
      %v4262 = vpop.f32.mrb[0].mxu0
      %4263 = vmatprep.mubr.bf16.mxu0 0
      %4264 = vmatmul.mubr.bf16.gmra.mrb[0].mxu0 %v4111
      %v4265 = vpop.f32.mrb[0].mxu0
      %v4266 = vadd.f32 0.0, %v4265
      %v4267 = vpop.f32.mrb[0].mxu0
      %v4268 = vpop.f32.mrb[0].mxu0
      %v4269 = vadd.f32 0.0, %v4268
      %v4270 = vpop.f32.mrb[0].mxu0
      %4271 = vmatprep.mubr.bf16.mxu0 0
      %4272 = vmatmul.mubr.bf16.gmra.mrb[0].mxu0 %v4114
      %v4273 = vpop.f32.mrb[0].mxu0
      %v4274 = vadd.f32 0.0, %v4273
      %v4275 = vpop.f32.mrb[0].mxu0
      %v4276 = vpop.f32.mrb[0].mxu0
      %v4277 = vadd.f32 0.0, %v4276
      %v4278 = vpop.f32.mrb[0].mxu0
      %4279 = vdwg.mxu0
      %v4280 = vadd.f32 %v3554, %v4154
      %v4281 = vadd.f32 %v3555, %v4157
      %v4282 = vadd.f32 %v3556, %v4162
      %v4283 = vadd.f32 %v3557, %v4165
      %v4284 = vadd.f32 %v3558, %v4170
      %v4285 = vadd.f32 %v3559, %v4173
      %v4286 = vadd.f32 %v3560, %v4178
      %v4287 = vadd.f32 %v3561, %v4181
      %v4288 = vadd.f32 %v3562, %v4186
      %v4289 = vadd.f32 %v3563, %v4189
      %v4290 = vadd.f32 %v3564, %v4194
      %v4291 = vadd.f32 %v3565, %v4197
      %v4292 = vadd.f32 %v3566, %v4202
      %v4293 = vadd.f32 %v3567, %v4205
      %v4294 = vadd.f32 %v3568, %v4210
      %v4295 = vadd.f32 %v3569, %v4213
      %v4296 = vadd.f32 %v3570, %v4218
      %v4297 = vadd.f32 %v3571, %v4221
      %v4298 = vadd.f32 %v3572, %v4226
      %v4299 = vadd.f32 %v3573, %v4229
      %v4300 = vadd.f32 %v3574, %v4234
      %v4301 = vadd.f32 %v3575, %v4237
      %v4302 = vadd.f32 %v3576, %v4242
      %v4303 = vadd.f32 %v3577, %v4245
      %v4304 = vadd.f32 %v3578, %v4250
      %v4305 = vadd.f32 %v3579, %v4253
      %v4306 = vadd.f32 %v3580, %v4258
      %v4307 = vadd.f32 %v3581, %v4261
      %v4308 = vadd.f32 %v3582, %v4266
      %v4309 = vadd.f32 %v3583, %v4269
      %v4310 = vadd.f32 %v3584, %v4274
      %v4311 = vadd.f32 %v3585, %v4277
      %v4312 = vld [vmem:[%s3227] sm:$0xe]
      %v4313 = vld [vmem:[%s3227 + $0xc] sm:$0xe]
      %v4314 = vld [vmem:[%s3227 + $0x18] sm:$0xe]
      %v4315 = vld [vmem:[%s3227 + $0x24] sm:$0xe]
      %v4316 = vld [vmem:[%s3227 + $0x30] sm:$0xe]
      %v4317 = vld [vmem:[%s3227 + $0x3c] sm:$0xe]
      %v4318 = vld [vmem:[%s3227 + $0x48] sm:$0xe]
      %v4319 = vld [vmem:[%s3227 + $0x54] sm:$0xe]
      %v4320 = vld [vmem:[%s3227 + $0x60] sm:$0xe]
      %v4321 = vld [vmem:[%s3227 + $0x6c] sm:$0xe]
      %v4322 = vld [vmem:[%s3227 + $0x78] sm:$0xe]
      %v4323 = vld [vmem:[%s3227 + $0x84] sm:$0xe]
      %v4324 = vld [vmem:[%s3227 + $0x90] sm:$0xe]
      %v4325 = vld [vmem:[%s3227 + $0x9c] sm:$0xe]
      %v4326 = vld [vmem:[%s3227 + $0xa8] sm:$0xe]
      %v4327 = vld [vmem:[%s3227 + $0xb4] sm:$0xe]
      %v4376 = vrot.slane %v4312, 5
      %v4377 = vrot.slane %v4376, 4
      %v4378 = vrot.slane %v3587, 5
      %v4379 = vsel %vm1265, %v4377, %v4378
      %v4380 = vrot.slane %v4378, 4
      %v4381 = vrot.slane %v3588, 5
      %v4382 = vsel %vm1265, %v4380, %v4381
      %v4383 = vrot.slane %v4313, 5
      %v4384 = vrot.slane %v4383, 4
      %v4385 = vrot.slane %v3590, 5
      %v4386 = vsel %vm1265, %v4384, %v4385
      %v4387 = vrot.slane %v4385, 4
      %v4388 = vrot.slane %v3591, 5
      %v4389 = vsel %vm1265, %v4387, %v4388
      %v4390 = vrot.slane %v4314, 5
      %v4391 = vrot.slane %v4390, 4
      %v4392 = vrot.slane %v3593, 5
      %v4393 = vsel %vm1265, %v4391, %v4392
      %v4394 = vrot.slane %v4392, 4
      %v4395 = vrot.slane %v3594, 5
      %v4396 = vsel %vm1265, %v4394, %v4395
      %v4397 = vrot.slane %v4315, 5
      %v4398 = vrot.slane %v4397, 4
      %v4399 = vrot.slane %v3596, 5
      %v4400 = vsel %vm1265, %v4398, %v4399
      %v4401 = vrot.slane %v4399, 4
      %v4402 = vrot.slane %v3597, 5
      %v4403 = vsel %vm1265, %v4401, %v4402
      %v4404 = vrot.slane %v4316, 5
      %v4405 = vrot.slane %v4404, 4
      %v4406 = vrot.slane %v3599, 5
      %v4407 = vsel %vm1265, %v4405, %v4406
      %v4408 = vrot.slane %v4406, 4
      %v4409 = vrot.slane %v3600, 5
      %v4410 = vsel %vm1265, %v4408, %v4409
      %v4411 = vrot.slane %v4317, 5
      %v4412 = vrot.slane %v4411, 4
      %v4413 = vrot.slane %v3602, 5
      %v4414 = vsel %vm1265, %v4412, %v4413
      %v4415 = vrot.slane %v4413, 4
      %v4416 = vrot.slane %v3603, 5
      %v4417 = vsel %vm1265, %v4415, %v4416
      %v4418 = vrot.slane %v4318, 5
      %v4419 = vrot.slane %v4418, 4
      %v4420 = vrot.slane %v3605, 5
      %v4421 = vsel %vm1265, %v4419, %v4420
      %v4422 = vrot.slane %v4420, 4
      %v4423 = vrot.slane %v3606, 5
      %v4424 = vsel %vm1265, %v4422, %v4423
      %v4425 = vrot.slane %v4319, 5
      %v4426 = vrot.slane %v4425, 4
      %v4427 = vrot.slane %v3608, 5
      %v4428 = vsel %vm1265, %v4426, %v4427
      %v4429 = vrot.slane %v4427, 4
      %v4430 = vrot.slane %v3609, 5
      %v4431 = vsel %vm1265, %v4429, %v4430
      %v4432 = vrot.slane %v4320, 5
      %v4433 = vrot.slane %v4432, 4
      %v4434 = vrot.slane %v3611, 5
      %v4435 = vsel %vm1265, %v4433, %v4434
      %v4436 = vrot.slane %v4434, 4
      %v4437 = vrot.slane %v3612, 5
      %v4438 = vsel %vm1265, %v4436, %v4437
      %v4439 = vrot.slane %v4321, 5
      %v4440 = vrot.slane %v4439, 4
      %v4441 = vrot.slane %v3614, 5
      %v4442 = vsel %vm1265, %v4440, %v4441
      %v4443 = vrot.slane %v4441, 4
      %v4444 = vrot.slane %v3615, 5
      %v4445 = vsel %vm1265, %v4443, %v4444
      %v4446 = vrot.slane %v4322, 5
      %v4447 = vrot.slane %v4446, 4
      %v4448 = vrot.slane %v3617, 5
      %v4449 = vsel %vm1265, %v4447, %v4448
      %v4450 = vrot.slane %v4448, 4
      %v4451 = vrot.slane %v3618, 5
      %v4452 = vsel %vm1265, %v4450, %v4451
      %v4453 = vrot.slane %v4323, 5
      %v4454 = vrot.slane %v4453, 4
      %v4455 = vrot.slane %v3620, 5
      %v4456 = vsel %vm1265, %v4454, %v4455
      %v4457 = vrot.slane %v4455, 4
      %v4458 = vrot.slane %v3621, 5
      %v4459 = vsel %vm1265, %v4457, %v4458
      %v4460 = vrot.slane %v4324, 5
      %v4461 = vrot.slane %v4460, 4
      %v4462 = vrot.slane %v3623, 5
      %v4463 = vsel %vm1265, %v4461, %v4462
      %v4464 = vrot.slane %v4462, 4
      %v4465 = vrot.slane %v3624, 5
      %v4466 = vsel %vm1265, %v4464, %v4465
      %v4467 = vrot.slane %v4325, 5
      %v4468 = vrot.slane %v4467, 4
      %v4469 = vrot.slane %v3626, 5
      %v4470 = vsel %vm1265, %v4468, %v4469
      %v4471 = vrot.slane %v4469, 4
      %v4472 = vrot.slane %v3627, 5
      %v4473 = vsel %vm1265, %v4471, %v4472
      %v4474 = vrot.slane %v4326, 5
      %v4475 = vrot.slane %v4474, 4
      %v4476 = vrot.slane %v3629, 5
      %v4477 = vsel %vm1265, %v4475, %v4476
      %v4478 = vrot.slane %v4476, 4
      %v4479 = vrot.slane %v3630, 5
      %v4480 = vsel %vm1265, %v4478, %v4479
      %v4481 = vrot.slane %v4327, 5
      %v4482 = vrot.slane %v4481, 4
      %v4483 = vrot.slane %v3632, 5
      %v4484 = vsel %vm1265, %v4482, %v4483
      %v4485 = vrot.slane %v4483, 4
      %v4486 = vrot.slane %v3633, 5
      %v4487 = vsel %vm1265, %v4485, %v4486
      %s4488 = scalar_lea.vmem %s210, 16
      %v4489 = vld [vmem:[%s4488] sm:$0x3]
      %v4490 = vunpack.c.l.b16 %v4379
      %v4491 = vunpack.c.l.b16 %v4382
      %v4492 = vunpack.c.l.b16 %v4386
      %v4493 = vunpack.c.l.b16 %v4389
      %v4494 = vunpack.c.l.b16 %v4393
      %v4495 = vunpack.c.l.b16 %v4396
      %v4496 = vunpack.c.l.b16 %v4400
      %v4497 = vunpack.c.l.b16 %v4403
      %v4498 = vunpack.c.l.b16 %v4407
      %v4499 = vunpack.c.l.b16 %v4410
      %v4500 = vunpack.c.l.b16 %v4414
      %v4501 = vunpack.c.l.b16 %v4417
      %v4502 = vunpack.c.l.b16 %v4421
      %v4503 = vunpack.c.l.b16 %v4424
      %v4504 = vunpack.c.l.b16 %v4428
      %v4505 = vunpack.c.l.b16 %v4431
      %v4506 = vunpack.c.l.b16 %v4435
      %v4507 = vunpack.c.l.b16 %v4438
      %v4508 = vunpack.c.l.b16 %v4442
      %v4509 = vunpack.c.l.b16 %v4445
      %v4510 = vunpack.c.l.b16 %v4449
      %v4511 = vunpack.c.l.b16 %v4452
      %v4512 = vunpack.c.l.b16 %v4456
      %v4513 = vunpack.c.l.b16 %v4459
      %v4514 = vunpack.c.l.b16 %v4463
      %v4515 = vunpack.c.l.b16 %v4466
      %v4516 = vunpack.c.l.b16 %v4470
      %v4517 = vunpack.c.l.b16 %v4473
      %v4518 = vunpack.c.l.b16 %v4477
      %v4519 = vunpack.c.l.b16 %v4480
      %v4520 = vunpack.c.l.b16 %v4484
      %v4521 = vunpack.c.l.b16 %v4487
      %v4522 = vpack.c.b16 %v4491, %v4490
      %v4523 = vpack.c.b16 %v4493, %v4492
      %v4524 = vpack.c.b16 %v4495, %v4494
      %v4525 = vpack.c.b16 %v4497, %v4496
      %v4526 = vpack.c.b16 %v4499, %v4498
      %v4527 = vpack.c.b16 %v4501, %v4500
      %v4528 = vpack.c.b16 %v4503, %v4502
      %v4529 = vpack.c.b16 %v4505, %v4504
      %v4530 = vpack.c.b16 %v4507, %v4506
      %v4531 = vpack.c.b16 %v4509, %v4508
      %v4532 = vpack.c.b16 %v4511, %v4510
      %v4533 = vpack.c.b16 %v4513, %v4512
      %v4534 = vpack.c.b16 %v4515, %v4514
      %v4535 = vpack.c.b16 %v4517, %v4516
      %v4536 = vpack.c.b16 %v4519, %v4518
      %v4537 = vpack.c.b16 %v4521, %v4520
      %v4539 = vsel %vm709, %v4522, 0
      %v4542 = vsel %vm709, %v4523, 0
      %v4545 = vsel %vm709, %v4524, 0
      %v4548 = vsel %vm709, %v4525, 0
      %v4551 = vsel %vm709, %v4526, 0
      %v4554 = vsel %vm709, %v4527, 0
      %v4557 = vsel %vm709, %v4528, 0
      %v4560 = vsel %vm709, %v4529, 0
      %v4563 = vsel %vm709, %v4530, 0
      %v4566 = vsel %vm709, %v4531, 0
      %v4569 = vsel %vm709, %v4532, 0
      %v4572 = vsel %vm709, %v4533, 0
      %v4575 = vsel %vm709, %v4534, 0
      %v4578 = vsel %vm709, %v4535, 0
      %v4581 = vsel %vm709, %v4536, 0
      %v4584 = vsel %vm709, %v4537, 0
      %v4587 = vsel %vm758, %v4489, 0
      %4589 = vmatprep.subr.bf16.mxu0 0
      %4590 = vmatpush1.bf16.msra.mxu0 %v4587
      %4591 = vmatprep.subr.bf16.mxu0 0
      %4592 = vmatpush1.bf16.msra.mxu0 0
      %4593 = vmatprep.subr.bf16.mxu0 0
      %4594 = vmatpush1.bf16.msra.mxu0 0
      %4595 = vmatprep.subr.bf16.mxu0 0
      %4596 = vmatpush1.bf16.msra.mxu0 0
      %4597 = vmatprep.subr.bf16.mxu0 0
      %4598 = vmatpush1.bf16.msra.mxu0 0
      %4599 = vmatprep.subr.bf16.mxu0 0
      %4600 = vmatpush1.bf16.msra.mxu0 0
      %4601 = vmatprep.subr.bf16.mxu0 0
      %4602 = vmatpush1.bf16.msra.mxu0 0
      %4603 = vmatprep.subr.bf16.mxu0 0
      %4604 = vmatpush1.bf16.msra.mxu0 0
      %4605 = vmatprep.subr.bf16.mxu0 0
      %4606 = vmatpush1.bf16.msra.mxu0 0
      %4607 = vmatprep.subr.bf16.mxu0 0
      %4608 = vmatpush1.bf16.msra.mxu0 0
      %4609 = vmatprep.subr.bf16.mxu0 0
      %4610 = vmatpush1.bf16.msra.mxu0 0
      %4611 = vmatprep.subr.bf16.mxu0 0
      %4612 = vmatpush1.bf16.msra.mxu0 0
      %4613 = vmatprep.subr.bf16.mxu0 0
      %4614 = vmatpush1.bf16.msra.mxu0 0
      %4615 = vmatprep.subr.bf16.mxu0 0
      %4616 = vmatpush1.bf16.msra.mxu0 0
      %4617 = vmatprep.subr.bf16.mxu0 0
      %4618 = vmatpush1.bf16.msra.mxu0 0
      %4619 = vmatprep.subr.bf16.mxu0 0
      %4620 = vmatpush1.bf16.msra.mxu0 0
      %4621 = vmatprep.mubr.bf16.mxu0 0
      %4622 = vmatmul.mubr.bf16.gmra.mrb[0].mxu0 %v4539
      %v4623 = vpop.f32.mrb[0].mxu0
      %v4624 = vadd.f32 0.0, %v4623
      %v4625 = vpop.f32.mrb[0].mxu0
      %v4626 = vpop.f32.mrb[0].mxu0
      %v4627 = vadd.f32 0.0, %v4626
      %v4628 = vpop.f32.mrb[0].mxu0
      %4629 = vmatprep.mubr.bf16.mxu0 0
      %4630 = vmatmul.mubr.bf16.gmra.mrb[0].mxu0 %v4542
      %v4631 = vpop.f32.mrb[0].mxu0
      %v4632 = vadd.f32 0.0, %v4631
      %v4633 = vpop.f32.mrb[0].mxu0
      %v4634 = vpop.f32.mrb[0].mxu0
      %v4635 = vadd.f32 0.0, %v4634
      %v4636 = vpop.f32.mrb[0].mxu0
      %4637 = vmatprep.mubr.bf16.mxu0 0
      %4638 = vmatmul.mubr.bf16.gmra.mrb[0].mxu0 %v4545
      %v4639 = vpop.f32.mrb[0].mxu0
      %v4640 = vadd.f32 0.0, %v4639
      %v4641 = vpop.f32.mrb[0].mxu0
      %v4642 = vpop.f32.mrb[0].mxu0
      %v4643 = vadd.f32 0.0, %v4642
      %v4644 = vpop.f32.mrb[0].mxu0
      %4645 = vmatprep.mubr.bf16.mxu0 0
      %4646 = vmatmul.mubr.bf16.gmra.mrb[0].mxu0 %v4548
      %v4647 = vpop.f32.mrb[0].mxu0
      %v4648 = vadd.f32 0.0, %v4647
      %v4649 = vpop.f32.mrb[0].mxu0
      %v4650 = vpop.f32.mrb[0].mxu0
      %v4651 = vadd.f32 0.0, %v4650
      %v4652 = vpop.f32.mrb[0].mxu0
      %4653 = vmatprep.mubr.bf16.mxu0 0
      %4654 = vmatmul.mubr.bf16.gmra.mrb[0].mxu0 %v4551
      %v4655 = vpop.f32.mrb[0].mxu0
      %v4656 = vadd.f32 0.0, %v4655
      %v4657 = vpop.f32.mrb[0].mxu0
      %v4658 = vpop.f32.mrb[0].mxu0
      %v4659 = vadd.f32 0.0, %v4658
      %v4660 = vpop.f32.mrb[0].mxu0
      %4661 = vmatprep.mubr.bf16.mxu0 0
      %4662 = vmatmul.mubr.bf16.gmra.mrb[0].mxu0 %v4554
      %v4663 = vpop.f32.mrb[0].mxu0
      %v4664 = vadd.f32 0.0, %v4663
      %v4665 = vpop.f32.mrb[0].mxu0
      %v4666 = vpop.f32.mrb[0].mxu0
      %v4667 = vadd.f32 0.0, %v4666
      %v4668 = vpop.f32.mrb[0].mxu0
      %4669 = vmatprep.mubr.bf16.mxu0 0
      %4670 = vmatmul.mubr.bf16.gmra.mrb[0].mxu0 %v4557
      %v4671 = vpop.f32.mrb[0].mxu0
      %v4672 = vadd.f32 0.0, %v4671
      %v4673 = vpop.f32.mrb[0].mxu0
      %v4674 = vpop.f32.mrb[0].mxu0
      %v4675 = vadd.f32 0.0, %v4674
      %v4676 = vpop.f32.mrb[0].mxu0
      %4677 = vmatprep.mubr.bf16.mxu0 0
      %4678 = vmatmul.mubr.bf16.gmra.mrb[0].mxu0 %v4560
      %v4679 = vpop.f32.mrb[0].mxu0
      %v4680 = vadd.f32 0.0, %v4679
      %v4681 = vpop.f32.mrb[0].mxu0
      %v4682 = vpop.f32.mrb[0].mxu0
      %v4683 = vadd.f32 0.0, %v4682
      %v4684 = vpop.f32.mrb[0].mxu0
      %4685 = vmatprep.mubr.bf16.mxu0 0
      %4686 = vmatmul.mubr.bf16.gmra.mrb[0].mxu0 %v4563
      %v4687 = vpop.f32.mrb[0].mxu0
      %v4688 = vadd.f32 0.0, %v4687
      %v4689 = vpop.f32.mrb[0].mxu0
      %v4690 = vpop.f32.mrb[0].mxu0
      %v4691 = vadd.f32 0.0, %v4690
      %v4692 = vpop.f32.mrb[0].mxu0
      %4693 = vmatprep.mubr.bf16.mxu0 0
      %4694 = vmatmul.mubr.bf16.gmra.mrb[0].mxu0 %v4566
      %v4695 = vpop.f32.mrb[0].mxu0
      %v4696 = vadd.f32 0.0, %v4695
      %v4697 = vpop.f32.mrb[0].mxu0
      %v4698 = vpop.f32.mrb[0].mxu0
      %v4699 = vadd.f32 0.0, %v4698
      %v4700 = vpop.f32.mrb[0].mxu0
      %4701 = vmatprep.mubr.bf16.mxu0 0
      %4702 = vmatmul.mubr.bf16.gmra.mrb[0].mxu0 %v4569
      %v4703 = vpop.f32.mrb[0].mxu0
      %v4704 = vadd.f32 0.0, %v4703
      %v4705 = vpop.f32.mrb[0].mxu0
      %v4706 = vpop.f32.mrb[0].mxu0
      %v4707 = vadd.f32 0.0, %v4706
      %v4708 = vpop.f32.mrb[0].mxu0
      %4709 = vmatprep.mubr.bf16.mxu0 0
      %4710 = vmatmul.mubr.bf16.gmra.mrb[0].mxu0 %v4572
      %v4711 = vpop.f32.mrb[0].mxu0
      %v4712 = vadd.f32 0.0, %v4711
      %v4713 = vpop.f32.mrb[0].mxu0
      %v4714 = vpop.f32.mrb[0].mxu0
      %v4715 = vadd.f32 0.0, %v4714
      %v4716 = vpop.f32.mrb[0].mxu0
      %4717 = vmatprep.mubr.bf16.mxu0 0
      %4718 = vmatmul.mubr.bf16.gmra.mrb[0].mxu0 %v4575
      %v4719 = vpop.f32.mrb[0].mxu0
      %v4720 = vadd.f32 0.0, %v4719
      %v4721 = vpop.f32.mrb[0].mxu0
      %v4722 = vpop.f32.mrb[0].mxu0
      %v4723 = vadd.f32 0.0, %v4722
      %v4724 = vpop.f32.mrb[0].mxu0
      %4725 = vmatprep.mubr.bf16.mxu0 0
      %4726 = vmatmul.mubr.bf16.gmra.mrb[0].mxu0 %v4578
      %v4727 = vpop.f32.mrb[0].mxu0
      %v4728 = vadd.f32 0.0, %v4727
      %v4729 = vpop.f32.mrb[0].mxu0
      %v4730 = vpop.f32.mrb[0].mxu0
      %v4731 = vadd.f32 0.0, %v4730
      %v4732 = vpop.f32.mrb[0].mxu0
      %4733 = vmatprep.mubr.bf16.mxu0 0
      %4734 = vmatmul.mubr.bf16.gmra.mrb[0].mxu0 %v4581
      %v4735 = vpop.f32.mrb[0].mxu0
      %v4736 = vadd.f32 0.0, %v4735
      %v4737 = vpop.f32.mrb[0].mxu0
      %v4738 = vpop.f32.mrb[0].mxu0
      %v4739 = vadd.f32 0.0, %v4738
      %v4740 = vpop.f32.mrb[0].mxu0
      %4741 = vmatprep.mubr.bf16.mxu0 0
      %4742 = vmatmul.mubr.bf16.gmra.mrb[0].mxu0 %v4584
      %v4743 = vpop.f32.mrb[0].mxu0
      %v4744 = vadd.f32 0.0, %v4743
      %v4745 = vpop.f32.mrb[0].mxu0
      %v4746 = vpop.f32.mrb[0].mxu0
      %v4747 = vadd.f32 0.0, %v4746
      %v4748 = vpop.f32.mrb[0].mxu0
      %4749 = vdwg.mxu0
      %v4750 = vadd.f32 %v4280, %v4624
      %v4751 = vadd.f32 %v4281, %v4627
      %v4752 = vadd.f32 %v4282, %v4632
      %v4753 = vadd.f32 %v4283, %v4635
      %v4754 = vadd.f32 %v4284, %v4640
      %v4755 = vadd.f32 %v4285, %v4643
      %v4756 = vadd.f32 %v4286, %v4648
      %v4757 = vadd.f32 %v4287, %v4651
      %v4758 = vadd.f32 %v4288, %v4656
      %v4759 = vadd.f32 %v4289, %v4659
      %v4760 = vadd.f32 %v4290, %v4664
      %v4761 = vadd.f32 %v4291, %v4667
      %v4762 = vadd.f32 %v4292, %v4672
      %v4763 = vadd.f32 %v4293, %v4675
      %v4764 = vadd.f32 %v4294, %v4680
      %v4765 = vadd.f32 %v4295, %v4683
      %v4766 = vadd.f32 %v4296, %v4688
      %v4767 = vadd.f32 %v4297, %v4691
      %v4768 = vadd.f32 %v4298, %v4696
      %v4769 = vadd.f32 %v4299, %v4699
      %v4770 = vadd.f32 %v4300, %v4704
      %v4771 = vadd.f32 %v4301, %v4707
      %v4772 = vadd.f32 %v4302, %v4712
      %v4773 = vadd.f32 %v4303, %v4715
      %v4774 = vadd.f32 %v4304, %v4720
      %v4775 = vadd.f32 %v4305, %v4723
      %v4776 = vadd.f32 %v4306, %v4728
      %v4777 = vadd.f32 %v4307, %v4731
      %v4778 = vadd.f32 %v4308, %v4736
      %v4779 = vadd.f32 %v4309, %v4739
      %v4780 = vadd.f32 %v4310, %v4744
      %v4781 = vadd.f32 %v4311, %v4747
      %v4782 = vld [vmem:[%s213] sm:$0x1]
      %v4784 = vlaneseq
      %v4785 = vshrl.u32 %v4784, 7
      %v4786 = vsub.s32 0, %v4785
      %v4787 = vrot.slane %v4782, %v4786
      %v4789 = vadd.f32 %v4750, %v4787
      %v4790 = vadd.f32 %v4751, %v4787
      %v4791 = vadd.f32 %v4752, %v4787
      %v4792 = vadd.f32 %v4753, %v4787
      %v4793 = vadd.f32 %v4754, %v4787
      %v4794 = vadd.f32 %v4755, %v4787
      %v4795 = vadd.f32 %v4756, %v4787
      %v4796 = vadd.f32 %v4757, %v4787
      %v4797 = vadd.f32 %v4758, %v4787
      %v4798 = vadd.f32 %v4759, %v4787
      %v4799 = vadd.f32 %v4760, %v4787
      %v4800 = vadd.f32 %v4761, %v4787
      %v4801 = vadd.f32 %v4762, %v4787
      %v4802 = vadd.f32 %v4763, %v4787
      %v4803 = vadd.f32 %v4764, %v4787
      %v4804 = vadd.f32 %v4765, %v4787
      %v4805 = vadd.f32 %v4766, %v4787
      %v4806 = vadd.f32 %v4767, %v4787
      %v4807 = vadd.f32 %v4768, %v4787
      %v4808 = vadd.f32 %v4769, %v4787
      %v4809 = vadd.f32 %v4770, %v4787
      %v4810 = vadd.f32 %v4771, %v4787
      %v4811 = vadd.f32 %v4772, %v4787
      %v4812 = vadd.f32 %v4773, %v4787
      %v4813 = vadd.f32 %v4774, %v4787
      %v4814 = vadd.f32 %v4775, %v4787
      %v4815 = vadd.f32 %v4776, %v4787
      %v4816 = vadd.f32 %v4777, %v4787
      %v4817 = vadd.f32 %v4778, %v4787
      %v4818 = vadd.f32 %v4779, %v4787
      %v4819 = vadd.f32 %v4780, %v4787
      %v4820 = vadd.f32 %v4781, %v4787
      %v4821 = vmax.f32 %v4789, 0.0
      %v4822 = vmax.f32 %v4790, 0.0
      %v4823 = vmax.f32 %v4791, 0.0
      %v4824 = vmax.f32 %v4792, 0.0
      %v4825 = vmax.f32 %v4793, 0.0
      %v4826 = vmax.f32 %v4794, 0.0
      %v4827 = vmax.f32 %v4795, 0.0
      %v4828 = vmax.f32 %v4796, 0.0
      %v4829 = vmax.f32 %v4797, 0.0
      %v4830 = vmax.f32 %v4798, 0.0
      %v4831 = vmax.f32 %v4799, 0.0
      %v4832 = vmax.f32 %v4800, 0.0
      %v4833 = vmax.f32 %v4801, 0.0
      %v4834 = vmax.f32 %v4802, 0.0
      %v4835 = vmax.f32 %v4803, 0.0
      %v4836 = vmax.f32 %v4804, 0.0
      %v4837 = vmax.f32 %v4805, 0.0
      %v4838 = vmax.f32 %v4806, 0.0
      %v4839 = vmax.f32 %v4807, 0.0
      %v4840 = vmax.f32 %v4808, 0.0
      %v4841 = vmax.f32 %v4809, 0.0
      %v4842 = vmax.f32 %v4810, 0.0
      %v4843 = vmax.f32 %v4811, 0.0
      %v4844 = vmax.f32 %v4812, 0.0
      %v4845 = vmax.f32 %v4813, 0.0
      %v4846 = vmax.f32 %v4814, 0.0
      %v4847 = vmax.f32 %v4815, 0.0
      %v4848 = vmax.f32 %v4816, 0.0
      %v4849 = vmax.f32 %v4817, 0.0
      %v4850 = vmax.f32 %v4818, 0.0
      %v4851 = vmax.f32 %v4819, 0.0
      %v4852 = vmax.f32 %v4820, 0.0
      %vm4853 = vcmask 64512
      %4854 = vst.msk [vmem:[%s221] sm:$0xff] %vm4853, %v4821
      %4855 = vst.msk [vmem:[%s221 + $0x8] sm:$0xff] %vm4853, %v4822
      %4856 = vst.msk [vmem:[%s221 + $0x10] sm:$0xff] %vm4853, %v4823
      %4857 = vst.msk [vmem:[%s221 + $0x18] sm:$0xff] %vm4853, %v4824
      %4858 = vst.msk [vmem:[%s221 + $0x20] sm:$0xff] %vm4853, %v4825
      %4859 = vst.msk [vmem:[%s221 + $0x28] sm:$0xff] %vm4853, %v4826
      %4860 = vst.msk [vmem:[%s221 + $0x30] sm:$0xff] %vm4853, %v4827
      %4861 = vst.msk [vmem:[%s221 + $0x38] sm:$0xff] %vm4853, %v4828
      %4862 = vst.msk [vmem:[%s221 + $0x40] sm:$0xff] %vm4853, %v4829
      %4863 = vst.msk [vmem:[%s221 + $0x48] sm:$0xff] %vm4853, %v4830
      %4864 = vst.msk [vmem:[%s221 + $0x50] sm:$0xff] %vm4853, %v4831
      %4865 = vst.msk [vmem:[%s221 + $0x58] sm:$0xff] %vm4853, %v4832
      %4866 = vst.msk [vmem:[%s221 + $0x60] sm:$0xff] %vm4853, %v4833
      %4867 = vst.msk [vmem:[%s221 + $0x68] sm:$0xff] %vm4853, %v4834
      %4868 = vst.msk [vmem:[%s221 + $0x70] sm:$0xff] %vm4853, %v4835
      %4869 = vst.msk [vmem:[%s221 + $0x78] sm:$0xff] %vm4853, %v4836
      %4870 = vst.msk [vmem:[%s221 + $0x80] sm:$0xff] %vm4853, %v4837
      %4871 = vst.msk [vmem:[%s221 + $0x88] sm:$0xff] %vm4853, %v4838
      %4872 = vst.msk [vmem:[%s221 + $0x90] sm:$0xff] %vm4853, %v4839
      %4873 = vst.msk [vmem:[%s221 + $0x98] sm:$0xff] %vm4853, %v4840
      %4874 = vst.msk [vmem:[%s221 + $0xa0] sm:$0xff] %vm4853, %v4841
      %4875 = vst.msk [vmem:[%s221 + $0xa8] sm:$0xff] %vm4853, %v4842
      %4876 = vst.msk [vmem:[%s221 + $0xb0] sm:$0xff] %vm4853, %v4843
      %4877 = vst.msk [vmem:[%s221 + $0xb8] sm:$0xff] %vm4853, %v4844
      %4878 = vst.msk [vmem:[%s221 + $0xc0] sm:$0xff] %vm4853, %v4845
      %4879 = vst.msk [vmem:[%s221 + $0xc8] sm:$0xff] %vm4853, %v4846
      %4880 = vst.msk [vmem:[%s221 + $0xd0] sm:$0xff] %vm4853, %v4847
      %4881 = vst.msk [vmem:[%s221 + $0xd8] sm:$0xff] %vm4853, %v4848
      %4882 = vst.msk [vmem:[%s221 + $0xe0] sm:$0xff] %vm4853, %v4849
      %4883 = vst.msk [vmem:[%s221 + $0xe8] sm:$0xff] %vm4853, %v4850
      %4884 = vst.msk [vmem:[%s221 + $0xf0] sm:$0xff] %vm4853, %v4851
      %4885 = vst.msk [vmem:[%s221 + $0xf8] sm:$0xff] %vm4853, %v4852
      %p4886 = scmp.lt.s32.totalorder %s18, 1
      %s4887 = scalar_select %p4886, %s18, 1
      %p4888 = scmp.lt.s32.totalorder %s19, 0
      %s4889 = scalar_select %p4888, %s19, 0
      %s4890 = smul.addr %s4887, 32
      %s4891 = sadd.s32 %s4889, %s4890
      %s4892 = smul.addr %s4891, 8
      %s4893 = scalar_lea.vmem %s3, %s4892
      // Predicated region
      $region33: #{conv_block_forward_nhwc.1} parent=31 // pred_check
        %p4894 = pneg %p124
      $region34: #{conv_block_forward_nhwc.1} parent=31 // pred_check_branch
        %4896 = sbr.rel (%p4894) target = $region36
      $region35: #{conv_block_forward_nhwc.1} parent=31 // pred_region
        _
      $region36: #{conv_block_forward_nhwc.1} parent=31 // pred_fallthru
        _
    $region32: #{conv_block_forward_nhwc.1} parent=5 // pred_fallthru
      _
    %p4897 = scmp.le.s32.totalorder 2, %s9
    // Predicated region
    $region37: #{conv_block_forward_nhwc.1} parent=5 // pred_check
      %p4898 = pneg %p4897
    $region38: #{conv_block_forward_nhwc.1} parent=5 // pred_check_branch
      %4900 = sbr.rel (%p4898) target = $region40
    $region39: #{conv_block_forward_nhwc.1} parent=5 // pred_region
      %s4901 = ssub.s32 %s9, 2
      // Predicated region
      $region41: #{conv_block_forward_nhwc.1} parent=39 // pred_check
        %p4902 = pneg %p130
      $region42: #{conv_block_forward_nhwc.1} parent=39 // pred_check_branch
        %4904 = sbr.rel (%p4902) target = $region44
      $region43: #{conv_block_forward_nhwc.1} parent=39 // pred_region
        %p4905 = scmp.lt.s32.totalorder %s20, 1
        %s4906 = scalar_select %p4905, %s20, 1
        %p4907 = scmp.lt.s32.totalorder %s21, 0
        %s4908 = scalar_select %p4907, %s21, 0
        %s4909 = smul.addr %s4906, 32
        %s4910 = sadd.s32 %s4908, %s4909
        %s4911 = smul.addr %s4910, 8
        %s4912 = scalar_lea.vmem %s3, %s4911
      $region44: #{conv_block_forward_nhwc.1} parent=39 // pred_fallthru
        _
    $region40: #{conv_block_forward_nhwc.1} parent=5 // pred_fallthru
      _
  $region6: #{conv_block_forward_nhwc.1} parent=0 // loop_footer
    %s13 = sadd.s32 1, %s9
  $region7: #{conv_block_forward_nhwc.1} parent=0 // loop_footer_branch
    %8 = sbr.rel target = $region3
  $region8: #{conv_block_forward_nhwc.1} parent=0 // loop_exit
    _

</llo_original>
